<compile_context>
chip_gen: v7x
topology: tpu7x:2x2x1
jax: 0.10.0
libtpu: 0.0.40
codegen_flags: <defaults>
</compile_context>

<pallas_src>
import jax
import jax.numpy as jnp
from jax import lax
from jax.experimental import pallas as pl
from jax.experimental.pallas import tpu as pltpu  # noqa: F401  (kept for parity)

# ---------------- model config (small, consistent with the module) ----------
VOCAB_SIZE = 50
VECTOR_LEN = 32     # embedding dim / LSTM input size
HIDDEN = 32
NUM_LAYERS = 2
BATCH = 2
SEQ = 8
NUM_CLASSES = 6


# ---------------- fused Pallas kernel ----------------------------------------
def make_fused_lstm_kernel(num_layers):
    """Embedding + `num_layers` LSTM layers + Linear(H, 6) in one invocation.

    Everything (weights ~66 KiB, activations < 10 KiB) stays VMEM/vreg
    resident; the only store is the final (B, 6) logits.
    """
    def kernel(*refs):
        ids_ref, lens_ref, emb_ref = refs[:3]
        w_refs = refs[3:3 + num_layers]                       # (D_in+H, 4H) each
        b_refs = refs[3 + num_layers:3 + 2 * num_layers]      # (1, 4H) each
        lw_ref, lb_ref, out_ref = refs[3 + 2 * num_layers:]

        ids = ids_ref[...]            # (B, S) int32
        lens = lens_ref[...]          # (B, 1) int32
        emb = emb_ref[...]            # (V, D) f32
        B, S = ids.shape
        V = emb.shape[0]

        xs = None                     # per-timestep inputs for the next layer
        h = None
        for layer in range(num_layers):
            W = w_refs[layer][...]    # stacked [W_ih^T ; W_hh^T] -> (D_in+H, 4H)
            bias = b_refs[layer][...]  # (1, 4H)
            H = W.shape[1] // 4

            h = jnp.zeros((B, H), jnp.float32)
            c = jnp.zeros((B, H), jnp.float32)
            outs = []
            for t in range(S):        # static, fully unrolled time loop
                if layer == 0:
                    # embedding gather as a tiny one-hot matmul (MXU is idle)
                    onehot = (ids[:, t:t + 1] ==
                              lax.broadcasted_iota(jnp.int32, (B, V), 1)
                              ).astype(jnp.float32)            # (B, V)
                    x_t = jnp.dot(onehot, emb,
                                  preferred_element_type=jnp.float32)  # (B, D)
                else:
                    x_t = xs[t]

                # single stacked gate matmul: [x_t, h] @ [W_ih^T ; W_hh^T] + b
                xin = jnp.concatenate([x_t, h], axis=1)        # (B, D_in + H)
                gates = (jnp.dot(xin, W,
                                 preferred_element_type=jnp.float32)
                         + bias)                               # (B, 4H)

                # PyTorch gate order i, f, g, o; one sigmoid over the full vreg
                sig = jax.nn.sigmoid(gates)
                i_g = sig[:, 0:H]
                f_g = sig[:, H:2 * H]
                o_g = sig[:, 3 * H:4 * H]
                g_g = jnp.tanh(gates[:, 2 * H:3 * H])

                c_new = f_g * c + i_g * g_g
                h_new = o_g * jnp.tanh(c_new)

                # packed-sequence emulation: freeze state / zero output past len
                mask = lens > t                                # (B, 1) bool
                h = jnp.where(mask, h_new, h)
                c = jnp.where(mask, c_new, c)
                outs.append(jnp.where(mask, h_new, jnp.zeros_like(h_new)))
            xs = outs

        # hn of the top layer (frozen at len-1) == gather of last valid step.
        out_ref[...] = (jnp.dot(h, lw_ref[...],
                                preferred_element_type=jnp.float32)
                        + lb_ref[...])
    return kernel


def fused_forward_call(word_id, lens, emb, ws, bs, lin_w_t, lin_b_row):
    """Single pallas_call; all operands are full-extent VMEM blocks (no grid)."""
    B = word_id.shape[0]
    C = lin_w_t.shape[1]
    kernel = make_fused_lstm_kernel(len(ws))
    return pl.pallas_call(
        kernel,
        out_shape=jax.ShapeDtypeStruct((B, C), jnp.float32),
    )(word_id, lens, emb, *ws, *bs, lin_w_t, lin_b_row)


# ---------------- forward wrapper --------------------------------------------
@jax.jit
def lstm_forward(params, word_id, sen_len):
    """Eval-mode LSTM.forward: returns out_f of shape (B, 6)."""
    lens = sen_len.astype(jnp.int32).reshape(-1, 1)             # (B, 1)

    ws, bs = [], []
    for l in range(NUM_LAYERS):
        wx = jnp.transpose(params[f"w_ih_{l}"])                 # (D_in, 4H)
        wh = jnp.transpose(params[f"w_hh_{l}"])                 # (H, 4H)
        ws.append(jnp.concatenate([wx, wh], axis=0))            # (D_in+H, 4H)
        bs.append((params[f"b_ih_{l}"] + params[f"b_hh_{l}"]).reshape(1, -1))

    lin_w_t = jnp.transpose(params["lin_w"])                    # (H, 6)
    lin_b_row = params["lin_b"].reshape(1, -1)                  # (1, 6)

    return fused_forward_call(word_id.astype(jnp.int32), lens,
                              params["embedding"].astype(jnp.float32),
                              ws, bs, lin_w_t, lin_b_row)


# ---------------- pure-JAX reference (for correctness check) ----------------
def ref_forward(params, word_id, sen_len):
    emb = jnp.take(params["embedding"], word_id, axis=0)
    B = emb.shape[0]
    lens = sen_len.astype(jnp.int32)
    x = emb.astype(jnp.float32)
    hn_top = None
    for l in range(NUM_LAYERS):
        Wih = params[f"w_ih_{l}"]
        Whh = params[f"w_hh_{l}"]
        bias = params[f"b_ih_{l}"] + params[f"b_hh_{l}"]
        H = Whh.shape[1]

        def step(carry, x_t):
            h, c, t = carry
            gates = x_t @ Wih.T + h @ Whh.T + bias
            i = jax.nn.sigmoid(gates[:, :H])
            f = jax.nn.sigmoid(gates[:, H:2 * H])
            g = jnp.tanh(gates[:, 2 * H:3 * H])
            o = jax.nn.sigmoid(gates[:, 3 * H:])
            c_new = f * c + i * g
            h_new = o * jnp.tanh(c_new)
            mask = (lens > t)[:, None]
            h_u = jnp.where(mask, h_new, h)
            c_u = jnp.where(mask, c_new, c)
            out_t = jnp.where(mask, h_new, 0.0)
            return (h_u, c_u, t + 1), out_t

        init = (jnp.zeros((B, H), jnp.float32),
                jnp.zeros((B, H), jnp.float32), 0)
        (hn, _, _), outs = lax.scan(step, init, jnp.transpose(x, (1, 0, 2)))
        x = jnp.transpose(outs, (1, 0, 2))
        hn_top = hn
    return hn_top @ params["lin_w"].T + params["lin_b"]


# ---------------- deterministic parameter init -------------------------------
def init_params(key):
    ks = jax.random.split(key, 4 + 4 * NUM_LAYERS)
    p = {}
    p["embedding"] = jax.random.normal(ks[0], (VOCAB_SIZE, VECTOR_LEN),
                                       jnp.float32)
    bound = 1.0 / jnp.sqrt(HIDDEN).astype(jnp.float32)
    for l in range(NUM_LAYERS):
        d_in = VECTOR_LEN if l == 0 else HIDDEN
        p[f"w_ih_{l}"] = jax.random.uniform(ks[4 + 4 * l],
                                            (4 * HIDDEN, d_in), jnp.float32,
                                            -bound, bound)
        p[f"w_hh_{l}"] = jax.random.uniform(ks[5 + 4 * l],
                                            (4 * HIDDEN, HIDDEN), jnp.float32,
                                            -bound, bound)
        p[f"b_ih_{l}"] = jax.random.uniform(ks[6 + 4 * l], (4 * HIDDEN,),
                                            jnp.float32, -bound, bound)
        p[f"b_hh_{l}"] = jax.random.uniform(ks[7 + 4 * l], (4 * HIDDEN,),
                                            jnp.float32, -bound, bound)
    p["lin_w"] = jax.random.uniform(ks[1], (NUM_CLASSES, HIDDEN), jnp.float32,
                                    -bound, bound)
    p["lin_b"] = jax.random.uniform(ks[2], (NUM_CLASSES,), jnp.float32,
                                    -bound, bound)
    return p


if __name__ == "__main__":
    key = jax.random.PRNGKey(0)
    k_par, k_ids = jax.random.split(key)
    params = init_params(k_par)

    word_id = jax.random.randint(k_ids, (BATCH, SEQ), 0, VOCAB_SIZE, jnp.int32)
    sen_len = jnp.array([SEQ, 5], dtype=jnp.int32)   # per-sequence lengths

    out_f = lstm_forward(params, word_id, sen_len)
    out_f = jax.block_until_ready(out_f)

    ref = ref_forward(params, word_id, sen_len)
    assert out_f.shape == (BATCH, NUM_CLASSES)
    assert jnp.allclose(out_f, ref, atol=1e-4, rtol=1e-4), (out_f, ref)

    print("KERNEL_OK")
</pallas_src>

<mosaic_0001>
module attributes {stable_mosaic.version = 11 : i64} {
  func.func @kernel(%arg0: memref<2x8xi32, #tpu.memory_space<vmem>>, %arg1: memref<2x1xi32, #tpu.memory_space<vmem>>, %arg2: memref<50x32xf32, #tpu.memory_space<vmem>>, %arg3: memref<64x128xf32, #tpu.memory_space<vmem>>, %arg4: memref<64x128xf32, #tpu.memory_space<vmem>>, %arg5: memref<1x128xf32, #tpu.memory_space<vmem>>, %arg6: memref<1x128xf32, #tpu.memory_space<vmem>>, %arg7: memref<32x6xf32, #tpu.memory_space<vmem>>, %arg8: memref<1x6xf32, #tpu.memory_space<vmem>>, %arg9: memref<2x6xf32, #tpu.memory_space<vmem>>) attributes {dimension_semantics = [], scalar_prefetch = 0 : i64, scratch_operands = 0 : i64, tpu.core_type = #tpu.core_type<tc>} {
    %c0 = arith.constant 0 : index
    %c0_0 = arith.constant 0 : index
    %0 = vector.load %arg0[%c0, %c0_0] : memref<2x8xi32, #tpu.memory_space<vmem>>, vector<2x8xi32>
    %c0_1 = arith.constant 0 : index
    %c0_2 = arith.constant 0 : index
    %1 = vector.load %arg1[%c0_1, %c0_2] : memref<2x1xi32, #tpu.memory_space<vmem>>, vector<2x1xi32>
    %c0_3 = arith.constant 0 : index
    %c0_4 = arith.constant 0 : index
    %2 = vector.load %arg2[%c0_3, %c0_4] : memref<50x32xf32, #tpu.memory_space<vmem>>, vector<50x32xf32>
    %c0_5 = arith.constant 0 : index
    %c0_6 = arith.constant 0 : index
    %3 = vector.load %arg3[%c0_5, %c0_6] : memref<64x128xf32, #tpu.memory_space<vmem>>, vector<64x128xf32>
    %c0_7 = arith.constant 0 : index
    %c0_8 = arith.constant 0 : index
    %4 = vector.load %arg5[%c0_7, %c0_8] : memref<1x128xf32, #tpu.memory_space<vmem>>, vector<1x128xf32>
    %cst = arith.constant 0.000000e+00 : f32
    %5 = vector.broadcast %cst : f32 to vector<2x32xf32>
    %cst_9 = arith.constant 0.000000e+00 : f32
    %6 = vector.broadcast %cst_9 : f32 to vector<2x32xf32>
    %7 = vector.extract_strided_slice %0 {offsets = [0, 0], sizes = [2, 1], strides = [1, 1]} : vector<2x8xi32> to vector<2x1xi32>
    %8 = tpu.iota {dimensions = array<i32: 1>} : vector<2x50xi32>
    %9 = vector.broadcast %7 : vector<2x1xi32> to vector<2x50xi32>
    %10 = arith.cmpi eq, %9, %8 : vector<2x50xi32>
    %11 = arith.extui %10 : vector<2x50xi1> to vector<2x50xi32>
    %12 = arith.sitofp %11 : vector<2x50xi32> to vector<2x50xf32>
    %cst_10 = arith.constant dense<0.000000e+00> : vector<2x32xf32>
    %13 = tpu.matmul %12, %2, %cst_10 {dimension_numbers = #tpu.dot_dimension_numbers<[1], [0], [0], [1], [0, 0, 1, 1], [], []>} : vector<2x50xf32>, vector<50x32xf32>, vector<2x32xf32> -> vector<2x32xf32>
    %14 = tpu.concatenate %13, %5 in 1 : vector<2x32xf32>, vector<2x32xf32> -> vector<2x64xf32>
    %cst_11 = arith.constant dense<0.000000e+00> : vector<2x128xf32>
    %15 = tpu.matmul %14, %3, %cst_11 {dimension_numbers = #tpu.dot_dimension_numbers<[1], [0], [0], [1], [0, 0, 1, 1], [], []>} : vector<2x64xf32>, vector<64x128xf32>, vector<2x128xf32> -> vector<2x128xf32>
    %16 = vector.broadcast %4 : vector<1x128xf32> to vector<2x128xf32>
    %17 = arith.addf %15, %16 : vector<2x128xf32>
    %18 = arith.negf %17 : vector<2x128xf32>
    %19 = math.exp %18 : vector<2x128xf32>
    %cst_12 = arith.constant 1.000000e+00 : f32
    %20 = vector.broadcast %cst_12 : f32 to vector<2x128xf32>
    %21 = arith.addf %20, %19 : vector<2x128xf32>
    %22 = arith.divf %20, %21 : vector<2x128xf32>
    %23 = vector.extract_strided_slice %22 {offsets = [0, 0], sizes = [2, 32], strides = [1, 1]} : vector<2x128xf32> to vector<2x32xf32>
    %24 = vector.extract_strided_slice %22 {offsets = [0, 32], sizes = [2, 32], strides = [1, 1]} : vector<2x128xf32> to vector<2x32xf32>
    %25 = vector.extract_strided_slice %22 {offsets = [0, 96], sizes = [2, 32], strides = [1, 1]} : vector<2x128xf32> to vector<2x32xf32>
    %26 = vector.extract_strided_slice %17 {offsets = [0, 64], sizes = [2, 32], strides = [1, 1]} : vector<2x128xf32> to vector<2x32xf32>
    %27 = math.tanh %26 : vector<2x32xf32>
    %28 = arith.mulf %24, %6 : vector<2x32xf32>
    %29 = arith.mulf %23, %27 : vector<2x32xf32>
    %30 = arith.addf %28, %29 : vector<2x32xf32>
    %31 = math.tanh %30 : vector<2x32xf32>
    %32 = arith.mulf %25, %31 : vector<2x32xf32>
    %c0_i32 = arith.constant 0 : i32
    %33 = vector.broadcast %c0_i32 : i32 to vector<2x1xi32>
    %34 = arith.cmpi sgt, %1, %33 : vector<2x1xi32>
    %35 = vector.shape_cast %34 : vector<2x1xi1> to vector<2x1xi1>
    %36 = vector.broadcast %35 : vector<2x1xi1> to vector<2x32xi1>
    %37 = arith.select %36, %32, %5 : vector<2x32xi1>, vector<2x32xf32>
    %38 = vector.shape_cast %34 : vector<2x1xi1> to vector<2x1xi1>
    %39 = vector.broadcast %38 : vector<2x1xi1> to vector<2x32xi1>
    %40 = arith.select %39, %30, %6 : vector<2x32xi1>, vector<2x32xf32>
    %cst_13 = arith.constant 0.000000e+00 : f32
    %41 = vector.broadcast %cst_13 : f32 to vector<2x32xf32>
    %42 = vector.shape_cast %34 : vector<2x1xi1> to vector<2x1xi1>
    %43 = vector.broadcast %42 : vector<2x1xi1> to vector<2x32xi1>
    %44 = arith.select %43, %32, %41 : vector<2x32xi1>, vector<2x32xf32>
    %45 = vector.extract_strided_slice %0 {offsets = [0, 1], sizes = [2, 1], strides = [1, 1]} : vector<2x8xi32> to vector<2x1xi32>
    %46 = tpu.iota {dimensions = array<i32: 1>} : vector<2x50xi32>
    %47 = vector.broadcast %45 : vector<2x1xi32> to vector<2x50xi32>
    %48 = arith.cmpi eq, %47, %46 : vector<2x50xi32>
    %49 = arith.extui %48 : vector<2x50xi1> to vector<2x50xi32>
    %50 = arith.sitofp %49 : vector<2x50xi32> to vector<2x50xf32>
    %cst_14 = arith.constant dense<0.000000e+00> : vector<2x32xf32>
    %51 = tpu.matmul %50, %2, %cst_14 {dimension_numbers = #tpu.dot_dimension_numbers<[1], [0], [0], [1], [0, 0, 1, 1], [], []>} : vector<2x50xf32>, vector<50x32xf32>, vector<2x32xf32> -> vector<2x32xf32>
    %52 = tpu.concatenate %51, %37 in 1 : vector<2x32xf32>, vector<2x32xf32> -> vector<2x64xf32>
    %cst_15 = arith.constant dense<0.000000e+00> : vector<2x128xf32>
    %53 = tpu.matmul %52, %3, %cst_15 {dimension_numbers = #tpu.dot_dimension_numbers<[1], [0], [0], [1], [0, 0, 1, 1], [], []>} : vector<2x64xf32>, vector<64x128xf32>, vector<2x128xf32> -> vector<2x128xf32>
    %54 = vector.broadcast %4 : vector<1x128xf32> to vector<2x128xf32>
    %55 = arith.addf %53, %54 : vector<2x128xf32>
    %56 = arith.negf %55 : vector<2x128xf32>
    %57 = math.exp %56 : vector<2x128xf32>
    %cst_16 = arith.constant 1.000000e+00 : f32
    %58 = vector.broadcast %cst_16 : f32 to vector<2x128xf32>
    %59 = arith.addf %58, %57 : vector<2x128xf32>
    %60 = arith.divf %58, %59 : vector<2x128xf32>
    %61 = vector.extract_strided_slice %60 {offsets = [0, 0], sizes = [2, 32], strides = [1, 1]} : vector<2x128xf32> to vector<2x32xf32>
    %62 = vector.extract_strided_slice %60 {offsets = [0, 32], sizes = [2, 32], strides = [1, 1]} : vector<2x128xf32> to vector<2x32xf32>
    %63 = vector.extract_strided_slice %60 {offsets = [0, 96], sizes = [2, 32], strides = [1, 1]} : vector<2x128xf32> to vector<2x32xf32>
    %64 = vector.extract_strided_slice %55 {offsets = [0, 64], sizes = [2, 32], strides = [1, 1]} : vector<2x128xf32> to vector<2x32xf32>
    %65 = math.tanh %64 : vector<2x32xf32>
    %66 = arith.mulf %62, %40 : vector<2x32xf32>
    %67 = arith.mulf %61, %65 : vector<2x32xf32>
    %68 = arith.addf %66, %67 : vector<2x32xf32>
    %69 = math.tanh %68 : vector<2x32xf32>
    %70 = arith.mulf %63, %69 : vector<2x32xf32>
    %c1_i32 = arith.constant 1 : i32
    %71 = vector.broadcast %c1_i32 : i32 to vector<2x1xi32>
    %72 = arith.cmpi sgt, %1, %71 : vector<2x1xi32>
    %73 = vector.shape_cast %72 : vector<2x1xi1> to vector<2x1xi1>
    %74 = vector.broadcast %73 : vector<2x1xi1> to vector<2x32xi1>
    %75 = arith.select %74, %70, %37 : vector<2x32xi1>, vector<2x32xf32>
    %76 = vector.shape_cast %72 : vector<2x1xi1> to vector<2x1xi1>
    %77 = vector.broadcast %76 : vector<2x1xi1> to vector<2x32xi1>
    %78 = arith.select %77, %68, %40 : vector<2x32xi1>, vector<2x32xf32>
    %cst_17 = arith.constant 0.000000e+00 : f32
    %79 = vector.broadcast %cst_17 : f32 to vector<2x32xf32>
    %80 = vector.shape_cast %72 : vector<2x1xi1> to vector<2x1xi1>
    %81 = vector.broadcast %80 : vector<2x1xi1> to vector<2x32xi1>
    %82 = arith.select %81, %70, %79 : vector<2x32xi1>, vector<2x32xf32>
    %83 = vector.extract_strided_slice %0 {offsets = [0, 2], sizes = [2, 1], strides = [1, 1]} : vector<2x8xi32> to vector<2x1xi32>
    %84 = tpu.iota {dimensions = array<i32: 1>} : vector<2x50xi32>
    %85 = vector.broadcast %83 : vector<2x1xi32> to vector<2x50xi32>
    %86 = arith.cmpi eq, %85, %84 : vector<2x50xi32>
    %87 = arith.extui %86 : vector<2x50xi1> to vector<2x50xi32>
    %88 = arith.sitofp %87 : vector<2x50xi32> to vector<2x50xf32>
    %cst_18 = arith.constant dense<0.000000e+00> : vector<2x32xf32>
    %89 = tpu.matmul %88, %2, %cst_18 {dimension_numbers = #tpu.dot_dimension_numbers<[1], [0], [0], [1], [0, 0, 1, 1], [], []>} : vector<2x50xf32>, vector<50x32xf32>, vector<2x32xf32> -> vector<2x32xf32>
    %90 = tpu.concatenate %89, %75 in 1 : vector<2x32xf32>, vector<2x32xf32> -> vector<2x64xf32>
    %cst_19 = arith.constant dense<0.000000e+00> : vector<2x128xf32>
    %91 = tpu.matmul %90, %3, %cst_19 {dimension_numbers = #tpu.dot_dimension_numbers<[1], [0], [0], [1], [0, 0, 1, 1], [], []>} : vector<2x64xf32>, vector<64x128xf32>, vector<2x128xf32> -> vector<2x128xf32>
    %92 = vector.broadcast %4 : vector<1x128xf32> to vector<2x128xf32>
    %93 = arith.addf %91, %92 : vector<2x128xf32>
    %94 = arith.negf %93 : vector<2x128xf32>
    %95 = math.exp %94 : vector<2x128xf32>
    %cst_20 = arith.constant 1.000000e+00 : f32
    %96 = vector.broadcast %cst_20 : f32 to vector<2x128xf32>
    %97 = arith.addf %96, %95 : vector<2x128xf32>
    %98 = arith.divf %96, %97 : vector<2x128xf32>
    %99 = vector.extract_strided_slice %98 {offsets = [0, 0], sizes = [2, 32], strides = [1, 1]} : vector<2x128xf32> to vector<2x32xf32>
    %100 = vector.extract_strided_slice %98 {offsets = [0, 32], sizes = [2, 32], strides = [1, 1]} : vector<2x128xf32> to vector<2x32xf32>
    %101 = vector.extract_strided_slice %98 {offsets = [0, 96], sizes = [2, 32], strides = [1, 1]} : vector<2x128xf32> to vector<2x32xf32>
    %102 = vector.extract_strided_slice %93 {offsets = [0, 64], sizes = [2, 32], strides = [1, 1]} : vector<2x128xf32> to vector<2x32xf32>
    %103 = math.tanh %102 : vector<2x32xf32>
    %104 = arith.mulf %100, %78 : vector<2x32xf32>
    %105 = arith.mulf %99, %103 : vector<2x32xf32>
    %106 = arith.addf %104, %105 : vector<2x32xf32>
    %107 = math.tanh %106 : vector<2x32xf32>
    %108 = arith.mulf %101, %107 : vector<2x32xf32>
    %c2_i32 = arith.constant 2 : i32
    %109 = vector.broadcast %c2_i32 : i32 to vector<2x1xi32>
    %110 = arith.cmpi sgt, %1, %109 : vector<2x1xi32>
    %111 = vector.shape_cast %110 : vector<2x1xi1> to vector<2x1xi1>
    %112 = vector.broadcast %111 : vector<2x1xi1> to vector<2x32xi1>
    %113 = arith.select %112, %108, %75 : vector<2x32xi1>, vector<2x32xf32>
    %114 = vector.shape_cast %110 : vector<2x1xi1> to vector<2x1xi1>
    %115 = vector.broadcast %114 : vector<2x1xi1> to vector<2x32xi1>
    %116 = arith.select %115, %106, %78 : vector<2x32xi1>, vector<2x32xf32>
    %cst_21 = arith.constant 0.000000e+00 : f32
    %117 = vector.broadcast %cst_21 : f32 to vector<2x32xf32>
    %118 = vector.shape_cast %110 : vector<2x1xi1> to vector<2x1xi1>
    %119 = vector.broadcast %118 : vector<2x1xi1> to vector<2x32xi1>
    %120 = arith.select %119, %108, %117 : vector<2x32xi1>, vector<2x32xf32>
    %121 = vector.extract_strided_slice %0 {offsets = [0, 3], sizes = [2, 1], strides = [1, 1]} : vector<2x8xi32> to vector<2x1xi32>
    %122 = tpu.iota {dimensions = array<i32: 1>} : vector<2x50xi32>
    %123 = vector.broadcast %121 : vector<2x1xi32> to vector<2x50xi32>
    %124 = arith.cmpi eq, %123, %122 : vector<2x50xi32>
    %125 = arith.extui %124 : vector<2x50xi1> to vector<2x50xi32>
    %126 = arith.sitofp %125 : vector<2x50xi32> to vector<2x50xf32>
    %cst_22 = arith.constant dense<0.000000e+00> : vector<2x32xf32>
    %127 = tpu.matmul %126, %2, %cst_22 {dimension_numbers = #tpu.dot_dimension_numbers<[1], [0], [0], [1], [0, 0, 1, 1], [], []>} : vector<2x50xf32>, vector<50x32xf32>, vector<2x32xf32> -> vector<2x32xf32>
    %128 = tpu.concatenate %127, %113 in 1 : vector<2x32xf32>, vector<2x32xf32> -> vector<2x64xf32>
    %cst_23 = arith.constant dense<0.000000e+00> : vector<2x128xf32>
    %129 = tpu.matmul %128, %3, %cst_23 {dimension_numbers = #tpu.dot_dimension_numbers<[1], [0], [0], [1], [0, 0, 1, 1], [], []>} : vector<2x64xf32>, vector<64x128xf32>, vector<2x128xf32> -> vector<2x128xf32>
    %130 = vector.broadcast %4 : vector<1x128xf32> to vector<2x128xf32>
    %131 = arith.addf %129, %130 : vector<2x128xf32>
    %132 = arith.negf %131 : vector<2x128xf32>
    %133 = math.exp %132 : vector<2x128xf32>
    %cst_24 = arith.constant 1.000000e+00 : f32
    %134 = vector.broadcast %cst_24 : f32 to vector<2x128xf32>
    %135 = arith.addf %134, %133 : vector<2x128xf32>
    %136 = arith.divf %134, %135 : vector<2x128xf32>
    %137 = vector.extract_strided_slice %136 {offsets = [0, 0], sizes = [2, 32], strides = [1, 1]} : vector<2x128xf32> to vector<2x32xf32>
    %138 = vector.extract_strided_slice %136 {offsets = [0, 32], sizes = [2, 32], strides = [1, 1]} : vector<2x128xf32> to vector<2x32xf32>
    %139 = vector.extract_strided_slice %136 {offsets = [0, 96], sizes = [2, 32], strides = [1, 1]} : vector<2x128xf32> to vector<2x32xf32>
    %140 = vector.extract_strided_slice %131 {offsets = [0, 64], sizes = [2, 32], strides = [1, 1]} : vector<2x128xf32> to vector<2x32xf32>
    %141 = math.tanh %140 : vector<2x32xf32>
    %142 = arith.mulf %138, %116 : vector<2x32xf32>
    %143 = arith.mulf %137, %141 : vector<2x32xf32>
    %144 = arith.addf %142, %143 : vector<2x32xf32>
    %145 = math.tanh %144 : vector<2x32xf32>
    %146 = arith.mulf %139, %145 : vector<2x32xf32>
    %c3_i32 = arith.constant 3 : i32
    %147 = vector.broadcast %c3_i32 : i32 to vector<2x1xi32>
    %148 = arith.cmpi sgt, %1, %147 : vector<2x1xi32>
    %149 = vector.shape_cast %148 : vector<2x1xi1> to vector<2x1xi1>
    %150 = vector.broadcast %149 : vector<2x1xi1> to vector<2x32xi1>
    %151 = arith.select %150, %146, %113 : vector<2x32xi1>, vector<2x32xf32>
    %152 = vector.shape_cast %148 : vector<2x1xi1> to vector<2x1xi1>
    %153 = vector.broadcast %152 : vector<2x1xi1> to vector<2x32xi1>
    %154 = arith.select %153, %144, %116 : vector<2x32xi1>, vector<2x32xf32>
    %cst_25 = arith.constant 0.000000e+00 : f32
    %155 = vector.broadcast %cst_25 : f32 to vector<2x32xf32>
    %156 = vector.shape_cast %148 : vector<2x1xi1> to vector<2x1xi1>
    %157 = vector.broadcast %156 : vector<2x1xi1> to vector<2x32xi1>
    %158 = arith.select %157, %146, %155 : vector<2x32xi1>, vector<2x32xf32>
    %159 = vector.extract_strided_slice %0 {offsets = [0, 4], sizes = [2, 1], strides = [1, 1]} : vector<2x8xi32> to vector<2x1xi32>
    %160 = tpu.iota {dimensions = array<i32: 1>} : vector<2x50xi32>
    %161 = vector.broadcast %159 : vector<2x1xi32> to vector<2x50xi32>
    %162 = arith.cmpi eq, %161, %160 : vector<2x50xi32>
    %163 = arith.extui %162 : vector<2x50xi1> to vector<2x50xi32>
    %164 = arith.sitofp %163 : vector<2x50xi32> to vector<2x50xf32>
    %cst_26 = arith.constant dense<0.000000e+00> : vector<2x32xf32>
    %165 = tpu.matmul %164, %2, %cst_26 {dimension_numbers = #tpu.dot_dimension_numbers<[1], [0], [0], [1], [0, 0, 1, 1], [], []>} : vector<2x50xf32>, vector<50x32xf32>, vector<2x32xf32> -> vector<2x32xf32>
    %166 = tpu.concatenate %165, %151 in 1 : vector<2x32xf32>, vector<2x32xf32> -> vector<2x64xf32>
    %cst_27 = arith.constant dense<0.000000e+00> : vector<2x128xf32>
    %167 = tpu.matmul %166, %3, %cst_27 {dimension_numbers = #tpu.dot_dimension_numbers<[1], [0], [0], [1], [0, 0, 1, 1], [], []>} : vector<2x64xf32>, vector<64x128xf32>, vector<2x128xf32> -> vector<2x128xf32>
    %168 = vector.broadcast %4 : vector<1x128xf32> to vector<2x128xf32>
    %169 = arith.addf %167, %168 : vector<2x128xf32>
    %170 = arith.negf %169 : vector<2x128xf32>
    %171 = math.exp %170 : vector<2x128xf32>
    %cst_28 = arith.constant 1.000000e+00 : f32
    %172 = vector.broadcast %cst_28 : f32 to vector<2x128xf32>
    %173 = arith.addf %172, %171 : vector<2x128xf32>
    %174 = arith.divf %172, %173 : vector<2x128xf32>
    %175 = vector.extract_strided_slice %174 {offsets = [0, 0], sizes = [2, 32], strides = [1, 1]} : vector<2x128xf32> to vector<2x32xf32>
    %176 = vector.extract_strided_slice %174 {offsets = [0, 32], sizes = [2, 32], strides = [1, 1]} : vector<2x128xf32> to vector<2x32xf32>
    %177 = vector.extract_strided_slice %174 {offsets = [0, 96], sizes = [2, 32], strides = [1, 1]} : vector<2x128xf32> to vector<2x32xf32>
    %178 = vector.extract_strided_slice %169 {offsets = [0, 64], sizes = [2, 32], strides = [1, 1]} : vector<2x128xf32> to vector<2x32xf32>
    %179 = math.tanh %178 : vector<2x32xf32>
    %180 = arith.mulf %176, %154 : vector<2x32xf32>
    %181 = arith.mulf %175, %179 : vector<2x32xf32>
    %182 = arith.addf %180, %181 : vector<2x32xf32>
    %183 = math.tanh %182 : vector<2x32xf32>
    %184 = arith.mulf %177, %183 : vector<2x32xf32>
    %c4_i32 = arith.constant 4 : i32
    %185 = vector.broadcast %c4_i32 : i32 to vector<2x1xi32>
    %186 = arith.cmpi sgt, %1, %185 : vector<2x1xi32>
    %187 = vector.shape_cast %186 : vector<2x1xi1> to vector<2x1xi1>
    %188 = vector.broadcast %187 : vector<2x1xi1> to vector<2x32xi1>
    %189 = arith.select %188, %184, %151 : vector<2x32xi1>, vector<2x32xf32>
    %190 = vector.shape_cast %186 : vector<2x1xi1> to vector<2x1xi1>
    %191 = vector.broadcast %190 : vector<2x1xi1> to vector<2x32xi1>
    %192 = arith.select %191, %182, %154 : vector<2x32xi1>, vector<2x32xf32>
    %cst_29 = arith.constant 0.000000e+00 : f32
    %193 = vector.broadcast %cst_29 : f32 to vector<2x32xf32>
    %194 = vector.shape_cast %186 : vector<2x1xi1> to vector<2x1xi1>
    %195 = vector.broadcast %194 : vector<2x1xi1> to vector<2x32xi1>
    %196 = arith.select %195, %184, %193 : vector<2x32xi1>, vector<2x32xf32>
    %197 = vector.extract_strided_slice %0 {offsets = [0, 5], sizes = [2, 1], strides = [1, 1]} : vector<2x8xi32> to vector<2x1xi32>
    %198 = tpu.iota {dimensions = array<i32: 1>} : vector<2x50xi32>
    %199 = vector.broadcast %197 : vector<2x1xi32> to vector<2x50xi32>
    %200 = arith.cmpi eq, %199, %198 : vector<2x50xi32>
    %201 = arith.extui %200 : vector<2x50xi1> to vector<2x50xi32>
    %202 = arith.sitofp %201 : vector<2x50xi32> to vector<2x50xf32>
    %cst_30 = arith.constant dense<0.000000e+00> : vector<2x32xf32>
    %203 = tpu.matmul %202, %2, %cst_30 {dimension_numbers = #tpu.dot_dimension_numbers<[1], [0], [0], [1], [0, 0, 1, 1], [], []>} : vector<2x50xf32>, vector<50x32xf32>, vector<2x32xf32> -> vector<2x32xf32>
    %204 = tpu.concatenate %203, %189 in 1 : vector<2x32xf32>, vector<2x32xf32> -> vector<2x64xf32>
    %cst_31 = arith.constant dense<0.000000e+00> : vector<2x128xf32>
    %205 = tpu.matmul %204, %3, %cst_31 {dimension_numbers = #tpu.dot_dimension_numbers<[1], [0], [0], [1], [0, 0, 1, 1], [], []>} : vector<2x64xf32>, vector<64x128xf32>, vector<2x128xf32> -> vector<2x128xf32>
    %206 = vector.broadcast %4 : vector<1x128xf32> to vector<2x128xf32>
    %207 = arith.addf %205, %206 : vector<2x128xf32>
    %208 = arith.negf %207 : vector<2x128xf32>
    %209 = math.exp %208 : vector<2x128xf32>
    %cst_32 = arith.constant 1.000000e+00 : f32
    %210 = vector.broadcast %cst_32 : f32 to vector<2x128xf32>
    %211 = arith.addf %210, %209 : vector<2x128xf32>
    %212 = arith.divf %210, %211 : vector<2x128xf32>
    %213 = vector.extract_strided_slice %212 {offsets = [0, 0], sizes = [2, 32], strides = [1, 1]} : vector<2x128xf32> to vector<2x32xf32>
    %214 = vector.extract_strided_slice %212 {offsets = [0, 32], sizes = [2, 32], strides = [1, 1]} : vector<2x128xf32> to vector<2x32xf32>
    %215 = vector.extract_strided_slice %212 {offsets = [0, 96], sizes = [2, 32], strides = [1, 1]} : vector<2x128xf32> to vector<2x32xf32>
    %216 = vector.extract_strided_slice %207 {offsets = [0, 64], sizes = [2, 32], strides = [1, 1]} : vector<2x128xf32> to vector<2x32xf32>
    %217 = math.tanh %216 : vector<2x32xf32>
    %218 = arith.mulf %214, %192 : vector<2x32xf32>
    %219 = arith.mulf %213, %217 : vector<2x32xf32>
    %220 = arith.addf %218, %219 : vector<2x32xf32>
    %221 = math.tanh %220 : vector<2x32xf32>
    %222 = arith.mulf %215, %221 : vector<2x32xf32>
    %c5_i32 = arith.constant 5 : i32
    %223 = vector.broadcast %c5_i32 : i32 to vector<2x1xi32>
    %224 = arith.cmpi sgt, %1, %223 : vector<2x1xi32>
    %225 = vector.shape_cast %224 : vector<2x1xi1> to vector<2x1xi1>
    %226 = vector.broadcast %225 : vector<2x1xi1> to vector<2x32xi1>
    %227 = arith.select %226, %222, %189 : vector<2x32xi1>, vector<2x32xf32>
    %228 = vector.shape_cast %224 : vector<2x1xi1> to vector<2x1xi1>
    %229 = vector.broadcast %228 : vector<2x1xi1> to vector<2x32xi1>
    %230 = arith.select %229, %220, %192 : vector<2x32xi1>, vector<2x32xf32>
    %cst_33 = arith.constant 0.000000e+00 : f32
    %231 = vector.broadcast %cst_33 : f32 to vector<2x32xf32>
    %232 = vector.shape_cast %224 : vector<2x1xi1> to vector<2x1xi1>
    %233 = vector.broadcast %232 : vector<2x1xi1> to vector<2x32xi1>
    %234 = arith.select %233, %222, %231 : vector<2x32xi1>, vector<2x32xf32>
    %235 = vector.extract_strided_slice %0 {offsets = [0, 6], sizes = [2, 1], strides = [1, 1]} : vector<2x8xi32> to vector<2x1xi32>
    %236 = tpu.iota {dimensions = array<i32: 1>} : vector<2x50xi32>
    %237 = vector.broadcast %235 : vector<2x1xi32> to vector<2x50xi32>
    %238 = arith.cmpi eq, %237, %236 : vector<2x50xi32>
    %239 = arith.extui %238 : vector<2x50xi1> to vector<2x50xi32>
    %240 = arith.sitofp %239 : vector<2x50xi32> to vector<2x50xf32>
    %cst_34 = arith.constant dense<0.000000e+00> : vector<2x32xf32>
    %241 = tpu.matmul %240, %2, %cst_34 {dimension_numbers = #tpu.dot_dimension_numbers<[1], [0], [0], [1], [0, 0, 1, 1], [], []>} : vector<2x50xf32>, vector<50x32xf32>, vector<2x32xf32> -> vector<2x32xf32>
    %242 = tpu.concatenate %241, %227 in 1 : vector<2x32xf32>, vector<2x32xf32> -> vector<2x64xf32>
    %cst_35 = arith.constant dense<0.000000e+00> : vector<2x128xf32>
    %243 = tpu.matmul %242, %3, %cst_35 {dimension_numbers = #tpu.dot_dimension_numbers<[1], [0], [0], [1], [0, 0, 1, 1], [], []>} : vector<2x64xf32>, vector<64x128xf32>, vector<2x128xf32> -> vector<2x128xf32>
    %244 = vector.broadcast %4 : vector<1x128xf32> to vector<2x128xf32>
    %245 = arith.addf %243, %244 : vector<2x128xf32>
    %246 = arith.negf %245 : vector<2x128xf32>
    %247 = math.exp %246 : vector<2x128xf32>
    %cst_36 = arith.constant 1.000000e+00 : f32
    %248 = vector.broadcast %cst_36 : f32 to vector<2x128xf32>
    %249 = arith.addf %248, %247 : vector<2x128xf32>
    %250 = arith.divf %248, %249 : vector<2x128xf32>
    %251 = vector.extract_strided_slice %250 {offsets = [0, 0], sizes = [2, 32], strides = [1, 1]} : vector<2x128xf32> to vector<2x32xf32>
    %252 = vector.extract_strided_slice %250 {offsets = [0, 32], sizes = [2, 32], strides = [1, 1]} : vector<2x128xf32> to vector<2x32xf32>
    %253 = vector.extract_strided_slice %250 {offsets = [0, 96], sizes = [2, 32], strides = [1, 1]} : vector<2x128xf32> to vector<2x32xf32>
    %254 = vector.extract_strided_slice %245 {offsets = [0, 64], sizes = [2, 32], strides = [1, 1]} : vector<2x128xf32> to vector<2x32xf32>
    %255 = math.tanh %254 : vector<2x32xf32>
    %256 = arith.mulf %252, %230 : vector<2x32xf32>
    %257 = arith.mulf %251, %255 : vector<2x32xf32>
    %258 = arith.addf %256, %257 : vector<2x32xf32>
    %259 = math.tanh %258 : vector<2x32xf32>
    %260 = arith.mulf %253, %259 : vector<2x32xf32>
    %c6_i32 = arith.constant 6 : i32
    %261 = vector.broadcast %c6_i32 : i32 to vector<2x1xi32>
    %262 = arith.cmpi sgt, %1, %261 : vector<2x1xi32>
    %263 = vector.shape_cast %262 : vector<2x1xi1> to vector<2x1xi1>
    %264 = vector.broadcast %263 : vector<2x1xi1> to vector<2x32xi1>
    %265 = arith.select %264, %260, %227 : vector<2x32xi1>, vector<2x32xf32>
    %266 = vector.shape_cast %262 : vector<2x1xi1> to vector<2x1xi1>
    %267 = vector.broadcast %266 : vector<2x1xi1> to vector<2x32xi1>
    %268 = arith.select %267, %258, %230 : vector<2x32xi1>, vector<2x32xf32>
    %cst_37 = arith.constant 0.000000e+00 : f32
    %269 = vector.broadcast %cst_37 : f32 to vector<2x32xf32>
    %270 = vector.shape_cast %262 : vector<2x1xi1> to vector<2x1xi1>
    %271 = vector.broadcast %270 : vector<2x1xi1> to vector<2x32xi1>
    %272 = arith.select %271, %260, %269 : vector<2x32xi1>, vector<2x32xf32>
    %273 = vector.extract_strided_slice %0 {offsets = [0, 7], sizes = [2, 1], strides = [1, 1]} : vector<2x8xi32> to vector<2x1xi32>
    %274 = tpu.iota {dimensions = array<i32: 1>} : vector<2x50xi32>
    %275 = vector.broadcast %273 : vector<2x1xi32> to vector<2x50xi32>
    %276 = arith.cmpi eq, %275, %274 : vector<2x50xi32>
    %277 = arith.extui %276 : vector<2x50xi1> to vector<2x50xi32>
    %278 = arith.sitofp %277 : vector<2x50xi32> to vector<2x50xf32>
    %cst_38 = arith.constant dense<0.000000e+00> : vector<2x32xf32>
    %279 = tpu.matmul %278, %2, %cst_38 {dimension_numbers = #tpu.dot_dimension_numbers<[1], [0], [0], [1], [0, 0, 1, 1], [], []>} : vector<2x50xf32>, vector<50x32xf32>, vector<2x32xf32> -> vector<2x32xf32>
    %280 = tpu.concatenate %279, %265 in 1 : vector<2x32xf32>, vector<2x32xf32> -> vector<2x64xf32>
    %cst_39 = arith.constant dense<0.000000e+00> : vector<2x128xf32>
    %281 = tpu.matmul %280, %3, %cst_39 {dimension_numbers = #tpu.dot_dimension_numbers<[1], [0], [0], [1], [0, 0, 1, 1], [], []>} : vector<2x64xf32>, vector<64x128xf32>, vector<2x128xf32> -> vector<2x128xf32>
    %282 = vector.broadcast %4 : vector<1x128xf32> to vector<2x128xf32>
    %283 = arith.addf %281, %282 : vector<2x128xf32>
    %284 = arith.negf %283 : vector<2x128xf32>
    %285 = math.exp %284 : vector<2x128xf32>
    %cst_40 = arith.constant 1.000000e+00 : f32
    %286 = vector.broadcast %cst_40 : f32 to vector<2x128xf32>
    %287 = arith.addf %286, %285 : vector<2x128xf32>
    %288 = arith.divf %286, %287 : vector<2x128xf32>
    %289 = vector.extract_strided_slice %288 {offsets = [0, 0], sizes = [2, 32], strides = [1, 1]} : vector<2x128xf32> to vector<2x32xf32>
    %290 = vector.extract_strided_slice %288 {offsets = [0, 32], sizes = [2, 32], strides = [1, 1]} : vector<2x128xf32> to vector<2x32xf32>
    %291 = vector.extract_strided_slice %288 {offsets = [0, 96], sizes = [2, 32], strides = [1, 1]} : vector<2x128xf32> to vector<2x32xf32>
    %292 = vector.extract_strided_slice %283 {offsets = [0, 64], sizes = [2, 32], strides = [1, 1]} : vector<2x128xf32> to vector<2x32xf32>
    %293 = math.tanh %292 : vector<2x32xf32>
    %294 = arith.mulf %290, %268 : vector<2x32xf32>
    %295 = arith.mulf %289, %293 : vector<2x32xf32>
    %296 = arith.addf %294, %295 : vector<2x32xf32>
    %297 = math.tanh %296 : vector<2x32xf32>
    %298 = arith.mulf %291, %297 : vector<2x32xf32>
    %c7_i32 = arith.constant 7 : i32
    %299 = vector.broadcast %c7_i32 : i32 to vector<2x1xi32>
    %300 = arith.cmpi sgt, %1, %299 : vector<2x1xi32>
    %cst_41 = arith.constant 0.000000e+00 : f32
    %301 = vector.broadcast %cst_41 : f32 to vector<2x32xf32>
    %302 = vector.shape_cast %300 : vector<2x1xi1> to vector<2x1xi1>
    %303 = vector.broadcast %302 : vector<2x1xi1> to vector<2x32xi1>
    %304 = arith.select %303, %298, %301 : vector<2x32xi1>, vector<2x32xf32>
    %c0_42 = arith.constant 0 : index
    %c0_43 = arith.constant 0 : index
    %305 = vector.load %arg4[%c0_42, %c0_43] : memref<64x128xf32, #tpu.memory_space<vmem>>, vector<64x128xf32>
    %c0_44 = arith.constant 0 : index
    %c0_45 = arith.constant 0 : index
    %306 = vector.load %arg6[%c0_44, %c0_45] : memref<1x128xf32, #tpu.memory_space<vmem>>, vector<1x128xf32>
    %cst_46 = arith.constant 0.000000e+00 : f32
    %307 = vector.broadcast %cst_46 : f32 to vector<2x32xf32>
    %cst_47 = arith.constant 0.000000e+00 : f32
    %308 = vector.broadcast %cst_47 : f32 to vector<2x32xf32>
    %309 = tpu.concatenate %44, %307 in 1 : vector<2x32xf32>, vector<2x32xf32> -> vector<2x64xf32>
    %cst_48 = arith.constant dense<0.000000e+00> : vector<2x128xf32>
    %310 = tpu.matmul %309, %305, %cst_48 {dimension_numbers = #tpu.dot_dimension_numbers<[1], [0], [0], [1], [0, 0, 1, 1], [], []>} : vector<2x64xf32>, vector<64x128xf32>, vector<2x128xf32> -> vector<2x128xf32>
    %311 = vector.broadcast %306 : vector<1x128xf32> to vector<2x128xf32>
    %312 = arith.addf %310, %311 : vector<2x128xf32>
    %313 = arith.negf %312 : vector<2x128xf32>
    %314 = math.exp %313 : vector<2x128xf32>
    %cst_49 = arith.constant 1.000000e+00 : f32
    %315 = vector.broadcast %cst_49 : f32 to vector<2x128xf32>
    %316 = arith.addf %315, %314 : vector<2x128xf32>
    %317 = arith.divf %315, %316 : vector<2x128xf32>
    %318 = vector.extract_strided_slice %317 {offsets = [0, 0], sizes = [2, 32], strides = [1, 1]} : vector<2x128xf32> to vector<2x32xf32>
    %319 = vector.extract_strided_slice %317 {offsets = [0, 32], sizes = [2, 32], strides = [1, 1]} : vector<2x128xf32> to vector<2x32xf32>
    %320 = vector.extract_strided_slice %317 {offsets = [0, 96], sizes = [2, 32], strides = [1, 1]} : vector<2x128xf32> to vector<2x32xf32>
    %321 = vector.extract_strided_slice %312 {offsets = [0, 64], sizes = [2, 32], strides = [1, 1]} : vector<2x128xf32> to vector<2x32xf32>
    %322 = math.tanh %321 : vector<2x32xf32>
    %323 = arith.mulf %319, %308 : vector<2x32xf32>
    %324 = arith.mulf %318, %322 : vector<2x32xf32>
    %325 = arith.addf %323, %324 : vector<2x32xf32>
    %326 = math.tanh %325 : vector<2x32xf32>
    %327 = arith.mulf %320, %326 : vector<2x32xf32>
    %c0_i32_50 = arith.constant 0 : i32
    %328 = vector.broadcast %c0_i32_50 : i32 to vector<2x1xi32>
    %329 = arith.cmpi sgt, %1, %328 : vector<2x1xi32>
    %330 = vector.shape_cast %329 : vector<2x1xi1> to vector<2x1xi1>
    %331 = vector.broadcast %330 : vector<2x1xi1> to vector<2x32xi1>
    %332 = arith.select %331, %327, %307 : vector<2x32xi1>, vector<2x32xf32>
    %333 = vector.shape_cast %329 : vector<2x1xi1> to vector<2x1xi1>
    %334 = vector.broadcast %333 : vector<2x1xi1> to vector<2x32xi1>
    %335 = arith.select %334, %325, %308 : vector<2x32xi1>, vector<2x32xf32>
    %336 = tpu.concatenate %82, %332 in 1 : vector<2x32xf32>, vector<2x32xf32> -> vector<2x64xf32>
    %cst_51 = arith.constant dense<0.000000e+00> : vector<2x128xf32>
    %337 = tpu.matmul %336, %305, %cst_51 {dimension_numbers = #tpu.dot_dimension_numbers<[1], [0], [0], [1], [0, 0, 1, 1], [], []>} : vector<2x64xf32>, vector<64x128xf32>, vector<2x128xf32> -> vector<2x128xf32>
    %338 = vector.broadcast %306 : vector<1x128xf32> to vector<2x128xf32>
    %339 = arith.addf %337, %338 : vector<2x128xf32>
    %340 = arith.negf %339 : vector<2x128xf32>
    %341 = math.exp %340 : vector<2x128xf32>
    %cst_52 = arith.constant 1.000000e+00 : f32
    %342 = vector.broadcast %cst_52 : f32 to vector<2x128xf32>
    %343 = arith.addf %342, %341 : vector<2x128xf32>
    %344 = arith.divf %342, %343 : vector<2x128xf32>
    %345 = vector.extract_strided_slice %344 {offsets = [0, 0], sizes = [2, 32], strides = [1, 1]} : vector<2x128xf32> to vector<2x32xf32>
    %346 = vector.extract_strided_slice %344 {offsets = [0, 32], sizes = [2, 32], strides = [1, 1]} : vector<2x128xf32> to vector<2x32xf32>
    %347 = vector.extract_strided_slice %344 {offsets = [0, 96], sizes = [2, 32], strides = [1, 1]} : vector<2x128xf32> to vector<2x32xf32>
    %348 = vector.extract_strided_slice %339 {offsets = [0, 64], sizes = [2, 32], strides = [1, 1]} : vector<2x128xf32> to vector<2x32xf32>
    %349 = math.tanh %348 : vector<2x32xf32>
    %350 = arith.mulf %346, %335 : vector<2x32xf32>
    %351 = arith.mulf %345, %349 : vector<2x32xf32>
    %352 = arith.addf %350, %351 : vector<2x32xf32>
    %353 = math.tanh %352 : vector<2x32xf32>
    %354 = arith.mulf %347, %353 : vector<2x32xf32>
    %c1_i32_53 = arith.constant 1 : i32
    %355 = vector.broadcast %c1_i32_53 : i32 to vector<2x1xi32>
    %356 = arith.cmpi sgt, %1, %355 : vector<2x1xi32>
    %357 = vector.shape_cast %356 : vector<2x1xi1> to vector<2x1xi1>
    %358 = vector.broadcast %357 : vector<2x1xi1> to vector<2x32xi1>
    %359 = arith.select %358, %354, %332 : vector<2x32xi1>, vector<2x32xf32>
    %360 = vector.shape_cast %356 : vector<2x1xi1> to vector<2x1xi1>
    %361 = vector.broadcast %360 : vector<2x1xi1> to vector<2x32xi1>
    %362 = arith.select %361, %352, %335 : vector<2x32xi1>, vector<2x32xf32>
    %363 = tpu.concatenate %120, %359 in 1 : vector<2x32xf32>, vector<2x32xf32> -> vector<2x64xf32>
    %cst_54 = arith.constant dense<0.000000e+00> : vector<2x128xf32>
    %364 = tpu.matmul %363, %305, %cst_54 {dimension_numbers = #tpu.dot_dimension_numbers<[1], [0], [0], [1], [0, 0, 1, 1], [], []>} : vector<2x64xf32>, vector<64x128xf32>, vector<2x128xf32> -> vector<2x128xf32>
    %365 = vector.broadcast %306 : vector<1x128xf32> to vector<2x128xf32>
    %366 = arith.addf %364, %365 : vector<2x128xf32>
    %367 = arith.negf %366 : vector<2x128xf32>
    %368 = math.exp %367 : vector<2x128xf32>
    %cst_55 = arith.constant 1.000000e+00 : f32
    %369 = vector.broadcast %cst_55 : f32 to vector<2x128xf32>
    %370 = arith.addf %369, %368 : vector<2x128xf32>
    %371 = arith.divf %369, %370 : vector<2x128xf32>
    %372 = vector.extract_strided_slice %371 {offsets = [0, 0], sizes = [2, 32], strides = [1, 1]} : vector<2x128xf32> to vector<2x32xf32>
    %373 = vector.extract_strided_slice %371 {offsets = [0, 32], sizes = [2, 32], strides = [1, 1]} : vector<2x128xf32> to vector<2x32xf32>
    %374 = vector.extract_strided_slice %371 {offsets = [0, 96], sizes = [2, 32], strides = [1, 1]} : vector<2x128xf32> to vector<2x32xf32>
    %375 = vector.extract_strided_slice %366 {offsets = [0, 64], sizes = [2, 32], strides = [1, 1]} : vector<2x128xf32> to vector<2x32xf32>
    %376 = math.tanh %375 : vector<2x32xf32>
    %377 = arith.mulf %373, %362 : vector<2x32xf32>
    %378 = arith.mulf %372, %376 : vector<2x32xf32>
    %379 = arith.addf %377, %378 : vector<2x32xf32>
    %380 = math.tanh %379 : vector<2x32xf32>
    %381 = arith.mulf %374, %380 : vector<2x32xf32>
    %c2_i32_56 = arith.constant 2 : i32
    %382 = vector.broadcast %c2_i32_56 : i32 to vector<2x1xi32>
    %383 = arith.cmpi sgt, %1, %382 : vector<2x1xi32>
    %384 = vector.shape_cast %383 : vector<2x1xi1> to vector<2x1xi1>
    %385 = vector.broadcast %384 : vector<2x1xi1> to vector<2x32xi1>
    %386 = arith.select %385, %381, %359 : vector<2x32xi1>, vector<2x32xf32>
    %387 = vector.shape_cast %383 : vector<2x1xi1> to vector<2x1xi1>
    %388 = vector.broadcast %387 : vector<2x1xi1> to vector<2x32xi1>
    %389 = arith.select %388, %379, %362 : vector<2x32xi1>, vector<2x32xf32>
    %390 = tpu.concatenate %158, %386 in 1 : vector<2x32xf32>, vector<2x32xf32> -> vector<2x64xf32>
    %cst_57 = arith.constant dense<0.000000e+00> : vector<2x128xf32>
    %391 = tpu.matmul %390, %305, %cst_57 {dimension_numbers = #tpu.dot_dimension_numbers<[1], [0], [0], [1], [0, 0, 1, 1], [], []>} : vector<2x64xf32>, vector<64x128xf32>, vector<2x128xf32> -> vector<2x128xf32>
    %392 = vector.broadcast %306 : vector<1x128xf32> to vector<2x128xf32>
    %393 = arith.addf %391, %392 : vector<2x128xf32>
    %394 = arith.negf %393 : vector<2x128xf32>
    %395 = math.exp %394 : vector<2x128xf32>
    %cst_58 = arith.constant 1.000000e+00 : f32
    %396 = vector.broadcast %cst_58 : f32 to vector<2x128xf32>
    %397 = arith.addf %396, %395 : vector<2x128xf32>
    %398 = arith.divf %396, %397 : vector<2x128xf32>
    %399 = vector.extract_strided_slice %398 {offsets = [0, 0], sizes = [2, 32], strides = [1, 1]} : vector<2x128xf32> to vector<2x32xf32>
    %400 = vector.extract_strided_slice %398 {offsets = [0, 32], sizes = [2, 32], strides = [1, 1]} : vector<2x128xf32> to vector<2x32xf32>
    %401 = vector.extract_strided_slice %398 {offsets = [0, 96], sizes = [2, 32], strides = [1, 1]} : vector<2x128xf32> to vector<2x32xf32>
    %402 = vector.extract_strided_slice %393 {offsets = [0, 64], sizes = [2, 32], strides = [1, 1]} : vector<2x128xf32> to vector<2x32xf32>
    %403 = math.tanh %402 : vector<2x32xf32>
    %404 = arith.mulf %400, %389 : vector<2x32xf32>
    %405 = arith.mulf %399, %403 : vector<2x32xf32>
    %406 = arith.addf %404, %405 : vector<2x32xf32>
    %407 = math.tanh %406 : vector<2x32xf32>
    %408 = arith.mulf %401, %407 : vector<2x32xf32>
    %c3_i32_59 = arith.constant 3 : i32
    %409 = vector.broadcast %c3_i32_59 : i32 to vector<2x1xi32>
    %410 = arith.cmpi sgt, %1, %409 : vector<2x1xi32>
    %411 = vector.shape_cast %410 : vector<2x1xi1> to vector<2x1xi1>
    %412 = vector.broadcast %411 : vector<2x1xi1> to vector<2x32xi1>
    %413 = arith.select %412, %408, %386 : vector<2x32xi1>, vector<2x32xf32>
    %414 = vector.shape_cast %410 : vector<2x1xi1> to vector<2x1xi1>
    %415 = vector.broadcast %414 : vector<2x1xi1> to vector<2x32xi1>
    %416 = arith.select %415, %406, %389 : vector<2x32xi1>, vector<2x32xf32>
    %417 = tpu.concatenate %196, %413 in 1 : vector<2x32xf32>, vector<2x32xf32> -> vector<2x64xf32>
    %cst_60 = arith.constant dense<0.000000e+00> : vector<2x128xf32>
    %418 = tpu.matmul %417, %305, %cst_60 {dimension_numbers = #tpu.dot_dimension_numbers<[1], [0], [0], [1], [0, 0, 1, 1], [], []>} : vector<2x64xf32>, vector<64x128xf32>, vector<2x128xf32> -> vector<2x128xf32>
    %419 = vector.broadcast %306 : vector<1x128xf32> to vector<2x128xf32>
    %420 = arith.addf %418, %419 : vector<2x128xf32>
    %421 = arith.negf %420 : vector<2x128xf32>
    %422 = math.exp %421 : vector<2x128xf32>
    %cst_61 = arith.constant 1.000000e+00 : f32
    %423 = vector.broadcast %cst_61 : f32 to vector<2x128xf32>
    %424 = arith.addf %423, %422 : vector<2x128xf32>
    %425 = arith.divf %423, %424 : vector<2x128xf32>
    %426 = vector.extract_strided_slice %425 {offsets = [0, 0], sizes = [2, 32], strides = [1, 1]} : vector<2x128xf32> to vector<2x32xf32>
    %427 = vector.extract_strided_slice %425 {offsets = [0, 32], sizes = [2, 32], strides = [1, 1]} : vector<2x128xf32> to vector<2x32xf32>
    %428 = vector.extract_strided_slice %425 {offsets = [0, 96], sizes = [2, 32], strides = [1, 1]} : vector<2x128xf32> to vector<2x32xf32>
    %429 = vector.extract_strided_slice %420 {offsets = [0, 64], sizes = [2, 32], strides = [1, 1]} : vector<2x128xf32> to vector<2x32xf32>
    %430 = math.tanh %429 : vector<2x32xf32>
    %431 = arith.mulf %427, %416 : vector<2x32xf32>
    %432 = arith.mulf %426, %430 : vector<2x32xf32>
    %433 = arith.addf %431, %432 : vector<2x32xf32>
    %434 = math.tanh %433 : vector<2x32xf32>
    %435 = arith.mulf %428, %434 : vector<2x32xf32>
    %c4_i32_62 = arith.constant 4 : i32
    %436 = vector.broadcast %c4_i32_62 : i32 to vector<2x1xi32>
    %437 = arith.cmpi sgt, %1, %436 : vector<2x1xi32>
    %438 = vector.shape_cast %437 : vector<2x1xi1> to vector<2x1xi1>
    %439 = vector.broadcast %438 : vector<2x1xi1> to vector<2x32xi1>
    %440 = arith.select %439, %435, %413 : vector<2x32xi1>, vector<2x32xf32>
    %441 = vector.shape_cast %437 : vector<2x1xi1> to vector<2x1xi1>
    %442 = vector.broadcast %441 : vector<2x1xi1> to vector<2x32xi1>
    %443 = arith.select %442, %433, %416 : vector<2x32xi1>, vector<2x32xf32>
    %444 = tpu.concatenate %234, %440 in 1 : vector<2x32xf32>, vector<2x32xf32> -> vector<2x64xf32>
    %cst_63 = arith.constant dense<0.000000e+00> : vector<2x128xf32>
    %445 = tpu.matmul %444, %305, %cst_63 {dimension_numbers = #tpu.dot_dimension_numbers<[1], [0], [0], [1], [0, 0, 1, 1], [], []>} : vector<2x64xf32>, vector<64x128xf32>, vector<2x128xf32> -> vector<2x128xf32>
    %446 = vector.broadcast %306 : vector<1x128xf32> to vector<2x128xf32>
    %447 = arith.addf %445, %446 : vector<2x128xf32>
    %448 = arith.negf %447 : vector<2x128xf32>
    %449 = math.exp %448 : vector<2x128xf32>
    %cst_64 = arith.constant 1.000000e+00 : f32
    %450 = vector.broadcast %cst_64 : f32 to vector<2x128xf32>
    %451 = arith.addf %450, %449 : vector<2x128xf32>
    %452 = arith.divf %450, %451 : vector<2x128xf32>
    %453 = vector.extract_strided_slice %452 {offsets = [0, 0], sizes = [2, 32], strides = [1, 1]} : vector<2x128xf32> to vector<2x32xf32>
    %454 = vector.extract_strided_slice %452 {offsets = [0, 32], sizes = [2, 32], strides = [1, 1]} : vector<2x128xf32> to vector<2x32xf32>
    %455 = vector.extract_strided_slice %452 {offsets = [0, 96], sizes = [2, 32], strides = [1, 1]} : vector<2x128xf32> to vector<2x32xf32>
    %456 = vector.extract_strided_slice %447 {offsets = [0, 64], sizes = [2, 32], strides = [1, 1]} : vector<2x128xf32> to vector<2x32xf32>
    %457 = math.tanh %456 : vector<2x32xf32>
    %458 = arith.mulf %454, %443 : vector<2x32xf32>
    %459 = arith.mulf %453, %457 : vector<2x32xf32>
    %460 = arith.addf %458, %459 : vector<2x32xf32>
    %461 = math.tanh %460 : vector<2x32xf32>
    %462 = arith.mulf %455, %461 : vector<2x32xf32>
    %c5_i32_65 = arith.constant 5 : i32
    %463 = vector.broadcast %c5_i32_65 : i32 to vector<2x1xi32>
    %464 = arith.cmpi sgt, %1, %463 : vector<2x1xi32>
    %465 = vector.shape_cast %464 : vector<2x1xi1> to vector<2x1xi1>
    %466 = vector.broadcast %465 : vector<2x1xi1> to vector<2x32xi1>
    %467 = arith.select %466, %462, %440 : vector<2x32xi1>, vector<2x32xf32>
    %468 = vector.shape_cast %464 : vector<2x1xi1> to vector<2x1xi1>
    %469 = vector.broadcast %468 : vector<2x1xi1> to vector<2x32xi1>
    %470 = arith.select %469, %460, %443 : vector<2x32xi1>, vector<2x32xf32>
    %471 = tpu.concatenate %272, %467 in 1 : vector<2x32xf32>, vector<2x32xf32> -> vector<2x64xf32>
    %cst_66 = arith.constant dense<0.000000e+00> : vector<2x128xf32>
    %472 = tpu.matmul %471, %305, %cst_66 {dimension_numbers = #tpu.dot_dimension_numbers<[1], [0], [0], [1], [0, 0, 1, 1], [], []>} : vector<2x64xf32>, vector<64x128xf32>, vector<2x128xf32> -> vector<2x128xf32>
    %473 = vector.broadcast %306 : vector<1x128xf32> to vector<2x128xf32>
    %474 = arith.addf %472, %473 : vector<2x128xf32>
    %475 = arith.negf %474 : vector<2x128xf32>
    %476 = math.exp %475 : vector<2x128xf32>
    %cst_67 = arith.constant 1.000000e+00 : f32
    %477 = vector.broadcast %cst_67 : f32 to vector<2x128xf32>
    %478 = arith.addf %477, %476 : vector<2x128xf32>
    %479 = arith.divf %477, %478 : vector<2x128xf32>
    %480 = vector.extract_strided_slice %479 {offsets = [0, 0], sizes = [2, 32], strides = [1, 1]} : vector<2x128xf32> to vector<2x32xf32>
    %481 = vector.extract_strided_slice %479 {offsets = [0, 32], sizes = [2, 32], strides = [1, 1]} : vector<2x128xf32> to vector<2x32xf32>
    %482 = vector.extract_strided_slice %479 {offsets = [0, 96], sizes = [2, 32], strides = [1, 1]} : vector<2x128xf32> to vector<2x32xf32>
    %483 = vector.extract_strided_slice %474 {offsets = [0, 64], sizes = [2, 32], strides = [1, 1]} : vector<2x128xf32> to vector<2x32xf32>
    %484 = math.tanh %483 : vector<2x32xf32>
    %485 = arith.mulf %481, %470 : vector<2x32xf32>
    %486 = arith.mulf %480, %484 : vector<2x32xf32>
    %487 = arith.addf %485, %486 : vector<2x32xf32>
    %488 = math.tanh %487 : vector<2x32xf32>
    %489 = arith.mulf %482, %488 : vector<2x32xf32>
    %c6_i32_68 = arith.constant 6 : i32
    %490 = vector.broadcast %c6_i32_68 : i32 to vector<2x1xi32>
    %491 = arith.cmpi sgt, %1, %490 : vector<2x1xi32>
    %492 = vector.shape_cast %491 : vector<2x1xi1> to vector<2x1xi1>
    %493 = vector.broadcast %492 : vector<2x1xi1> to vector<2x32xi1>
    %494 = arith.select %493, %489, %467 : vector<2x32xi1>, vector<2x32xf32>
    %495 = vector.shape_cast %491 : vector<2x1xi1> to vector<2x1xi1>
    %496 = vector.broadcast %495 : vector<2x1xi1> to vector<2x32xi1>
    %497 = arith.select %496, %487, %470 : vector<2x32xi1>, vector<2x32xf32>
    %498 = tpu.concatenate %304, %494 in 1 : vector<2x32xf32>, vector<2x32xf32> -> vector<2x64xf32>
    %cst_69 = arith.constant dense<0.000000e+00> : vector<2x128xf32>
    %499 = tpu.matmul %498, %305, %cst_69 {dimension_numbers = #tpu.dot_dimension_numbers<[1], [0], [0], [1], [0, 0, 1, 1], [], []>} : vector<2x64xf32>, vector<64x128xf32>, vector<2x128xf32> -> vector<2x128xf32>
    %500 = vector.broadcast %306 : vector<1x128xf32> to vector<2x128xf32>
    %501 = arith.addf %499, %500 : vector<2x128xf32>
    %502 = arith.negf %501 : vector<2x128xf32>
    %503 = math.exp %502 : vector<2x128xf32>
    %cst_70 = arith.constant 1.000000e+00 : f32
    %504 = vector.broadcast %cst_70 : f32 to vector<2x128xf32>
    %505 = arith.addf %504, %503 : vector<2x128xf32>
    %506 = arith.divf %504, %505 : vector<2x128xf32>
    %507 = vector.extract_strided_slice %506 {offsets = [0, 0], sizes = [2, 32], strides = [1, 1]} : vector<2x128xf32> to vector<2x32xf32>
    %508 = vector.extract_strided_slice %506 {offsets = [0, 32], sizes = [2, 32], strides = [1, 1]} : vector<2x128xf32> to vector<2x32xf32>
    %509 = vector.extract_strided_slice %506 {offsets = [0, 96], sizes = [2, 32], strides = [1, 1]} : vector<2x128xf32> to vector<2x32xf32>
    %510 = vector.extract_strided_slice %501 {offsets = [0, 64], sizes = [2, 32], strides = [1, 1]} : vector<2x128xf32> to vector<2x32xf32>
    %511 = math.tanh %510 : vector<2x32xf32>
    %512 = arith.mulf %508, %497 : vector<2x32xf32>
    %513 = arith.mulf %507, %511 : vector<2x32xf32>
    %514 = arith.addf %512, %513 : vector<2x32xf32>
    %515 = math.tanh %514 : vector<2x32xf32>
    %516 = arith.mulf %509, %515 : vector<2x32xf32>
    %c7_i32_71 = arith.constant 7 : i32
    %517 = vector.broadcast %c7_i32_71 : i32 to vector<2x1xi32>
    %518 = arith.cmpi sgt, %1, %517 : vector<2x1xi32>
    %519 = vector.shape_cast %518 : vector<2x1xi1> to vector<2x1xi1>
    %520 = vector.broadcast %519 : vector<2x1xi1> to vector<2x32xi1>
    %521 = arith.select %520, %516, %494 : vector<2x32xi1>, vector<2x32xf32>
    %c0_72 = arith.constant 0 : index
    %c0_73 = arith.constant 0 : index
    %522 = vector.load %arg7[%c0_72, %c0_73] : memref<32x6xf32, #tpu.memory_space<vmem>>, vector<32x6xf32>
    %cst_74 = arith.constant dense<0.000000e+00> : vector<2x6xf32>
    %523 = tpu.matmul %521, %522, %cst_74 {dimension_numbers = #tpu.dot_dimension_numbers<[1], [0], [0], [1], [0, 0, 1, 1], [], []>} : vector<2x32xf32>, vector<32x6xf32>, vector<2x6xf32> -> vector<2x6xf32>
    %c0_75 = arith.constant 0 : index
    %c0_76 = arith.constant 0 : index
    %524 = vector.load %arg8[%c0_75, %c0_76] : memref<1x6xf32, #tpu.memory_space<vmem>>, vector<1x6xf32>
    %525 = vector.broadcast %524 : vector<1x6xf32> to vector<2x6xf32>
    %526 = arith.addf %523, %525 : vector<2x6xf32>
    %c0_77 = arith.constant 0 : index
    %c0_78 = arith.constant 0 : index
    %527 = vector.load %arg9[%c0_77, %c0_78] : memref<2x6xf32, #tpu.memory_space<vmem>>, vector<2x6xf32>
    tpu.vector_store %arg9[%c0_77, %c0_78], %526 {strides = array<i32>} : memref<2x6xf32, #tpu.memory_space<vmem>>, vector<2x6xf32>,
    return
  }
}

</mosaic_0001>

<llo_original>
// kernel: lstm_forward.1
$region0: #{lstm_forward.1}
  #allocation0 [shape = 'u32[]', space=smem, size = 0x4, offset = 0x4, fixed_abs, tag = 'smem constant byte address 0x4 - core index']
  #allocation1 [shape = 'u32[144,128]{1,0:T(1,128)}', space=vmem, size = 0x12000, scoped, tag = 'internal scratch']
  %s0 = inlined_call_operand.vmem [shape: s32[2,8], index: 0, kind: input, shape index: {}]
  %s1 = inlined_call_operand.vmem [shape: s32[2,1], index: 1, kind: input, shape index: {}]
  %s2 = inlined_call_operand.vmem [shape: f32[50,32], index: 2, kind: input, shape index: {}]
  %s3 = inlined_call_operand.vmem [shape: f32[64,128], index: 3, kind: input, shape index: {}]
  %s4 = inlined_call_operand.vmem [shape: f32[64,128], index: 4, kind: input, shape index: {}]
  %s5 = inlined_call_operand.vmem [shape: f32[1,128], index: 5, kind: input, shape index: {}]
  %s6 = inlined_call_operand.vmem [shape: f32[1,128], index: 6, kind: input, shape index: {}]
  %s7 = inlined_call_operand.vmem [shape: f32[32,6], index: 7, kind: input, shape index: {}]
  %s8 = inlined_call_operand.vmem [shape: f32[1,6], index: 8, kind: input, shape index: {}]
  %s9 = inlined_call_operand.hbm [shape: f32[2,6], index: 9, kind: output, shape index: {}]
  %s10 = sld [smem:[#allocation0]]
  $region46: #{lstm_forward.1} parent=0
    _
  %s12 = ssub.s32 1, %s10
  %s13 = scalar_select 0, %s12, %s10
  $region1: #{lstm_forward.1} parent=0
    #allocation2 [shape = 'u8[1024]{0}', space=vmem, size = 0x400, scoped, tag = 'output window, operand 0, single buffered']
    #allocation3 [shape = 's32[1]{0}', space=sflag, size = 0x4, scoped, tag = 'scoped memory for lstm_forward.1']
    %14 = vsyncpa [#allocation3], 0
    // Predicated region
    $region2: #{lstm_forward.1} parent=1 // pred_check
      _
    $region3: #{lstm_forward.1} parent=1 // pred_check_branch
      %16 = sbr.rel (0) target = $region5
    $region4: #{lstm_forward.1} parent=1 // pred_region
      _
    $region5: #{lstm_forward.1} parent=1 // pred_fallthru
      _
    // Predicated region
    $region6: #{lstm_forward.1} parent=1 // pred_check
      _
    $region7: #{lstm_forward.1} parent=1 // pred_check_branch
      %18 = sbr.rel (0) target = $region9
    $region8: #{lstm_forward.1} parent=1 // pred_region
      _
    $region9: #{lstm_forward.1} parent=1 // pred_fallthru
      _
    // Predicated region
    $region10: #{lstm_forward.1} parent=1 // pred_check
      _
    $region11: #{lstm_forward.1} parent=1 // pred_check_branch
      %20 = sbr.rel (0) target = $region13
    $region12: #{lstm_forward.1} parent=1 // pred_region
      _
    $region13: #{lstm_forward.1} parent=1 // pred_fallthru
      _
    // Predicated region
    $region14: #{lstm_forward.1} parent=1 // pred_check
      _
    $region15: #{lstm_forward.1} parent=1 // pred_check_branch
      %22 = sbr.rel (0) target = $region17
    $region16: #{lstm_forward.1} parent=1 // pred_region
      _
    $region17: #{lstm_forward.1} parent=1 // pred_fallthru
      _
    // Predicated region
    $region18: #{lstm_forward.1} parent=1 // pred_check
      _
    $region19: #{lstm_forward.1} parent=1 // pred_check_branch
      %24 = sbr.rel (0) target = $region21
    $region20: #{lstm_forward.1} parent=1 // pred_region
      _
    $region21: #{lstm_forward.1} parent=1 // pred_fallthru
      _
    // Predicated region
    $region22: #{lstm_forward.1} parent=1 // pred_check
      _
    $region23: #{lstm_forward.1} parent=1 // pred_check_branch
      %26 = sbr.rel (0) target = $region25
    $region24: #{lstm_forward.1} parent=1 // pred_region
      _
    $region25: #{lstm_forward.1} parent=1 // pred_fallthru
      _
    // Predicated region
    $region26: #{lstm_forward.1} parent=1 // pred_check
      _
    $region27: #{lstm_forward.1} parent=1 // pred_check_branch
      %28 = sbr.rel (0) target = $region29
    $region28: #{lstm_forward.1} parent=1 // pred_region
      _
    $region29: #{lstm_forward.1} parent=1 // pred_fallthru
      _
    // Predicated region
    $region30: #{lstm_forward.1} parent=1 // pred_check
      _
    $region31: #{lstm_forward.1} parent=1 // pred_check_branch
      %30 = sbr.rel (0) target = $region33
    $region32: #{lstm_forward.1} parent=1 // pred_region
      _
    $region33: #{lstm_forward.1} parent=1 // pred_fallthru
      _
    // Predicated region
    $region34: #{lstm_forward.1} parent=1 // pred_check
      _
    $region35: #{lstm_forward.1} parent=1 // pred_check_branch
      %32 = sbr.rel (0) target = $region37
    $region36: #{lstm_forward.1} parent=1 // pred_region
      _
    $region37: #{lstm_forward.1} parent=1 // pred_fallthru
      _
    %v33 = vld [vmem:[%s0] sm:$0x3]
    %v34 = vld [vmem:[%s1] sm:$0x3]
    %v35 = vld [vmem:[%s2] sm:$0xff]
    %v36 = vld [vmem:[%s2 + $0x8] sm:$0xff]
    %v37 = vld [vmem:[%s2 + $0x10] sm:$0xff]
    %v38 = vld [vmem:[%s2 + $0x18] sm:$0xff]
    %v39 = vld [vmem:[%s2 + $0x20] sm:$0xff]
    %v40 = vld [vmem:[%s2 + $0x28] sm:$0xff]
    %v41 = vld [vmem:[%s2 + $0x30] sm:$0x3]
    %v42 = vld [vmem:[%s3] sm:$0xff]
    %v43 = vld [vmem:[%s3 + $0x8] sm:$0xff]
    %v44 = vld [vmem:[%s3 + $0x10] sm:$0xff]
    %v45 = vld [vmem:[%s3 + $0x18] sm:$0xff]
    %v46 = vld [vmem:[%s3 + $0x20] sm:$0xff]
    %v47 = vld [vmem:[%s3 + $0x28] sm:$0xff]
    %v48 = vld [vmem:[%s3 + $0x30] sm:$0xff]
    %v49 = vld [vmem:[%s3 + $0x38] sm:$0xff]
    %v50 = vld [vmem:[%s5] sm:$0x1]
    %v51 = vlaneseq
    %v52 = vand.u32 %v51, 127
    %53 = vset.pattern.permute.xlu0 0
    %54 = vperm.xlu0 %53, %v33
    %v55 = vpop.permute.xlu0 %54
    %vm56 = vcmp.eq.s32.totalorder %v55, %v52
    %v57 = vsel %vm56, 1, 0
    %v58 = vcvt.s32.f32 %v57
    %vm59 = vcmask 408576
    %v61 = vsel %vm59, %v58, 0
    %vm63 = vcmask 1041408
    %v65 = vsel %vm63, %v41, 0
    %67 = vmatprep.subr.mxu0 0.0
    %68 = vmatpush1.msra.mxu0 %v35
    %69 = vmatprep.subr.mxu0 0.0
    %70 = vmatpush1.msra.mxu0 %v36
    %71 = vmatprep.subr.mxu0 0.0
    %72 = vmatpush1.msra.mxu0 %v37
    %73 = vmatprep.subr.mxu0 0.0
    %74 = vmatpush1.msra.mxu0 %v38
    %75 = vmatprep.subr.mxu0 0.0
    %76 = vmatpush1.msra.mxu0 %v39
    %77 = vmatprep.subr.mxu0 0.0
    %78 = vmatpush1.msra.mxu0 %v40
    %79 = vmatprep.subr.mxu0 0.0
    %80 = vmatpush1.msra.mxu0 %v65
    %81 = vmatprep.subr.mxu0 0.0
    %82 = vmatpush1.msra.mxu0 0.0
    %83 = vmatprep.subr.mxu0 0.0
    %84 = vmatpush1.msra.mxu0 0.0
    %85 = vmatprep.subr.mxu0 0.0
    %86 = vmatpush1.msra.mxu0 0.0
    %87 = vmatprep.subr.mxu0 0.0
    %88 = vmatpush1.msra.mxu0 0.0
    %89 = vmatprep.subr.mxu0 0.0
    %90 = vmatpush1.msra.mxu0 0.0
    %91 = vmatprep.subr.mxu0 0.0
    %92 = vmatpush1.msra.mxu0 0.0
    %93 = vmatprep.subr.mxu0 0.0
    %94 = vmatpush1.msra.mxu0 0.0
    %95 = vmatprep.subr.mxu0 0.0
    %96 = vmatpush1.msra.mxu0 0.0
    %97 = vmatprep.subr.mxu0 0.0
    %98 = vmatpush1.msra.mxu0 0.0
    %99 = vmatprep.subr.mxu0 0.0
    %100 = vmatpush1.msra.mxu0 0.0
    %101 = vmatprep.subr.mxu0 0.0
    %102 = vmatpush1.msra.mxu0 0.0
    %103 = vmatprep.subr.mxu0 0.0
    %104 = vmatpush1.msra.mxu0 0.0
    %105 = vmatprep.subr.mxu0 0.0
    %106 = vmatpush1.msra.mxu0 0.0
    %107 = vmatprep.subr.mxu0 0.0
    %108 = vmatpush1.msra.mxu0 0.0
    %109 = vmatprep.subr.mxu0 0.0
    %110 = vmatpush1.msra.mxu0 0.0
    %111 = vmatprep.subr.mxu0 0.0
    %112 = vmatpush1.msra.mxu0 0.0
    %113 = vmatprep.subr.mxu0 0.0
    %114 = vmatpush1.msra.mxu0 0.0
    %115 = vmatprep.subr.mxu0 0.0
    %116 = vmatpush1.msra.mxu0 0.0
    %117 = vmatprep.subr.mxu0 0.0
    %118 = vmatpush1.msra.mxu0 0.0
    %119 = vmatprep.subr.mxu0 0.0
    %120 = vmatpush1.msra.mxu0 0.0
    %121 = vmatprep.subr.mxu0 0.0
    %122 = vmatpush1.msra.mxu0 0.0
    %123 = vmatprep.subr.mxu0 0.0
    %124 = vmatpush1.msra.mxu0 0.0
    %125 = vmatprep.subr.mxu0 0.0
    %126 = vmatpush1.msra.mxu0 0.0
    %127 = vmatprep.subr.mxu0 0.0
    %128 = vmatpush1.msra.mxu0 0.0
    %129 = vmatprep.subr.mxu0 0.0
    %130 = vmatpush1.msra.mxu0 0.0
    %131 = vmatprep.mubr.f32.mxu0 0.0
    %132 = vmatmul.mubr.f32.gmra.mrb[0].mxu0 %v61
    %v133 = vpop.f32.mrb[0].mxu0
    %v134 = vadd.f32 0.0, %v133
    %v135 = vpop.f32.mrb[0].mxu0
    %136 = vdwg.mxu0
    %vm137 = vcmask 261120
    %v138 = vsel %vm137, %v134, 0.0
    %v140 = vlaneseq
    %v141 = vshrl.u32 %v140, 7
    %v142 = vsub.s32 0, %v141
    %v143 = vrot.slane %v50, %v142
    %vm145 = vcmask 523264
    %v147 = vsel %vm145, %v138, 0
    %149 = vmatprep.subr.mxu0 0.0
    %150 = vmatpush1.msra.mxu0 %v42
    %151 = vmatprep.subr.mxu0 0.0
    %152 = vmatpush1.msra.mxu0 %v43
    %153 = vmatprep.subr.mxu0 0.0
    %154 = vmatpush1.msra.mxu0 %v44
    %155 = vmatprep.subr.mxu0 0.0
    %156 = vmatpush1.msra.mxu0 %v45
    %157 = vmatprep.subr.mxu0 0.0
    %158 = vmatpush1.msra.mxu0 %v46
    %159 = vmatprep.subr.mxu0 0.0
    %160 = vmatpush1.msra.mxu0 %v47
    %161 = vmatprep.subr.mxu0 0.0
    %162 = vmatpush1.msra.mxu0 %v48
    %163 = vmatprep.subr.mxu0 0.0
    %164 = vmatpush1.msra.mxu0 %v49
    %165 = vmatprep.subr.mxu0 0.0
    %166 = vmatpush1.msra.mxu0 0.0
    %167 = vmatprep.subr.mxu0 0.0
    %168 = vmatpush1.msra.mxu0 0.0
    %169 = vmatprep.subr.mxu0 0.0
    %170 = vmatpush1.msra.mxu0 0.0
    %171 = vmatprep.subr.mxu0 0.0
    %172 = vmatpush1.msra.mxu0 0.0
    %173 = vmatprep.subr.mxu0 0.0
    %174 = vmatpush1.msra.mxu0 0.0
    %175 = vmatprep.subr.mxu0 0.0
    %176 = vmatpush1.msra.mxu0 0.0
    %177 = vmatprep.subr.mxu0 0.0
    %178 = vmatpush1.msra.mxu0 0.0
    %179 = vmatprep.subr.mxu0 0.0
    %180 = vmatpush1.msra.mxu0 0.0
    %181 = vmatprep.subr.mxu0 0.0
    %182 = vmatpush1.msra.mxu0 0.0
    %183 = vmatprep.subr.mxu0 0.0
    %184 = vmatpush1.msra.mxu0 0.0
    %185 = vmatprep.subr.mxu0 0.0
    %186 = vmatpush1.msra.mxu0 0.0
    %187 = vmatprep.subr.mxu0 0.0
    %188 = vmatpush1.msra.mxu0 0.0
    %189 = vmatprep.subr.mxu0 0.0
    %190 = vmatpush1.msra.mxu0 0.0
    %191 = vmatprep.subr.mxu0 0.0
    %192 = vmatpush1.msra.mxu0 0.0
    %193 = vmatprep.subr.mxu0 0.0
    %194 = vmatpush1.msra.mxu0 0.0
    %195 = vmatprep.subr.mxu0 0.0
    %196 = vmatpush1.msra.mxu0 0.0
    %197 = vmatprep.subr.mxu0 0.0
    %198 = vmatpush1.msra.mxu0 0.0
    %199 = vmatprep.subr.mxu0 0.0
    %200 = vmatpush1.msra.mxu0 0.0
    %201 = vmatprep.subr.mxu0 0.0
    %202 = vmatpush1.msra.mxu0 0.0
    %203 = vmatprep.subr.mxu0 0.0
    %204 = vmatpush1.msra.mxu0 0.0
    %205 = vmatprep.subr.mxu0 0.0
    %206 = vmatpush1.msra.mxu0 0.0
    %207 = vmatprep.subr.mxu0 0.0
    %208 = vmatpush1.msra.mxu0 0.0
    %209 = vmatprep.subr.mxu0 0.0
    %210 = vmatpush1.msra.mxu0 0.0
    %211 = vmatprep.subr.mxu0 0.0
    %212 = vmatpush1.msra.mxu0 0.0
    %213 = vmatprep.mubr.f32.mxu0 0.0
    %214 = vmatmul.mubr.f32.gmra.mrb[0].mxu0 %v147
    %v215 = vpop.f32.mrb[0].mxu0
    %v216 = vadd.f32 %v143, %v215
    %v217 = vpop.f32.mrb[0].mxu0
    %218 = vdwg.mxu0
    %v219 = vxor.u32 %v216, 2147483648
    %v220 = vmul.f32 %v219, 1.442695
    %v221 = vpow.pop %v220
    %v222 = vadd.f32 %v221, 1.0
    %v223 = vrcp.pop %v222
    %v224 = vmul.f32 1.0, %v223
    %v225 = vtanh.pop %v216
    %v226 = vmul.f32 %v224, 0.0
    %228 = vrot.lane.b32.xlu0 %v225, 64
    %v229 = vpop.permute.xlu0 %228
    %v231 = vmul.f32 %v224, %v229
    %233 = vrot.lane.b32.xlu0 %v231, 32
    %v234 = vpop.permute.xlu0 %233
    %v236 = vadd.f32 %v226, %v234
    %v237 = vtanh.pop %v236
    %239 = vrot.lane.b32.xlu0 %v237, 64
    %v240 = vpop.permute.xlu0 %239
    %v242 = vmul.f32 %v224, %v240
    %vm243 = vcmp.gt.s32.totalorder %v34, 0
    %v244 = vsel %vm243, 1, 0
    %245 = vset.pattern.permute.xlu0 0
    %246 = vperm.xlu0 %245, %v244
    %v247 = vpop.permute.xlu0 %246
    %vm248 = vcmp.eq.s32.totalorder %v247, 1
    %v249 = vsel %vm248, %v242, 0.0
    %v250 = vsel %vm248, %v236, 0.0
    %251 = vset.pattern.permute.xlu0 1
    %252 = vperm.xlu0 %251, %v33
    %v253 = vpop.permute.xlu0 %252
    %vm254 = vcmp.eq.s32.totalorder %v253, %v52
    %v255 = vsel %vm254, 1, 0
    %v256 = vcvt.s32.f32 %v255
    %v258 = vsel %vm59, %v256, 0
    %260 = vmatprep.subr.mxu0 0.0
    %261 = vmatpush1.msra.mxu0 %v35
    %262 = vmatprep.subr.mxu0 0.0
    %263 = vmatpush1.msra.mxu0 %v36
    %264 = vmatprep.subr.mxu0 0.0
    %265 = vmatpush1.msra.mxu0 %v37
    %266 = vmatprep.subr.mxu0 0.0
    %267 = vmatpush1.msra.mxu0 %v38
    %268 = vmatprep.subr.mxu0 0.0
    %269 = vmatpush1.msra.mxu0 %v39
    %270 = vmatprep.subr.mxu0 0.0
    %271 = vmatpush1.msra.mxu0 %v40
    %272 = vmatprep.subr.mxu0 0.0
    %273 = vmatpush1.msra.mxu0 %v65
    %274 = vmatprep.subr.mxu0 0.0
    %275 = vmatpush1.msra.mxu0 0.0
    %276 = vmatprep.subr.mxu0 0.0
    %277 = vmatpush1.msra.mxu0 0.0
    %278 = vmatprep.subr.mxu0 0.0
    %279 = vmatpush1.msra.mxu0 0.0
    %280 = vmatprep.subr.mxu0 0.0
    %281 = vmatpush1.msra.mxu0 0.0
    %282 = vmatprep.subr.mxu0 0.0
    %283 = vmatpush1.msra.mxu0 0.0
    %284 = vmatprep.subr.mxu0 0.0
    %285 = vmatpush1.msra.mxu0 0.0
    %286 = vmatprep.subr.mxu0 0.0
    %287 = vmatpush1.msra.mxu0 0.0
    %288 = vmatprep.subr.mxu0 0.0
    %289 = vmatpush1.msra.mxu0 0.0
    %290 = vmatprep.subr.mxu0 0.0
    %291 = vmatpush1.msra.mxu0 0.0
    %292 = vmatprep.subr.mxu0 0.0
    %293 = vmatpush1.msra.mxu0 0.0
    %294 = vmatprep.subr.mxu0 0.0
    %295 = vmatpush1.msra.mxu0 0.0
    %296 = vmatprep.subr.mxu0 0.0
    %297 = vmatpush1.msra.mxu0 0.0
    %298 = vmatprep.subr.mxu0 0.0
    %299 = vmatpush1.msra.mxu0 0.0
    %300 = vmatprep.subr.mxu0 0.0
    %301 = vmatpush1.msra.mxu0 0.0
    %302 = vmatprep.subr.mxu0 0.0
    %303 = vmatpush1.msra.mxu0 0.0
    %304 = vmatprep.subr.mxu0 0.0
    %305 = vmatpush1.msra.mxu0 0.0
    %306 = vmatprep.subr.mxu0 0.0
    %307 = vmatpush1.msra.mxu0 0.0
    %308 = vmatprep.subr.mxu0 0.0
    %309 = vmatpush1.msra.mxu0 0.0
    %310 = vmatprep.subr.mxu0 0.0
    %311 = vmatpush1.msra.mxu0 0.0
    %312 = vmatprep.subr.mxu0 0.0
    %313 = vmatpush1.msra.mxu0 0.0
    %314 = vmatprep.subr.mxu0 0.0
    %315 = vmatpush1.msra.mxu0 0.0
    %316 = vmatprep.subr.mxu0 0.0
    %317 = vmatpush1.msra.mxu0 0.0
    %318 = vmatprep.subr.mxu0 0.0
    %319 = vmatpush1.msra.mxu0 0.0
    %320 = vmatprep.subr.mxu0 0.0
    %321 = vmatpush1.msra.mxu0 0.0
    %322 = vmatprep.subr.mxu0 0.0
    %323 = vmatpush1.msra.mxu0 0.0
    %324 = vmatprep.mubr.f32.mxu0 0.0
    %325 = vmatmul.mubr.f32.gmra.mrb[0].mxu0 %v258
    %v326 = vpop.f32.mrb[0].mxu0
    %v327 = vadd.f32 0.0, %v326
    %v328 = vpop.f32.mrb[0].mxu0
    %329 = vdwg.mxu0
    %331 = vrot.lane.b32.xlu0 %v249, 64
    %v332 = vpop.permute.xlu0 %331
    %v334 = vsel %vm137, %v327, %v332
    %v336 = vsel %vm145, %v334, 0
    %338 = vmatprep.subr.mxu0 0.0
    %339 = vmatpush1.msra.mxu0 %v42
    %340 = vmatprep.subr.mxu0 0.0
    %341 = vmatpush1.msra.mxu0 %v43
    %342 = vmatprep.subr.mxu0 0.0
    %343 = vmatpush1.msra.mxu0 %v44
    %344 = vmatprep.subr.mxu0 0.0
    %345 = vmatpush1.msra.mxu0 %v45
    %346 = vmatprep.subr.mxu0 0.0
    %347 = vmatpush1.msra.mxu0 %v46
    %348 = vmatprep.subr.mxu0 0.0
    %349 = vmatpush1.msra.mxu0 %v47
    %350 = vmatprep.subr.mxu0 0.0
    %351 = vmatpush1.msra.mxu0 %v48
    %352 = vmatprep.subr.mxu0 0.0
    %353 = vmatpush1.msra.mxu0 %v49
    %354 = vmatprep.subr.mxu0 0.0
    %355 = vmatpush1.msra.mxu0 0.0
    %356 = vmatprep.subr.mxu0 0.0
    %357 = vmatpush1.msra.mxu0 0.0
    %358 = vmatprep.subr.mxu0 0.0
    %359 = vmatpush1.msra.mxu0 0.0
    %360 = vmatprep.subr.mxu0 0.0
    %361 = vmatpush1.msra.mxu0 0.0
    %362 = vmatprep.subr.mxu0 0.0
    %363 = vmatpush1.msra.mxu0 0.0
    %364 = vmatprep.subr.mxu0 0.0
    %365 = vmatpush1.msra.mxu0 0.0
    %366 = vmatprep.subr.mxu0 0.0
    %367 = vmatpush1.msra.mxu0 0.0
    %368 = vmatprep.subr.mxu0 0.0
    %369 = vmatpush1.msra.mxu0 0.0
    %370 = vmatprep.subr.mxu0 0.0
    %371 = vmatpush1.msra.mxu0 0.0
    %372 = vmatprep.subr.mxu0 0.0
    %373 = vmatpush1.msra.mxu0 0.0
    %374 = vmatprep.subr.mxu0 0.0
    %375 = vmatpush1.msra.mxu0 0.0
    %376 = vmatprep.subr.mxu0 0.0
    %377 = vmatpush1.msra.mxu0 0.0
    %378 = vmatprep.subr.mxu0 0.0
    %379 = vmatpush1.msra.mxu0 0.0
    %380 = vmatprep.subr.mxu0 0.0
    %381 = vmatpush1.msra.mxu0 0.0
    %382 = vmatprep.subr.mxu0 0.0
    %383 = vmatpush1.msra.mxu0 0.0
    %384 = vmatprep.subr.mxu0 0.0
    %385 = vmatpush1.msra.mxu0 0.0
    %386 = vmatprep.subr.mxu0 0.0
    %387 = vmatpush1.msra.mxu0 0.0
    %388 = vmatprep.subr.mxu0 0.0
    %389 = vmatpush1.msra.mxu0 0.0
    %390 = vmatprep.subr.mxu0 0.0
    %391 = vmatpush1.msra.mxu0 0.0
    %392 = vmatprep.subr.mxu0 0.0
    %393 = vmatpush1.msra.mxu0 0.0
    %394 = vmatprep.subr.mxu0 0.0
    %395 = vmatpush1.msra.mxu0 0.0
    %396 = vmatprep.subr.mxu0 0.0
    %397 = vmatpush1.msra.mxu0 0.0
    %398 = vmatprep.subr.mxu0 0.0
    %399 = vmatpush1.msra.mxu0 0.0
    %400 = vmatprep.subr.mxu0 0.0
    %401 = vmatpush1.msra.mxu0 0.0
    %402 = vmatprep.mubr.f32.mxu0 0.0
    %403 = vmatmul.mubr.f32.gmra.mrb[0].mxu0 %v336
    %v404 = vpop.f32.mrb[0].mxu0
    %v405 = vadd.f32 %v143, %v404
    %v406 = vpop.f32.mrb[0].mxu0
    %407 = vdwg.mxu0
    %v408 = vxor.u32 %v405, 2147483648
    %v409 = vmul.f32 %v408, 1.442695
    %v410 = vpow.pop %v409
    %v411 = vadd.f32 %v410, 1.0
    %v412 = vrcp.pop %v411
    %v413 = vmul.f32 1.0, %v412
    %v414 = vtanh.pop %v405
    %v415 = vmul.f32 %v413, %v250
    %417 = vrot.lane.b32.xlu0 %v414, 64
    %v418 = vpop.permute.xlu0 %417
    %v420 = vmul.f32 %v413, %v418
    %422 = vrot.lane.b32.xlu0 %v420, 32
    %v423 = vpop.permute.xlu0 %422
    %v425 = vadd.f32 %v415, %v423
    %v426 = vtanh.pop %v425
    %428 = vrot.lane.b32.xlu0 %v426, 64
    %v429 = vpop.permute.xlu0 %428
    %v431 = vmul.f32 %v413, %v429
    %vm432 = vcmp.gt.s32.totalorder %v34, 1
    %v433 = vsel %vm432, 1, 0
    %434 = vset.pattern.permute.xlu0 0
    %435 = vperm.xlu0 %434, %v433
    %v436 = vpop.permute.xlu0 %435
    %vm437 = vcmp.eq.s32.totalorder %v436, 1
    %v438 = vsel %vm437, %v431, %v249
    %v439 = vsel %vm437, %v425, %v250
    %v440 = vsel %vm437, %v431, 0.0
    %441 = vset.pattern.permute.xlu0 2
    %442 = vperm.xlu0 %441, %v33
    %v443 = vpop.permute.xlu0 %442
    %vm444 = vcmp.eq.s32.totalorder %v443, %v52
    %v445 = vsel %vm444, 1, 0
    %v446 = vcvt.s32.f32 %v445
    %v448 = vsel %vm59, %v446, 0
    %450 = vmatprep.subr.mxu0 0.0
    %451 = vmatpush1.msra.mxu0 %v35
    %452 = vmatprep.subr.mxu0 0.0
    %453 = vmatpush1.msra.mxu0 %v36
    %454 = vmatprep.subr.mxu0 0.0
    %455 = vmatpush1.msra.mxu0 %v37
    %456 = vmatprep.subr.mxu0 0.0
    %457 = vmatpush1.msra.mxu0 %v38
    %458 = vmatprep.subr.mxu0 0.0
    %459 = vmatpush1.msra.mxu0 %v39
    %460 = vmatprep.subr.mxu0 0.0
    %461 = vmatpush1.msra.mxu0 %v40
    %462 = vmatprep.subr.mxu0 0.0
    %463 = vmatpush1.msra.mxu0 %v65
    %464 = vmatprep.subr.mxu0 0.0
    %465 = vmatpush1.msra.mxu0 0.0
    %466 = vmatprep.subr.mxu0 0.0
    %467 = vmatpush1.msra.mxu0 0.0
    %468 = vmatprep.subr.mxu0 0.0
    %469 = vmatpush1.msra.mxu0 0.0
    %470 = vmatprep.subr.mxu0 0.0
    %471 = vmatpush1.msra.mxu0 0.0
    %472 = vmatprep.subr.mxu0 0.0
    %473 = vmatpush1.msra.mxu0 0.0
    %474 = vmatprep.subr.mxu0 0.0
    %475 = vmatpush1.msra.mxu0 0.0
    %476 = vmatprep.subr.mxu0 0.0
    %477 = vmatpush1.msra.mxu0 0.0
    %478 = vmatprep.subr.mxu0 0.0
    %479 = vmatpush1.msra.mxu0 0.0
    %480 = vmatprep.subr.mxu0 0.0
    %481 = vmatpush1.msra.mxu0 0.0
    %482 = vmatprep.subr.mxu0 0.0
    %483 = vmatpush1.msra.mxu0 0.0
    %484 = vmatprep.subr.mxu0 0.0
    %485 = vmatpush1.msra.mxu0 0.0
    %486 = vmatprep.subr.mxu0 0.0
    %487 = vmatpush1.msra.mxu0 0.0
    %488 = vmatprep.subr.mxu0 0.0
    %489 = vmatpush1.msra.mxu0 0.0
    %490 = vmatprep.subr.mxu0 0.0
    %491 = vmatpush1.msra.mxu0 0.0
    %492 = vmatprep.subr.mxu0 0.0
    %493 = vmatpush1.msra.mxu0 0.0
    %494 = vmatprep.subr.mxu0 0.0
    %495 = vmatpush1.msra.mxu0 0.0
    %496 = vmatprep.subr.mxu0 0.0
    %497 = vmatpush1.msra.mxu0 0.0
    %498 = vmatprep.subr.mxu0 0.0
    %499 = vmatpush1.msra.mxu0 0.0
    %500 = vmatprep.subr.mxu0 0.0
    %501 = vmatpush1.msra.mxu0 0.0
    %502 = vmatprep.subr.mxu0 0.0
    %503 = vmatpush1.msra.mxu0 0.0
    %504 = vmatprep.subr.mxu0 0.0
    %505 = vmatpush1.msra.mxu0 0.0
    %506 = vmatprep.subr.mxu0 0.0
    %507 = vmatpush1.msra.mxu0 0.0
    %508 = vmatprep.subr.mxu0 0.0
    %509 = vmatpush1.msra.mxu0 0.0
    %510 = vmatprep.subr.mxu0 0.0
    %511 = vmatpush1.msra.mxu0 0.0
    %512 = vmatprep.subr.mxu0 0.0
    %513 = vmatpush1.msra.mxu0 0.0
    %514 = vmatprep.mubr.f32.mxu0 0.0
    %515 = vmatmul.mubr.f32.gmra.mrb[0].mxu0 %v448
    %v516 = vpop.f32.mrb[0].mxu0
    %v517 = vadd.f32 0.0, %v516
    %v518 = vpop.f32.mrb[0].mxu0
    %519 = vdwg.mxu0
    %521 = vrot.lane.b32.xlu0 %v438, 64
    %v522 = vpop.permute.xlu0 %521
    %v524 = vsel %vm137, %v517, %v522
    %v526 = vsel %vm145, %v524, 0
    %528 = vmatprep.subr.mxu0 0.0
    %529 = vmatpush1.msra.mxu0 %v42
    %530 = vmatprep.subr.mxu0 0.0
    %531 = vmatpush1.msra.mxu0 %v43
    %532 = vmatprep.subr.mxu0 0.0
    %533 = vmatpush1.msra.mxu0 %v44
    %534 = vmatprep.subr.mxu0 0.0
    %535 = vmatpush1.msra.mxu0 %v45
    %536 = vmatprep.subr.mxu0 0.0
    %537 = vmatpush1.msra.mxu0 %v46
    %538 = vmatprep.subr.mxu0 0.0
    %539 = vmatpush1.msra.mxu0 %v47
    %540 = vmatprep.subr.mxu0 0.0
    %541 = vmatpush1.msra.mxu0 %v48
    %542 = vmatprep.subr.mxu0 0.0
    %543 = vmatpush1.msra.mxu0 %v49
    %544 = vmatprep.subr.mxu0 0.0
    %545 = vmatpush1.msra.mxu0 0.0
    %546 = vmatprep.subr.mxu0 0.0
    %547 = vmatpush1.msra.mxu0 0.0
    %548 = vmatprep.subr.mxu0 0.0
    %549 = vmatpush1.msra.mxu0 0.0
    %550 = vmatprep.subr.mxu0 0.0
    %551 = vmatpush1.msra.mxu0 0.0
    %552 = vmatprep.subr.mxu0 0.0
    %553 = vmatpush1.msra.mxu0 0.0
    %554 = vmatprep.subr.mxu0 0.0
    %555 = vmatpush1.msra.mxu0 0.0
    %556 = vmatprep.subr.mxu0 0.0
    %557 = vmatpush1.msra.mxu0 0.0
    %558 = vmatprep.subr.mxu0 0.0
    %559 = vmatpush1.msra.mxu0 0.0
    %560 = vmatprep.subr.mxu0 0.0
    %561 = vmatpush1.msra.mxu0 0.0
    %562 = vmatprep.subr.mxu0 0.0
    %563 = vmatpush1.msra.mxu0 0.0
    %564 = vmatprep.subr.mxu0 0.0
    %565 = vmatpush1.msra.mxu0 0.0
    %566 = vmatprep.subr.mxu0 0.0
    %567 = vmatpush1.msra.mxu0 0.0
    %568 = vmatprep.subr.mxu0 0.0
    %569 = vmatpush1.msra.mxu0 0.0
    %570 = vmatprep.subr.mxu0 0.0
    %571 = vmatpush1.msra.mxu0 0.0
    %572 = vmatprep.subr.mxu0 0.0
    %573 = vmatpush1.msra.mxu0 0.0
    %574 = vmatprep.subr.mxu0 0.0
    %575 = vmatpush1.msra.mxu0 0.0
    %576 = vmatprep.subr.mxu0 0.0
    %577 = vmatpush1.msra.mxu0 0.0
    %578 = vmatprep.subr.mxu0 0.0
    %579 = vmatpush1.msra.mxu0 0.0
    %580 = vmatprep.subr.mxu0 0.0
    %581 = vmatpush1.msra.mxu0 0.0
    %582 = vmatprep.subr.mxu0 0.0
    %583 = vmatpush1.msra.mxu0 0.0
    %584 = vmatprep.subr.mxu0 0.0
    %585 = vmatpush1.msra.mxu0 0.0
    %586 = vmatprep.subr.mxu0 0.0
    %587 = vmatpush1.msra.mxu0 0.0
    %588 = vmatprep.subr.mxu0 0.0
    %589 = vmatpush1.msra.mxu0 0.0
    %590 = vmatprep.subr.mxu0 0.0
    %591 = vmatpush1.msra.mxu0 0.0
    %592 = vmatprep.mubr.f32.mxu0 0.0
    %593 = vmatmul.mubr.f32.gmra.mrb[0].mxu0 %v526
    %v594 = vpop.f32.mrb[0].mxu0
    %v595 = vadd.f32 %v143, %v594
    %v596 = vpop.f32.mrb[0].mxu0
    %597 = vdwg.mxu0
    %v598 = vxor.u32 %v595, 2147483648
    %v599 = vmul.f32 %v598, 1.442695
    %v600 = vpow.pop %v599
    %v601 = vadd.f32 %v600, 1.0
    %v602 = vrcp.pop %v601
    %v603 = vmul.f32 1.0, %v602
    %v604 = vtanh.pop %v595
    %v605 = vmul.f32 %v603, %v439
    %607 = vrot.lane.b32.xlu0 %v604, 64
    %v608 = vpop.permute.xlu0 %607
    %v610 = vmul.f32 %v603, %v608
    %612 = vrot.lane.b32.xlu0 %v610, 32
    %v613 = vpop.permute.xlu0 %612
    %v615 = vadd.f32 %v605, %v613
    %v616 = vtanh.pop %v615
    %618 = vrot.lane.b32.xlu0 %v616, 64
    %v619 = vpop.permute.xlu0 %618
    %v621 = vmul.f32 %v603, %v619
    %vm622 = vcmp.gt.s32.totalorder %v34, 2
    %v623 = vsel %vm622, 1, 0
    %624 = vset.pattern.permute.xlu0 0
    %625 = vperm.xlu0 %624, %v623
    %v626 = vpop.permute.xlu0 %625
    %vm627 = vcmp.eq.s32.totalorder %v626, 1
    %v628 = vsel %vm627, %v621, %v438
    %v629 = vsel %vm627, %v615, %v439
    %v630 = vsel %vm627, %v621, 0.0
    %631 = vset.pattern.permute.xlu0 3
    %632 = vperm.xlu0 %631, %v33
    %v633 = vpop.permute.xlu0 %632
    %vm634 = vcmp.eq.s32.totalorder %v633, %v52
    %v635 = vsel %vm634, 1, 0
    %v636 = vcvt.s32.f32 %v635
    %v638 = vsel %vm59, %v636, 0
    %640 = vmatprep.subr.mxu0 0.0
    %641 = vmatpush1.msra.mxu0 %v35
    %642 = vmatprep.subr.mxu0 0.0
    %643 = vmatpush1.msra.mxu0 %v36
    %644 = vmatprep.subr.mxu0 0.0
    %645 = vmatpush1.msra.mxu0 %v37
    %646 = vmatprep.subr.mxu0 0.0
    %647 = vmatpush1.msra.mxu0 %v38
    %648 = vmatprep.subr.mxu0 0.0
    %649 = vmatpush1.msra.mxu0 %v39
    %650 = vmatprep.subr.mxu0 0.0
    %651 = vmatpush1.msra.mxu0 %v40
    %652 = vmatprep.subr.mxu0 0.0
    %653 = vmatpush1.msra.mxu0 %v65
    %654 = vmatprep.subr.mxu0 0.0
    %655 = vmatpush1.msra.mxu0 0.0
    %656 = vmatprep.subr.mxu0 0.0
    %657 = vmatpush1.msra.mxu0 0.0
    %658 = vmatprep.subr.mxu0 0.0
    %659 = vmatpush1.msra.mxu0 0.0
    %660 = vmatprep.subr.mxu0 0.0
    %661 = vmatpush1.msra.mxu0 0.0
    %662 = vmatprep.subr.mxu0 0.0
    %663 = vmatpush1.msra.mxu0 0.0
    %664 = vmatprep.subr.mxu0 0.0
    %665 = vmatpush1.msra.mxu0 0.0
    %666 = vmatprep.subr.mxu0 0.0
    %667 = vmatpush1.msra.mxu0 0.0
    %668 = vmatprep.subr.mxu0 0.0
    %669 = vmatpush1.msra.mxu0 0.0
    %670 = vmatprep.subr.mxu0 0.0
    %671 = vmatpush1.msra.mxu0 0.0
    %672 = vmatprep.subr.mxu0 0.0
    %673 = vmatpush1.msra.mxu0 0.0
    %674 = vmatprep.subr.mxu0 0.0
    %675 = vmatpush1.msra.mxu0 0.0
    %676 = vmatprep.subr.mxu0 0.0
    %677 = vmatpush1.msra.mxu0 0.0
    %678 = vmatprep.subr.mxu0 0.0
    %679 = vmatpush1.msra.mxu0 0.0
    %680 = vmatprep.subr.mxu0 0.0
    %681 = vmatpush1.msra.mxu0 0.0
    %682 = vmatprep.subr.mxu0 0.0
    %683 = vmatpush1.msra.mxu0 0.0
    %684 = vmatprep.subr.mxu0 0.0
    %685 = vmatpush1.msra.mxu0 0.0
    %686 = vmatprep.subr.mxu0 0.0
    %687 = vmatpush1.msra.mxu0 0.0
    %688 = vmatprep.subr.mxu0 0.0
    %689 = vmatpush1.msra.mxu0 0.0
    %690 = vmatprep.subr.mxu0 0.0
    %691 = vmatpush1.msra.mxu0 0.0
    %692 = vmatprep.subr.mxu0 0.0
    %693 = vmatpush1.msra.mxu0 0.0
    %694 = vmatprep.subr.mxu0 0.0
    %695 = vmatpush1.msra.mxu0 0.0
    %696 = vmatprep.subr.mxu0 0.0
    %697 = vmatpush1.msra.mxu0 0.0
    %698 = vmatprep.subr.mxu0 0.0
    %699 = vmatpush1.msra.mxu0 0.0
    %700 = vmatprep.subr.mxu0 0.0
    %701 = vmatpush1.msra.mxu0 0.0
    %702 = vmatprep.subr.mxu0 0.0
    %703 = vmatpush1.msra.mxu0 0.0
    %704 = vmatprep.mubr.f32.mxu0 0.0
    %705 = vmatmul.mubr.f32.gmra.mrb[0].mxu0 %v638
    %v706 = vpop.f32.mrb[0].mxu0
    %v707 = vadd.f32 0.0, %v706
    %v708 = vpop.f32.mrb[0].mxu0
    %709 = vdwg.mxu0
    %711 = vrot.lane.b32.xlu0 %v628, 64
    %v712 = vpop.permute.xlu0 %711
    %v714 = vsel %vm137, %v707, %v712
    %v716 = vsel %vm145, %v714, 0
    %718 = vmatprep.subr.mxu0 0.0
    %719 = vmatpush1.msra.mxu0 %v42
    %720 = vmatprep.subr.mxu0 0.0
    %721 = vmatpush1.msra.mxu0 %v43
    %722 = vmatprep.subr.mxu0 0.0
    %723 = vmatpush1.msra.mxu0 %v44
    %724 = vmatprep.subr.mxu0 0.0
    %725 = vmatpush1.msra.mxu0 %v45
    %726 = vmatprep.subr.mxu0 0.0
    %727 = vmatpush1.msra.mxu0 %v46
    %728 = vmatprep.subr.mxu0 0.0
    %729 = vmatpush1.msra.mxu0 %v47
    %730 = vmatprep.subr.mxu0 0.0
    %731 = vmatpush1.msra.mxu0 %v48
    %732 = vmatprep.subr.mxu0 0.0
    %733 = vmatpush1.msra.mxu0 %v49
    %734 = vmatprep.subr.mxu0 0.0
    %735 = vmatpush1.msra.mxu0 0.0
    %736 = vmatprep.subr.mxu0 0.0
    %737 = vmatpush1.msra.mxu0 0.0
    %738 = vmatprep.subr.mxu0 0.0
    %739 = vmatpush1.msra.mxu0 0.0
    %740 = vmatprep.subr.mxu0 0.0
    %741 = vmatpush1.msra.mxu0 0.0
    %742 = vmatprep.subr.mxu0 0.0
    %743 = vmatpush1.msra.mxu0 0.0
    %744 = vmatprep.subr.mxu0 0.0
    %745 = vmatpush1.msra.mxu0 0.0
    %746 = vmatprep.subr.mxu0 0.0
    %747 = vmatpush1.msra.mxu0 0.0
    %748 = vmatprep.subr.mxu0 0.0
    %749 = vmatpush1.msra.mxu0 0.0
    %750 = vmatprep.subr.mxu0 0.0
    %751 = vmatpush1.msra.mxu0 0.0
    %752 = vmatprep.subr.mxu0 0.0
    %753 = vmatpush1.msra.mxu0 0.0
    %754 = vmatprep.subr.mxu0 0.0
    %755 = vmatpush1.msra.mxu0 0.0
    %756 = vmatprep.subr.mxu0 0.0
    %757 = vmatpush1.msra.mxu0 0.0
    %758 = vmatprep.subr.mxu0 0.0
    %759 = vmatpush1.msra.mxu0 0.0
    %760 = vmatprep.subr.mxu0 0.0
    %761 = vmatpush1.msra.mxu0 0.0
    %762 = vmatprep.subr.mxu0 0.0
    %763 = vmatpush1.msra.mxu0 0.0
    %764 = vmatprep.subr.mxu0 0.0
    %765 = vmatpush1.msra.mxu0 0.0
    %766 = vmatprep.subr.mxu0 0.0
    %767 = vmatpush1.msra.mxu0 0.0
    %768 = vmatprep.subr.mxu0 0.0
    %769 = vmatpush1.msra.mxu0 0.0
    %770 = vmatprep.subr.mxu0 0.0
    %771 = vmatpush1.msra.mxu0 0.0
    %772 = vmatprep.subr.mxu0 0.0
    %773 = vmatpush1.msra.mxu0 0.0
    %774 = vmatprep.subr.mxu0 0.0
    %775 = vmatpush1.msra.mxu0 0.0
    %776 = vmatprep.subr.mxu0 0.0
    %777 = vmatpush1.msra.mxu0 0.0
    %778 = vmatprep.subr.mxu0 0.0
    %779 = vmatpush1.msra.mxu0 0.0
    %780 = vmatprep.subr.mxu0 0.0
    %781 = vmatpush1.msra.mxu0 0.0
    %782 = vmatprep.mubr.f32.mxu0 0.0
    %783 = vmatmul.mubr.f32.gmra.mrb[0].mxu0 %v716
    %v784 = vpop.f32.mrb[0].mxu0
    %v785 = vadd.f32 %v143, %v784
    %v786 = vpop.f32.mrb[0].mxu0
    %787 = vdwg.mxu0
    %v788 = vxor.u32 %v785, 2147483648
    %v789 = vmul.f32 %v788, 1.442695
    %v790 = vpow.pop %v789
    %v791 = vadd.f32 %v790, 1.0
    %v792 = vrcp.pop %v791
    %v793 = vmul.f32 1.0, %v792
    %v794 = vtanh.pop %v785
    %v795 = vmul.f32 %v793, %v629
    %797 = vrot.lane.b32.xlu0 %v794, 64
    %v798 = vpop.permute.xlu0 %797
    %v800 = vmul.f32 %v793, %v798
    %802 = vrot.lane.b32.xlu0 %v800, 32
    %v803 = vpop.permute.xlu0 %802
    %v805 = vadd.f32 %v795, %v803
    %v806 = vtanh.pop %v805
    %808 = vrot.lane.b32.xlu0 %v806, 64
    %v809 = vpop.permute.xlu0 %808
    %v811 = vmul.f32 %v793, %v809
    %vm812 = vcmp.gt.s32.totalorder %v34, 3
    %v813 = vsel %vm812, 1, 0
    %814 = vset.pattern.permute.xlu0 0
    %815 = vperm.xlu0 %814, %v813
    %v816 = vpop.permute.xlu0 %815
    %vm817 = vcmp.eq.s32.totalorder %v816, 1
    %v818 = vsel %vm817, %v811, %v628
    %v819 = vsel %vm817, %v805, %v629
    %v820 = vsel %vm817, %v811, 0.0
    %821 = vset.pattern.permute.xlu0 4
    %822 = vperm.xlu0 %821, %v33
    %v823 = vpop.permute.xlu0 %822
    %vm824 = vcmp.eq.s32.totalorder %v823, %v52
    %v825 = vsel %vm824, 1, 0
    %v826 = vcvt.s32.f32 %v825
    %v828 = vsel %vm59, %v826, 0
    %830 = vmatprep.subr.mxu0 0.0
    %831 = vmatpush1.msra.mxu0 %v35
    %832 = vmatprep.subr.mxu0 0.0
    %833 = vmatpush1.msra.mxu0 %v36
    %834 = vmatprep.subr.mxu0 0.0
    %835 = vmatpush1.msra.mxu0 %v37
    %836 = vmatprep.subr.mxu0 0.0
    %837 = vmatpush1.msra.mxu0 %v38
    %838 = vmatprep.subr.mxu0 0.0
    %839 = vmatpush1.msra.mxu0 %v39
    %840 = vmatprep.subr.mxu0 0.0
    %841 = vmatpush1.msra.mxu0 %v40
    %842 = vmatprep.subr.mxu0 0.0
    %843 = vmatpush1.msra.mxu0 %v65
    %844 = vmatprep.subr.mxu0 0.0
    %845 = vmatpush1.msra.mxu0 0.0
    %846 = vmatprep.subr.mxu0 0.0
    %847 = vmatpush1.msra.mxu0 0.0
    %848 = vmatprep.subr.mxu0 0.0
    %849 = vmatpush1.msra.mxu0 0.0
    %850 = vmatprep.subr.mxu0 0.0
    %851 = vmatpush1.msra.mxu0 0.0
    %852 = vmatprep.subr.mxu0 0.0
    %853 = vmatpush1.msra.mxu0 0.0
    %854 = vmatprep.subr.mxu0 0.0
    %855 = vmatpush1.msra.mxu0 0.0
    %856 = vmatprep.subr.mxu0 0.0
    %857 = vmatpush1.msra.mxu0 0.0
    %858 = vmatprep.subr.mxu0 0.0
    %859 = vmatpush1.msra.mxu0 0.0
    %860 = vmatprep.subr.mxu0 0.0
    %861 = vmatpush1.msra.mxu0 0.0
    %862 = vmatprep.subr.mxu0 0.0
    %863 = vmatpush1.msra.mxu0 0.0
    %864 = vmatprep.subr.mxu0 0.0
    %865 = vmatpush1.msra.mxu0 0.0
    %866 = vmatprep.subr.mxu0 0.0
    %867 = vmatpush1.msra.mxu0 0.0
    %868 = vmatprep.subr.mxu0 0.0
    %869 = vmatpush1.msra.mxu0 0.0
    %870 = vmatprep.subr.mxu0 0.0
    %871 = vmatpush1.msra.mxu0 0.0
    %872 = vmatprep.subr.mxu0 0.0
    %873 = vmatpush1.msra.mxu0 0.0
    %874 = vmatprep.subr.mxu0 0.0
    %875 = vmatpush1.msra.mxu0 0.0
    %876 = vmatprep.subr.mxu0 0.0
    %877 = vmatpush1.msra.mxu0 0.0
    %878 = vmatprep.subr.mxu0 0.0
    %879 = vmatpush1.msra.mxu0 0.0
    %880 = vmatprep.subr.mxu0 0.0
    %881 = vmatpush1.msra.mxu0 0.0
    %882 = vmatprep.subr.mxu0 0.0
    %883 = vmatpush1.msra.mxu0 0.0
    %884 = vmatprep.subr.mxu0 0.0
    %885 = vmatpush1.msra.mxu0 0.0
    %886 = vmatprep.subr.mxu0 0.0
    %887 = vmatpush1.msra.mxu0 0.0
    %888 = vmatprep.subr.mxu0 0.0
    %889 = vmatpush1.msra.mxu0 0.0
    %890 = vmatprep.subr.mxu0 0.0
    %891 = vmatpush1.msra.mxu0 0.0
    %892 = vmatprep.subr.mxu0 0.0
    %893 = vmatpush1.msra.mxu0 0.0
    %894 = vmatprep.mubr.f32.mxu0 0.0
    %895 = vmatmul.mubr.f32.gmra.mrb[0].mxu0 %v828
    %v896 = vpop.f32.mrb[0].mxu0
    %v897 = vadd.f32 0.0, %v896
    %v898 = vpop.f32.mrb[0].mxu0
    %899 = vdwg.mxu0
    %901 = vrot.lane.b32.xlu0 %v818, 64
    %v902 = vpop.permute.xlu0 %901
    %v904 = vsel %vm137, %v897, %v902
    %v906 = vsel %vm145, %v904, 0
    %908 = vmatprep.subr.mxu0 0.0
    %909 = vmatpush1.msra.mxu0 %v42
    %910 = vmatprep.subr.mxu0 0.0
    %911 = vmatpush1.msra.mxu0 %v43
    %912 = vmatprep.subr.mxu0 0.0
    %913 = vmatpush1.msra.mxu0 %v44
    %914 = vmatprep.subr.mxu0 0.0
    %915 = vmatpush1.msra.mxu0 %v45
    %916 = vmatprep.subr.mxu0 0.0
    %917 = vmatpush1.msra.mxu0 %v46
    %918 = vmatprep.subr.mxu0 0.0
    %919 = vmatpush1.msra.mxu0 %v47
    %920 = vmatprep.subr.mxu0 0.0
    %921 = vmatpush1.msra.mxu0 %v48
    %922 = vmatprep.subr.mxu0 0.0
    %923 = vmatpush1.msra.mxu0 %v49
    %924 = vmatprep.subr.mxu0 0.0
    %925 = vmatpush1.msra.mxu0 0.0
    %926 = vmatprep.subr.mxu0 0.0
    %927 = vmatpush1.msra.mxu0 0.0
    %928 = vmatprep.subr.mxu0 0.0
    %929 = vmatpush1.msra.mxu0 0.0
    %930 = vmatprep.subr.mxu0 0.0
    %931 = vmatpush1.msra.mxu0 0.0
    %932 = vmatprep.subr.mxu0 0.0
    %933 = vmatpush1.msra.mxu0 0.0
    %934 = vmatprep.subr.mxu0 0.0
    %935 = vmatpush1.msra.mxu0 0.0
    %936 = vmatprep.subr.mxu0 0.0
    %937 = vmatpush1.msra.mxu0 0.0
    %938 = vmatprep.subr.mxu0 0.0
    %939 = vmatpush1.msra.mxu0 0.0
    %940 = vmatprep.subr.mxu0 0.0
    %941 = vmatpush1.msra.mxu0 0.0
    %942 = vmatprep.subr.mxu0 0.0
    %943 = vmatpush1.msra.mxu0 0.0
    %944 = vmatprep.subr.mxu0 0.0
    %945 = vmatpush1.msra.mxu0 0.0
    %946 = vmatprep.subr.mxu0 0.0
    %947 = vmatpush1.msra.mxu0 0.0
    %948 = vmatprep.subr.mxu0 0.0
    %949 = vmatpush1.msra.mxu0 0.0
    %950 = vmatprep.subr.mxu0 0.0
    %951 = vmatpush1.msra.mxu0 0.0
    %952 = vmatprep.subr.mxu0 0.0
    %953 = vmatpush1.msra.mxu0 0.0
    %954 = vmatprep.subr.mxu0 0.0
    %955 = vmatpush1.msra.mxu0 0.0
    %956 = vmatprep.subr.mxu0 0.0
    %957 = vmatpush1.msra.mxu0 0.0
    %958 = vmatprep.subr.mxu0 0.0
    %959 = vmatpush1.msra.mxu0 0.0
    %960 = vmatprep.subr.mxu0 0.0
    %961 = vmatpush1.msra.mxu0 0.0
    %962 = vmatprep.subr.mxu0 0.0
    %963 = vmatpush1.msra.mxu0 0.0
    %964 = vmatprep.subr.mxu0 0.0
    %965 = vmatpush1.msra.mxu0 0.0
    %966 = vmatprep.subr.mxu0 0.0
    %967 = vmatpush1.msra.mxu0 0.0
    %968 = vmatprep.subr.mxu0 0.0
    %969 = vmatpush1.msra.mxu0 0.0
    %970 = vmatprep.subr.mxu0 0.0
    %971 = vmatpush1.msra.mxu0 0.0
    %972 = vmatprep.mubr.f32.mxu0 0.0
    %973 = vmatmul.mubr.f32.gmra.mrb[0].mxu0 %v906
    %v974 = vpop.f32.mrb[0].mxu0
    %v975 = vadd.f32 %v143, %v974
    %v976 = vpop.f32.mrb[0].mxu0
    %977 = vdwg.mxu0
    %v978 = vxor.u32 %v975, 2147483648
    %v979 = vmul.f32 %v978, 1.442695
    %v980 = vpow.pop %v979
    %v981 = vadd.f32 %v980, 1.0
    %v982 = vrcp.pop %v981
    %v983 = vmul.f32 1.0, %v982
    %v984 = vtanh.pop %v975
    %v985 = vmul.f32 %v983, %v819
    %987 = vrot.lane.b32.xlu0 %v984, 64
    %v988 = vpop.permute.xlu0 %987
    %v990 = vmul.f32 %v983, %v988
    %992 = vrot.lane.b32.xlu0 %v990, 32
    %v993 = vpop.permute.xlu0 %992
    %v995 = vadd.f32 %v985, %v993
    %v996 = vtanh.pop %v995
    %998 = vrot.lane.b32.xlu0 %v996, 64
    %v999 = vpop.permute.xlu0 %998
    %v1001 = vmul.f32 %v983, %v999
    %vm1002 = vcmp.gt.s32.totalorder %v34, 4
    %v1003 = vsel %vm1002, 1, 0
    %1004 = vset.pattern.permute.xlu0 0
    %1005 = vperm.xlu0 %1004, %v1003
    %v1006 = vpop.permute.xlu0 %1005
    %vm1007 = vcmp.eq.s32.totalorder %v1006, 1
    %v1008 = vsel %vm1007, %v1001, %v818
    %v1009 = vsel %vm1007, %v995, %v819
    %v1010 = vsel %vm1007, %v1001, 0.0
    %1011 = vset.pattern.permute.xlu0 5
    %1012 = vperm.xlu0 %1011, %v33
    %v1013 = vpop.permute.xlu0 %1012
    %vm1014 = vcmp.eq.s32.totalorder %v1013, %v52
    %v1015 = vsel %vm1014, 1, 0
    %v1016 = vcvt.s32.f32 %v1015
    %v1018 = vsel %vm59, %v1016, 0
    %1020 = vmatprep.subr.mxu0 0.0
    %1021 = vmatpush1.msra.mxu0 %v35
    %1022 = vmatprep.subr.mxu0 0.0
    %1023 = vmatpush1.msra.mxu0 %v36
    %1024 = vmatprep.subr.mxu0 0.0
    %1025 = vmatpush1.msra.mxu0 %v37
    %1026 = vmatprep.subr.mxu0 0.0
    %1027 = vmatpush1.msra.mxu0 %v38
    %1028 = vmatprep.subr.mxu0 0.0
    %1029 = vmatpush1.msra.mxu0 %v39
    %1030 = vmatprep.subr.mxu0 0.0
    %1031 = vmatpush1.msra.mxu0 %v40
    %1032 = vmatprep.subr.mxu0 0.0
    %1033 = vmatpush1.msra.mxu0 %v65
    %1034 = vmatprep.subr.mxu0 0.0
    %1035 = vmatpush1.msra.mxu0 0.0
    %1036 = vmatprep.subr.mxu0 0.0
    %1037 = vmatpush1.msra.mxu0 0.0
    %1038 = vmatprep.subr.mxu0 0.0
    %1039 = vmatpush1.msra.mxu0 0.0
    %1040 = vmatprep.subr.mxu0 0.0
    %1041 = vmatpush1.msra.mxu0 0.0
    %1042 = vmatprep.subr.mxu0 0.0
    %1043 = vmatpush1.msra.mxu0 0.0
    %1044 = vmatprep.subr.mxu0 0.0
    %1045 = vmatpush1.msra.mxu0 0.0
    %1046 = vmatprep.subr.mxu0 0.0
    %1047 = vmatpush1.msra.mxu0 0.0
    %1048 = vmatprep.subr.mxu0 0.0
    %1049 = vmatpush1.msra.mxu0 0.0
    %1050 = vmatprep.subr.mxu0 0.0
    %1051 = vmatpush1.msra.mxu0 0.0
    %1052 = vmatprep.subr.mxu0 0.0
    %1053 = vmatpush1.msra.mxu0 0.0
    %1054 = vmatprep.subr.mxu0 0.0
    %1055 = vmatpush1.msra.mxu0 0.0
    %1056 = vmatprep.subr.mxu0 0.0
    %1057 = vmatpush1.msra.mxu0 0.0
    %1058 = vmatprep.subr.mxu0 0.0
    %1059 = vmatpush1.msra.mxu0 0.0
    %1060 = vmatprep.subr.mxu0 0.0
    %1061 = vmatpush1.msra.mxu0 0.0
    %1062 = vmatprep.subr.mxu0 0.0
    %1063 = vmatpush1.msra.mxu0 0.0
    %1064 = vmatprep.subr.mxu0 0.0
    %1065 = vmatpush1.msra.mxu0 0.0
    %1066 = vmatprep.subr.mxu0 0.0
    %1067 = vmatpush1.msra.mxu0 0.0
    %1068 = vmatprep.subr.mxu0 0.0
    %1069 = vmatpush1.msra.mxu0 0.0
    %1070 = vmatprep.subr.mxu0 0.0
    %1071 = vmatpush1.msra.mxu0 0.0
    %1072 = vmatprep.subr.mxu0 0.0
    %1073 = vmatpush1.msra.mxu0 0.0
    %1074 = vmatprep.subr.mxu0 0.0
    %1075 = vmatpush1.msra.mxu0 0.0
    %1076 = vmatprep.subr.mxu0 0.0
    %1077 = vmatpush1.msra.mxu0 0.0
    %1078 = vmatprep.subr.mxu0 0.0
    %1079 = vmatpush1.msra.mxu0 0.0
    %1080 = vmatprep.subr.mxu0 0.0
    %1081 = vmatpush1.msra.mxu0 0.0
    %1082 = vmatprep.subr.mxu0 0.0
    %1083 = vmatpush1.msra.mxu0 0.0
    %1084 = vmatprep.mubr.f32.mxu0 0.0
    %1085 = vmatmul.mubr.f32.gmra.mrb[0].mxu0 %v1018
    %v1086 = vpop.f32.mrb[0].mxu0
    %v1087 = vadd.f32 0.0, %v1086
    %v1088 = vpop.f32.mrb[0].mxu0
    %1089 = vdwg.mxu0
    %1091 = vrot.lane.b32.xlu0 %v1008, 64
    %v1092 = vpop.permute.xlu0 %1091
    %v1094 = vsel %vm137, %v1087, %v1092
    %v1096 = vsel %vm145, %v1094, 0
    %1098 = vmatprep.subr.mxu0 0.0
    %1099 = vmatpush1.msra.mxu0 %v42
    %1100 = vmatprep.subr.mxu0 0.0
    %1101 = vmatpush1.msra.mxu0 %v43
    %1102 = vmatprep.subr.mxu0 0.0
    %1103 = vmatpush1.msra.mxu0 %v44
    %1104 = vmatprep.subr.mxu0 0.0
    %1105 = vmatpush1.msra.mxu0 %v45
    %1106 = vmatprep.subr.mxu0 0.0
    %1107 = vmatpush1.msra.mxu0 %v46
    %1108 = vmatprep.subr.mxu0 0.0
    %1109 = vmatpush1.msra.mxu0 %v47
    %1110 = vmatprep.subr.mxu0 0.0
    %1111 = vmatpush1.msra.mxu0 %v48
    %1112 = vmatprep.subr.mxu0 0.0
    %1113 = vmatpush1.msra.mxu0 %v49
    %1114 = vmatprep.subr.mxu0 0.0
    %1115 = vmatpush1.msra.mxu0 0.0
    %1116 = vmatprep.subr.mxu0 0.0
    %1117 = vmatpush1.msra.mxu0 0.0
    %1118 = vmatprep.subr.mxu0 0.0
    %1119 = vmatpush1.msra.mxu0 0.0
    %1120 = vmatprep.subr.mxu0 0.0
    %1121 = vmatpush1.msra.mxu0 0.0
    %1122 = vmatprep.subr.mxu0 0.0
    %1123 = vmatpush1.msra.mxu0 0.0
    %1124 = vmatprep.subr.mxu0 0.0
    %1125 = vmatpush1.msra.mxu0 0.0
    %1126 = vmatprep.subr.mxu0 0.0
    %1127 = vmatpush1.msra.mxu0 0.0
    %1128 = vmatprep.subr.mxu0 0.0
    %1129 = vmatpush1.msra.mxu0 0.0
    %1130 = vmatprep.subr.mxu0 0.0
    %1131 = vmatpush1.msra.mxu0 0.0
    %1132 = vmatprep.subr.mxu0 0.0
    %1133 = vmatpush1.msra.mxu0 0.0
    %1134 = vmatprep.subr.mxu0 0.0
    %1135 = vmatpush1.msra.mxu0 0.0
    %1136 = vmatprep.subr.mxu0 0.0
    %1137 = vmatpush1.msra.mxu0 0.0
    %1138 = vmatprep.subr.mxu0 0.0
    %1139 = vmatpush1.msra.mxu0 0.0
    %1140 = vmatprep.subr.mxu0 0.0
    %1141 = vmatpush1.msra.mxu0 0.0
    %1142 = vmatprep.subr.mxu0 0.0
    %1143 = vmatpush1.msra.mxu0 0.0
    %1144 = vmatprep.subr.mxu0 0.0
    %1145 = vmatpush1.msra.mxu0 0.0
    %1146 = vmatprep.subr.mxu0 0.0
    %1147 = vmatpush1.msra.mxu0 0.0
    %1148 = vmatprep.subr.mxu0 0.0
    %1149 = vmatpush1.msra.mxu0 0.0
    %1150 = vmatprep.subr.mxu0 0.0
    %1151 = vmatpush1.msra.mxu0 0.0
    %1152 = vmatprep.subr.mxu0 0.0
    %1153 = vmatpush1.msra.mxu0 0.0
    %1154 = vmatprep.subr.mxu0 0.0
    %1155 = vmatpush1.msra.mxu0 0.0
    %1156 = vmatprep.subr.mxu0 0.0
    %1157 = vmatpush1.msra.mxu0 0.0
    %1158 = vmatprep.subr.mxu0 0.0
    %1159 = vmatpush1.msra.mxu0 0.0
    %1160 = vmatprep.subr.mxu0 0.0
    %1161 = vmatpush1.msra.mxu0 0.0
    %1162 = vmatprep.mubr.f32.mxu0 0.0
    %1163 = vmatmul.mubr.f32.gmra.mrb[0].mxu0 %v1096
    %v1164 = vpop.f32.mrb[0].mxu0
    %v1165 = vadd.f32 %v143, %v1164
    %v1166 = vpop.f32.mrb[0].mxu0
    %1167 = vdwg.mxu0
    %v1168 = vxor.u32 %v1165, 2147483648
    %v1169 = vmul.f32 %v1168, 1.442695
    %v1170 = vpow.pop %v1169
    %v1171 = vadd.f32 %v1170, 1.0
    %v1172 = vrcp.pop %v1171
    %v1173 = vmul.f32 1.0, %v1172
    %v1174 = vtanh.pop %v1165
    %v1175 = vmul.f32 %v1173, %v1009
    %1177 = vrot.lane.b32.xlu0 %v1174, 64
    %v1178 = vpop.permute.xlu0 %1177
    %v1180 = vmul.f32 %v1173, %v1178
    %1182 = vrot.lane.b32.xlu0 %v1180, 32
    %v1183 = vpop.permute.xlu0 %1182
    %v1185 = vadd.f32 %v1175, %v1183
    %v1186 = vtanh.pop %v1185
    %1188 = vrot.lane.b32.xlu0 %v1186, 64
    %v1189 = vpop.permute.xlu0 %1188
    %v1191 = vmul.f32 %v1173, %v1189
    %vm1192 = vcmp.gt.s32.totalorder %v34, 5
    %v1193 = vsel %vm1192, 1, 0
    %1194 = vset.pattern.permute.xlu0 0
    %1195 = vperm.xlu0 %1194, %v1193
    %v1196 = vpop.permute.xlu0 %1195
    %vm1197 = vcmp.eq.s32.totalorder %v1196, 1
    %v1198 = vsel %vm1197, %v1191, %v1008
    %v1199 = vsel %vm1197, %v1185, %v1009
    %v1200 = vsel %vm1197, %v1191, 0.0
    %1201 = vset.pattern.permute.xlu0 6
    %1202 = vperm.xlu0 %1201, %v33
    %v1203 = vpop.permute.xlu0 %1202
    %vm1204 = vcmp.eq.s32.totalorder %v1203, %v52
    %v1205 = vsel %vm1204, 1, 0
    %v1206 = vcvt.s32.f32 %v1205
    %v1208 = vsel %vm59, %v1206, 0
    %1210 = vmatprep.subr.mxu0 0.0
    %1211 = vmatpush1.msra.mxu0 %v35
    %1212 = vmatprep.subr.mxu0 0.0
    %1213 = vmatpush1.msra.mxu0 %v36
    %1214 = vmatprep.subr.mxu0 0.0
    %1215 = vmatpush1.msra.mxu0 %v37
    %1216 = vmatprep.subr.mxu0 0.0
    %1217 = vmatpush1.msra.mxu0 %v38
    %1218 = vmatprep.subr.mxu0 0.0
    %1219 = vmatpush1.msra.mxu0 %v39
    %1220 = vmatprep.subr.mxu0 0.0
    %1221 = vmatpush1.msra.mxu0 %v40
    %1222 = vmatprep.subr.mxu0 0.0
    %1223 = vmatpush1.msra.mxu0 %v65
    %1224 = vmatprep.subr.mxu0 0.0
    %1225 = vmatpush1.msra.mxu0 0.0
    %1226 = vmatprep.subr.mxu0 0.0
    %1227 = vmatpush1.msra.mxu0 0.0
    %1228 = vmatprep.subr.mxu0 0.0
    %1229 = vmatpush1.msra.mxu0 0.0
    %1230 = vmatprep.subr.mxu0 0.0
    %1231 = vmatpush1.msra.mxu0 0.0
    %1232 = vmatprep.subr.mxu0 0.0
    %1233 = vmatpush1.msra.mxu0 0.0
    %1234 = vmatprep.subr.mxu0 0.0
    %1235 = vmatpush1.msra.mxu0 0.0
    %1236 = vmatprep.subr.mxu0 0.0
    %1237 = vmatpush1.msra.mxu0 0.0
    %1238 = vmatprep.subr.mxu0 0.0
    %1239 = vmatpush1.msra.mxu0 0.0
    %1240 = vmatprep.subr.mxu0 0.0
    %1241 = vmatpush1.msra.mxu0 0.0
    %1242 = vmatprep.subr.mxu0 0.0
    %1243 = vmatpush1.msra.mxu0 0.0
    %1244 = vmatprep.subr.mxu0 0.0
    %1245 = vmatpush1.msra.mxu0 0.0
    %1246 = vmatprep.subr.mxu0 0.0
    %1247 = vmatpush1.msra.mxu0 0.0
    %1248 = vmatprep.subr.mxu0 0.0
    %1249 = vmatpush1.msra.mxu0 0.0
    %1250 = vmatprep.subr.mxu0 0.0
    %1251 = vmatpush1.msra.mxu0 0.0
    %1252 = vmatprep.subr.mxu0 0.0
    %1253 = vmatpush1.msra.mxu0 0.0
    %1254 = vmatprep.subr.mxu0 0.0
    %1255 = vmatpush1.msra.mxu0 0.0
    %1256 = vmatprep.subr.mxu0 0.0
    %1257 = vmatpush1.msra.mxu0 0.0
    %1258 = vmatprep.subr.mxu0 0.0
    %1259 = vmatpush1.msra.mxu0 0.0
    %1260 = vmatprep.subr.mxu0 0.0
    %1261 = vmatpush1.msra.mxu0 0.0
    %1262 = vmatprep.subr.mxu0 0.0
    %1263 = vmatpush1.msra.mxu0 0.0
    %1264 = vmatprep.subr.mxu0 0.0
    %1265 = vmatpush1.msra.mxu0 0.0
    %1266 = vmatprep.subr.mxu0 0.0
    %1267 = vmatpush1.msra.mxu0 0.0
    %1268 = vmatprep.subr.mxu0 0.0
    %1269 = vmatpush1.msra.mxu0 0.0
    %1270 = vmatprep.subr.mxu0 0.0
    %1271 = vmatpush1.msra.mxu0 0.0
    %1272 = vmatprep.subr.mxu0 0.0
    %1273 = vmatpush1.msra.mxu0 0.0
    %1274 = vmatprep.mubr.f32.mxu0 0.0
    %1275 = vmatmul.mubr.f32.gmra.mrb[0].mxu0 %v1208
    %v1276 = vpop.f32.mrb[0].mxu0
    %v1277 = vadd.f32 0.0, %v1276
    %v1278 = vpop.f32.mrb[0].mxu0
    %1279 = vdwg.mxu0
    %1281 = vrot.lane.b32.xlu0 %v1198, 64
    %v1282 = vpop.permute.xlu0 %1281
    %v1284 = vsel %vm137, %v1277, %v1282
    %v1286 = vsel %vm145, %v1284, 0
    %1288 = vmatprep.subr.mxu0 0.0
    %1289 = vmatpush1.msra.mxu0 %v42
    %1290 = vmatprep.subr.mxu0 0.0
    %1291 = vmatpush1.msra.mxu0 %v43
    %1292 = vmatprep.subr.mxu0 0.0
    %1293 = vmatpush1.msra.mxu0 %v44
    %1294 = vmatprep.subr.mxu0 0.0
    %1295 = vmatpush1.msra.mxu0 %v45
    %1296 = vmatprep.subr.mxu0 0.0
    %1297 = vmatpush1.msra.mxu0 %v46
    %1298 = vmatprep.subr.mxu0 0.0
    %1299 = vmatpush1.msra.mxu0 %v47
    %1300 = vmatprep.subr.mxu0 0.0
    %1301 = vmatpush1.msra.mxu0 %v48
    %1302 = vmatprep.subr.mxu0 0.0
    %1303 = vmatpush1.msra.mxu0 %v49
    %1304 = vmatprep.subr.mxu0 0.0
    %1305 = vmatpush1.msra.mxu0 0.0
    %1306 = vmatprep.subr.mxu0 0.0
    %1307 = vmatpush1.msra.mxu0 0.0
    %1308 = vmatprep.subr.mxu0 0.0
    %1309 = vmatpush1.msra.mxu0 0.0
    %1310 = vmatprep.subr.mxu0 0.0
    %1311 = vmatpush1.msra.mxu0 0.0
    %1312 = vmatprep.subr.mxu0 0.0
    %1313 = vmatpush1.msra.mxu0 0.0
    %1314 = vmatprep.subr.mxu0 0.0
    %1315 = vmatpush1.msra.mxu0 0.0
    %1316 = vmatprep.subr.mxu0 0.0
    %1317 = vmatpush1.msra.mxu0 0.0
    %1318 = vmatprep.subr.mxu0 0.0
    %1319 = vmatpush1.msra.mxu0 0.0
    %1320 = vmatprep.subr.mxu0 0.0
    %1321 = vmatpush1.msra.mxu0 0.0
    %1322 = vmatprep.subr.mxu0 0.0
    %1323 = vmatpush1.msra.mxu0 0.0
    %1324 = vmatprep.subr.mxu0 0.0
    %1325 = vmatpush1.msra.mxu0 0.0
    %1326 = vmatprep.subr.mxu0 0.0
    %1327 = vmatpush1.msra.mxu0 0.0
    %1328 = vmatprep.subr.mxu0 0.0
    %1329 = vmatpush1.msra.mxu0 0.0
    %1330 = vmatprep.subr.mxu0 0.0
    %1331 = vmatpush1.msra.mxu0 0.0
    %1332 = vmatprep.subr.mxu0 0.0
    %1333 = vmatpush1.msra.mxu0 0.0
    %1334 = vmatprep.subr.mxu0 0.0
    %1335 = vmatpush1.msra.mxu0 0.0
    %1336 = vmatprep.subr.mxu0 0.0
    %1337 = vmatpush1.msra.mxu0 0.0
    %1338 = vmatprep.subr.mxu0 0.0
    %1339 = vmatpush1.msra.mxu0 0.0
    %1340 = vmatprep.subr.mxu0 0.0
    %1341 = vmatpush1.msra.mxu0 0.0
    %1342 = vmatprep.subr.mxu0 0.0
    %1343 = vmatpush1.msra.mxu0 0.0
    %1344 = vmatprep.subr.mxu0 0.0
    %1345 = vmatpush1.msra.mxu0 0.0
    %1346 = vmatprep.subr.mxu0 0.0
    %1347 = vmatpush1.msra.mxu0 0.0
    %1348 = vmatprep.subr.mxu0 0.0
    %1349 = vmatpush1.msra.mxu0 0.0
    %1350 = vmatprep.subr.mxu0 0.0
    %1351 = vmatpush1.msra.mxu0 0.0
    %1352 = vmatprep.mubr.f32.mxu0 0.0
    %1353 = vmatmul.mubr.f32.gmra.mrb[0].mxu0 %v1286
    %v1354 = vpop.f32.mrb[0].mxu0
    %v1355 = vadd.f32 %v143, %v1354
    %v1356 = vpop.f32.mrb[0].mxu0
    %1357 = vdwg.mxu0
    %v1358 = vxor.u32 %v1355, 2147483648
    %v1359 = vmul.f32 %v1358, 1.442695
    %v1360 = vpow.pop %v1359
    %v1361 = vadd.f32 %v1360, 1.0
    %v1362 = vrcp.pop %v1361
    %v1363 = vmul.f32 1.0, %v1362
    %v1364 = vtanh.pop %v1355
    %v1365 = vmul.f32 %v1363, %v1199
    %1367 = vrot.lane.b32.xlu0 %v1364, 64
    %v1368 = vpop.permute.xlu0 %1367
    %v1370 = vmul.f32 %v1363, %v1368
    %1372 = vrot.lane.b32.xlu0 %v1370, 32
    %v1373 = vpop.permute.xlu0 %1372
    %v1375 = vadd.f32 %v1365, %v1373
    %v1376 = vtanh.pop %v1375
    %1378 = vrot.lane.b32.xlu0 %v1376, 64
    %v1379 = vpop.permute.xlu0 %1378
    %v1381 = vmul.f32 %v1363, %v1379
    %vm1382 = vcmp.gt.s32.totalorder %v34, 6
    %v1383 = vsel %vm1382, 1, 0
    %1384 = vset.pattern.permute.xlu0 0
    %1385 = vperm.xlu0 %1384, %v1383
    %v1386 = vpop.permute.xlu0 %1385
    %vm1387 = vcmp.eq.s32.totalorder %v1386, 1
    %v1388 = vsel %vm1387, %v1381, %v1198
    %v1389 = vsel %vm1387, %v1375, %v1199
    %v1390 = vsel %vm1387, %v1381, 0.0
    %1391 = vset.pattern.permute.xlu0 7
    %1392 = vperm.xlu0 %1391, %v33
    %v1393 = vpop.permute.xlu0 %1392
    %vm1394 = vcmp.eq.s32.totalorder %v1393, %v52
    %v1395 = vsel %vm1394, 1, 0
    %v1396 = vcvt.s32.f32 %v1395
    %v1398 = vsel %vm59, %v1396, 0
    %1400 = vmatprep.subr.mxu0 0.0
    %1401 = vmatpush1.msra.mxu0 %v35
    %1402 = vmatprep.subr.mxu0 0.0
    %1403 = vmatpush1.msra.mxu0 %v36
    %1404 = vmatprep.subr.mxu0 0.0
    %1405 = vmatpush1.msra.mxu0 %v37
    %1406 = vmatprep.subr.mxu0 0.0
    %1407 = vmatpush1.msra.mxu0 %v38
    %1408 = vmatprep.subr.mxu0 0.0
    %1409 = vmatpush1.msra.mxu0 %v39
    %1410 = vmatprep.subr.mxu0 0.0
    %1411 = vmatpush1.msra.mxu0 %v40
    %1412 = vmatprep.subr.mxu0 0.0
    %1413 = vmatpush1.msra.mxu0 %v65
    %1414 = vmatprep.subr.mxu0 0.0
    %1415 = vmatpush1.msra.mxu0 0.0
    %1416 = vmatprep.subr.mxu0 0.0
    %1417 = vmatpush1.msra.mxu0 0.0
    %1418 = vmatprep.subr.mxu0 0.0
    %1419 = vmatpush1.msra.mxu0 0.0
    %1420 = vmatprep.subr.mxu0 0.0
    %1421 = vmatpush1.msra.mxu0 0.0
    %1422 = vmatprep.subr.mxu0 0.0
    %1423 = vmatpush1.msra.mxu0 0.0
    %1424 = vmatprep.subr.mxu0 0.0
    %1425 = vmatpush1.msra.mxu0 0.0
    %1426 = vmatprep.subr.mxu0 0.0
    %1427 = vmatpush1.msra.mxu0 0.0
    %1428 = vmatprep.subr.mxu0 0.0
    %1429 = vmatpush1.msra.mxu0 0.0
    %1430 = vmatprep.subr.mxu0 0.0
    %1431 = vmatpush1.msra.mxu0 0.0
    %1432 = vmatprep.subr.mxu0 0.0
    %1433 = vmatpush1.msra.mxu0 0.0
    %1434 = vmatprep.subr.mxu0 0.0
    %1435 = vmatpush1.msra.mxu0 0.0
    %1436 = vmatprep.subr.mxu0 0.0
    %1437 = vmatpush1.msra.mxu0 0.0
    %1438 = vmatprep.subr.mxu0 0.0
    %1439 = vmatpush1.msra.mxu0 0.0
    %1440 = vmatprep.subr.mxu0 0.0
    %1441 = vmatpush1.msra.mxu0 0.0
    %1442 = vmatprep.subr.mxu0 0.0
    %1443 = vmatpush1.msra.mxu0 0.0
    %1444 = vmatprep.subr.mxu0 0.0
    %1445 = vmatpush1.msra.mxu0 0.0
    %1446 = vmatprep.subr.mxu0 0.0
    %1447 = vmatpush1.msra.mxu0 0.0
    %1448 = vmatprep.subr.mxu0 0.0
    %1449 = vmatpush1.msra.mxu0 0.0
    %1450 = vmatprep.subr.mxu0 0.0
    %1451 = vmatpush1.msra.mxu0 0.0
    %1452 = vmatprep.subr.mxu0 0.0
    %1453 = vmatpush1.msra.mxu0 0.0
    %1454 = vmatprep.subr.mxu0 0.0
    %1455 = vmatpush1.msra.mxu0 0.0
    %1456 = vmatprep.subr.mxu0 0.0
    %1457 = vmatpush1.msra.mxu0 0.0
    %1458 = vmatprep.subr.mxu0 0.0
    %1459 = vmatpush1.msra.mxu0 0.0
    %1460 = vmatprep.subr.mxu0 0.0
    %1461 = vmatpush1.msra.mxu0 0.0
    %1462 = vmatprep.subr.mxu0 0.0
    %1463 = vmatpush1.msra.mxu0 0.0
    %1464 = vmatprep.mubr.f32.mxu0 0.0
    %1465 = vmatmul.mubr.f32.gmra.mrb[0].mxu0 %v1398
    %v1466 = vpop.f32.mrb[0].mxu0
    %v1467 = vadd.f32 0.0, %v1466
    %v1468 = vpop.f32.mrb[0].mxu0
    %1469 = vdwg.mxu0
    %1471 = vrot.lane.b32.xlu0 %v1388, 64
    %v1472 = vpop.permute.xlu0 %1471
    %v1474 = vsel %vm137, %v1467, %v1472
    %v1476 = vsel %vm145, %v1474, 0
    %1478 = vmatprep.subr.mxu0 0.0
    %1479 = vmatpush1.msra.mxu0 %v42
    %1480 = vmatprep.subr.mxu0 0.0
    %1481 = vmatpush1.msra.mxu0 %v43
    %1482 = vmatprep.subr.mxu0 0.0
    %1483 = vmatpush1.msra.mxu0 %v44
    %1484 = vmatprep.subr.mxu0 0.0
    %1485 = vmatpush1.msra.mxu0 %v45
    %1486 = vmatprep.subr.mxu0 0.0
    %1487 = vmatpush1.msra.mxu0 %v46
    %1488 = vmatprep.subr.mxu0 0.0
    %1489 = vmatpush1.msra.mxu0 %v47
    %1490 = vmatprep.subr.mxu0 0.0
    %1491 = vmatpush1.msra.mxu0 %v48
    %1492 = vmatprep.subr.mxu0 0.0
    %1493 = vmatpush1.msra.mxu0 %v49
    %1494 = vmatprep.subr.mxu0 0.0
    %1495 = vmatpush1.msra.mxu0 0.0
    %1496 = vmatprep.subr.mxu0 0.0
    %1497 = vmatpush1.msra.mxu0 0.0
    %1498 = vmatprep.subr.mxu0 0.0
    %1499 = vmatpush1.msra.mxu0 0.0
    %1500 = vmatprep.subr.mxu0 0.0
    %1501 = vmatpush1.msra.mxu0 0.0
    %1502 = vmatprep.subr.mxu0 0.0
    %1503 = vmatpush1.msra.mxu0 0.0
    %1504 = vmatprep.subr.mxu0 0.0
    %1505 = vmatpush1.msra.mxu0 0.0
    %1506 = vmatprep.subr.mxu0 0.0
    %1507 = vmatpush1.msra.mxu0 0.0
    %1508 = vmatprep.subr.mxu0 0.0
    %1509 = vmatpush1.msra.mxu0 0.0
    %1510 = vmatprep.subr.mxu0 0.0
    %1511 = vmatpush1.msra.mxu0 0.0
    %1512 = vmatprep.subr.mxu0 0.0
    %1513 = vmatpush1.msra.mxu0 0.0
    %1514 = vmatprep.subr.mxu0 0.0
    %1515 = vmatpush1.msra.mxu0 0.0
    %1516 = vmatprep.subr.mxu0 0.0
    %1517 = vmatpush1.msra.mxu0 0.0
    %1518 = vmatprep.subr.mxu0 0.0
    %1519 = vmatpush1.msra.mxu0 0.0
    %1520 = vmatprep.subr.mxu0 0.0
    %1521 = vmatpush1.msra.mxu0 0.0
    %1522 = vmatprep.subr.mxu0 0.0
    %1523 = vmatpush1.msra.mxu0 0.0
    %1524 = vmatprep.subr.mxu0 0.0
    %1525 = vmatpush1.msra.mxu0 0.0
    %1526 = vmatprep.subr.mxu0 0.0
    %1527 = vmatpush1.msra.mxu0 0.0
    %1528 = vmatprep.subr.mxu0 0.0
    %1529 = vmatpush1.msra.mxu0 0.0
    %1530 = vmatprep.subr.mxu0 0.0
    %1531 = vmatpush1.msra.mxu0 0.0
    %1532 = vmatprep.subr.mxu0 0.0
    %1533 = vmatpush1.msra.mxu0 0.0
    %1534 = vmatprep.subr.mxu0 0.0
    %1535 = vmatpush1.msra.mxu0 0.0
    %1536 = vmatprep.subr.mxu0 0.0
    %1537 = vmatpush1.msra.mxu0 0.0
    %1538 = vmatprep.subr.mxu0 0.0
    %1539 = vmatpush1.msra.mxu0 0.0
    %1540 = vmatprep.subr.mxu0 0.0
    %1541 = vmatpush1.msra.mxu0 0.0
    %1542 = vmatprep.mubr.f32.mxu0 0.0
    %1543 = vmatmul.mubr.f32.gmra.mrb[0].mxu0 %v1476
    %v1544 = vpop.f32.mrb[0].mxu0
    %v1545 = vadd.f32 %v143, %v1544
    %v1546 = vpop.f32.mrb[0].mxu0
    %1547 = vdwg.mxu0
    %v1548 = vxor.u32 %v1545, 2147483648
    %v1549 = vmul.f32 %v1548, 1.442695
    %v1550 = vpow.pop %v1549
    %v1551 = vadd.f32 %v1550, 1.0
    %v1552 = vrcp.pop %v1551
    %v1553 = vmul.f32 1.0, %v1552
    %v1554 = vtanh.pop %v1545
    %v1555 = vmul.f32 %v1553, %v1389
    %1557 = vrot.lane.b32.xlu0 %v1554, 64
    %v1558 = vpop.permute.xlu0 %1557
    %v1560 = vmul.f32 %v1553, %v1558
    %1562 = vrot.lane.b32.xlu0 %v1560, 32
    %v1563 = vpop.permute.xlu0 %1562
    %v1565 = vadd.f32 %v1555, %v1563
    %v1566 = vtanh.pop %v1565
    %1568 = vrot.lane.b32.xlu0 %v1566, 64
    %v1569 = vpop.permute.xlu0 %1568
    %v1571 = vmul.f32 %v1553, %v1569
    %vm1572 = vcmp.gt.s32.totalorder %v34, 7
    %v1573 = vsel %vm1572, 1, 0
    %1574 = vset.pattern.permute.xlu0 0
    %1575 = vperm.xlu0 %1574, %v1573
    %v1576 = vpop.permute.xlu0 %1575
    %vm1577 = vcmp.eq.s32.totalorder %v1576, 1
    %v1578 = vsel %vm1577, %v1571, 0.0
    %v1579 = vld [vmem:[%s4] sm:$0xff]
    %v1580 = vld [vmem:[%s4 + $0x8] sm:$0xff]
    %v1581 = vld [vmem:[%s4 + $0x10] sm:$0xff]
    %v1582 = vld [vmem:[%s4 + $0x18] sm:$0xff]
    %v1583 = vld [vmem:[%s4 + $0x20] sm:$0xff]
    %v1584 = vld [vmem:[%s4 + $0x28] sm:$0xff]
    %v1585 = vld [vmem:[%s4 + $0x30] sm:$0xff]
    %v1586 = vld [vmem:[%s4 + $0x38] sm:$0xff]
    %v1587 = vld [vmem:[%s6] sm:$0x1]
    %1588 = vrot.lane.b32.xlu0 %v249, 32
    %v1589 = vpop.permute.xlu0 %1588
    %v1591 = vsel %vm137, %v1589, 0.0
    %v1593 = vlaneseq
    %v1594 = vshrl.u32 %v1593, 7
    %v1595 = vsub.s32 0, %v1594
    %v1596 = vrot.slane %v1587, %v1595
    %v1599 = vsel %vm145, %v1591, 0
    %1601 = vmatprep.subr.mxu0 0.0
    %1602 = vmatpush1.msra.mxu0 %v1579
    %1603 = vmatprep.subr.mxu0 0.0
    %1604 = vmatpush1.msra.mxu0 %v1580
    %1605 = vmatprep.subr.mxu0 0.0
    %1606 = vmatpush1.msra.mxu0 %v1581
    %1607 = vmatprep.subr.mxu0 0.0
    %1608 = vmatpush1.msra.mxu0 %v1582
    %1609 = vmatprep.subr.mxu0 0.0
    %1610 = vmatpush1.msra.mxu0 %v1583
    %1611 = vmatprep.subr.mxu0 0.0
    %1612 = vmatpush1.msra.mxu0 %v1584
    %1613 = vmatprep.subr.mxu0 0.0
    %1614 = vmatpush1.msra.mxu0 %v1585
    %1615 = vmatprep.subr.mxu0 0.0
    %1616 = vmatpush1.msra.mxu0 %v1586
    %1617 = vmatprep.subr.mxu0 0.0
    %1618 = vmatpush1.msra.mxu0 0.0
    %1619 = vmatprep.subr.mxu0 0.0
    %1620 = vmatpush1.msra.mxu0 0.0
    %1621 = vmatprep.subr.mxu0 0.0
    %1622 = vmatpush1.msra.mxu0 0.0
    %1623 = vmatprep.subr.mxu0 0.0
    %1624 = vmatpush1.msra.mxu0 0.0
    %1625 = vmatprep.subr.mxu0 0.0
    %1626 = vmatpush1.msra.mxu0 0.0
    %1627 = vmatprep.subr.mxu0 0.0
    %1628 = vmatpush1.msra.mxu0 0.0
    %1629 = vmatprep.subr.mxu0 0.0
    %1630 = vmatpush1.msra.mxu0 0.0
    %1631 = vmatprep.subr.mxu0 0.0
    %1632 = vmatpush1.msra.mxu0 0.0
    %1633 = vmatprep.subr.mxu0 0.0
    %1634 = vmatpush1.msra.mxu0 0.0
    %1635 = vmatprep.subr.mxu0 0.0
    %1636 = vmatpush1.msra.mxu0 0.0
    %1637 = vmatprep.subr.mxu0 0.0
    %1638 = vmatpush1.msra.mxu0 0.0
    %1639 = vmatprep.subr.mxu0 0.0
    %1640 = vmatpush1.msra.mxu0 0.0
    %1641 = vmatprep.subr.mxu0 0.0
    %1642 = vmatpush1.msra.mxu0 0.0
    %1643 = vmatprep.subr.mxu0 0.0
    %1644 = vmatpush1.msra.mxu0 0.0
    %1645 = vmatprep.subr.mxu0 0.0
    %1646 = vmatpush1.msra.mxu0 0.0
    %1647 = vmatprep.subr.mxu0 0.0
    %1648 = vmatpush1.msra.mxu0 0.0
    %1649 = vmatprep.subr.mxu0 0.0
    %1650 = vmatpush1.msra.mxu0 0.0
    %1651 = vmatprep.subr.mxu0 0.0
    %1652 = vmatpush1.msra.mxu0 0.0
    %1653 = vmatprep.subr.mxu0 0.0
    %1654 = vmatpush1.msra.mxu0 0.0
    %1655 = vmatprep.subr.mxu0 0.0
    %1656 = vmatpush1.msra.mxu0 0.0
    %1657 = vmatprep.subr.mxu0 0.0
    %1658 = vmatpush1.msra.mxu0 0.0
    %1659 = vmatprep.subr.mxu0 0.0
    %1660 = vmatpush1.msra.mxu0 0.0
    %1661 = vmatprep.subr.mxu0 0.0
    %1662 = vmatpush1.msra.mxu0 0.0
    %1663 = vmatprep.subr.mxu0 0.0
    %1664 = vmatpush1.msra.mxu0 0.0
    %1665 = vmatprep.mubr.f32.mxu0 0.0
    %1666 = vmatmul.mubr.f32.gmra.mrb[0].mxu0 %v1599
    %v1667 = vpop.f32.mrb[0].mxu0
    %v1668 = vadd.f32 %v1596, %v1667
    %v1669 = vpop.f32.mrb[0].mxu0
    %1670 = vdwg.mxu0
    %v1671 = vxor.u32 %v1668, 2147483648
    %v1672 = vmul.f32 %v1671, 1.442695
    %v1673 = vpow.pop %v1672
    %v1674 = vadd.f32 %v1673, 1.0
    %v1675 = vrcp.pop %v1674
    %v1676 = vmul.f32 1.0, %v1675
    %v1677 = vtanh.pop %v1668
    %v1678 = vmul.f32 %v1676, 0.0
    %1680 = vrot.lane.b32.xlu0 %v1677, 64
    %v1681 = vpop.permute.xlu0 %1680
    %v1683 = vmul.f32 %v1676, %v1681
    %1685 = vrot.lane.b32.xlu0 %v1683, 32
    %v1686 = vpop.permute.xlu0 %1685
    %v1688 = vadd.f32 %v1678, %v1686
    %v1689 = vtanh.pop %v1688
    %1691 = vrot.lane.b32.xlu0 %v1689, 64
    %v1692 = vpop.permute.xlu0 %1691
    %v1694 = vmul.f32 %v1676, %v1692
    %v1695 = vsel %vm248, %v1694, 0.0
    %v1696 = vsel %vm248, %v1688, 0.0
    %1698 = vrot.lane.b32.xlu0 %v440, 32
    %v1699 = vpop.permute.xlu0 %1698
    %1702 = vrot.lane.b32.xlu0 %v1695, 64
    %v1703 = vpop.permute.xlu0 %1702
    %v1705 = vsel %vm137, %v1699, %v1703
    %v1707 = vsel %vm145, %v1705, 0
    %1709 = vmatprep.subr.mxu0 0.0
    %1710 = vmatpush1.msra.mxu0 %v1579
    %1711 = vmatprep.subr.mxu0 0.0
    %1712 = vmatpush1.msra.mxu0 %v1580
    %1713 = vmatprep.subr.mxu0 0.0
    %1714 = vmatpush1.msra.mxu0 %v1581
    %1715 = vmatprep.subr.mxu0 0.0
    %1716 = vmatpush1.msra.mxu0 %v1582
    %1717 = vmatprep.subr.mxu0 0.0
    %1718 = vmatpush1.msra.mxu0 %v1583
    %1719 = vmatprep.subr.mxu0 0.0
    %1720 = vmatpush1.msra.mxu0 %v1584
    %1721 = vmatprep.subr.mxu0 0.0
    %1722 = vmatpush1.msra.mxu0 %v1585
    %1723 = vmatprep.subr.mxu0 0.0
    %1724 = vmatpush1.msra.mxu0 %v1586
    %1725 = vmatprep.subr.mxu0 0.0
    %1726 = vmatpush1.msra.mxu0 0.0
    %1727 = vmatprep.subr.mxu0 0.0
    %1728 = vmatpush1.msra.mxu0 0.0
    %1729 = vmatprep.subr.mxu0 0.0
    %1730 = vmatpush1.msra.mxu0 0.0
    %1731 = vmatprep.subr.mxu0 0.0
    %1732 = vmatpush1.msra.mxu0 0.0
    %1733 = vmatprep.subr.mxu0 0.0
    %1734 = vmatpush1.msra.mxu0 0.0
    %1735 = vmatprep.subr.mxu0 0.0
    %1736 = vmatpush1.msra.mxu0 0.0
    %1737 = vmatprep.subr.mxu0 0.0
    %1738 = vmatpush1.msra.mxu0 0.0
    %1739 = vmatprep.subr.mxu0 0.0
    %1740 = vmatpush1.msra.mxu0 0.0
    %1741 = vmatprep.subr.mxu0 0.0
    %1742 = vmatpush1.msra.mxu0 0.0
    %1743 = vmatprep.subr.mxu0 0.0
    %1744 = vmatpush1.msra.mxu0 0.0
    %1745 = vmatprep.subr.mxu0 0.0
    %1746 = vmatpush1.msra.mxu0 0.0
    %1747 = vmatprep.subr.mxu0 0.0
    %1748 = vmatpush1.msra.mxu0 0.0
    %1749 = vmatprep.subr.mxu0 0.0
    %1750 = vmatpush1.msra.mxu0 0.0
    %1751 = vmatprep.subr.mxu0 0.0
    %1752 = vmatpush1.msra.mxu0 0.0
    %1753 = vmatprep.subr.mxu0 0.0
    %1754 = vmatpush1.msra.mxu0 0.0
    %1755 = vmatprep.subr.mxu0 0.0
    %1756 = vmatpush1.msra.mxu0 0.0
    %1757 = vmatprep.subr.mxu0 0.0
    %1758 = vmatpush1.msra.mxu0 0.0
    %1759 = vmatprep.subr.mxu0 0.0
    %1760 = vmatpush1.msra.mxu0 0.0
    %1761 = vmatprep.subr.mxu0 0.0
    %1762 = vmatpush1.msra.mxu0 0.0
    %1763 = vmatprep.subr.mxu0 0.0
    %1764 = vmatpush1.msra.mxu0 0.0
    %1765 = vmatprep.subr.mxu0 0.0
    %1766 = vmatpush1.msra.mxu0 0.0
    %1767 = vmatprep.subr.mxu0 0.0
    %1768 = vmatpush1.msra.mxu0 0.0
    %1769 = vmatprep.subr.mxu0 0.0
    %1770 = vmatpush1.msra.mxu0 0.0
    %1771 = vmatprep.subr.mxu0 0.0
    %1772 = vmatpush1.msra.mxu0 0.0
    %1773 = vmatprep.mubr.f32.mxu0 0.0
    %1774 = vmatmul.mubr.f32.gmra.mrb[0].mxu0 %v1707
    %v1775 = vpop.f32.mrb[0].mxu0
    %v1776 = vadd.f32 %v1596, %v1775
    %v1777 = vpop.f32.mrb[0].mxu0
    %1778 = vdwg.mxu0
    %v1779 = vxor.u32 %v1776, 2147483648
    %v1780 = vmul.f32 %v1779, 1.442695
    %v1781 = vpow.pop %v1780
    %v1782 = vadd.f32 %v1781, 1.0
    %v1783 = vrcp.pop %v1782
    %v1784 = vmul.f32 1.0, %v1783
    %v1785 = vtanh.pop %v1776
    %v1786 = vmul.f32 %v1784, %v1696
    %1788 = vrot.lane.b32.xlu0 %v1785, 64
    %v1789 = vpop.permute.xlu0 %1788
    %v1791 = vmul.f32 %v1784, %v1789
    %1793 = vrot.lane.b32.xlu0 %v1791, 32
    %v1794 = vpop.permute.xlu0 %1793
    %v1796 = vadd.f32 %v1786, %v1794
    %v1797 = vtanh.pop %v1796
    %1799 = vrot.lane.b32.xlu0 %v1797, 64
    %v1800 = vpop.permute.xlu0 %1799
    %v1802 = vmul.f32 %v1784, %v1800
    %v1803 = vsel %vm437, %v1802, %v1695
    %v1804 = vsel %vm437, %v1796, %v1696
    %1806 = vrot.lane.b32.xlu0 %v630, 32
    %v1807 = vpop.permute.xlu0 %1806
    %1810 = vrot.lane.b32.xlu0 %v1803, 64
    %v1811 = vpop.permute.xlu0 %1810
    %v1813 = vsel %vm137, %v1807, %v1811
    %v1815 = vsel %vm145, %v1813, 0
    %1817 = vmatprep.subr.mxu0 0.0
    %1818 = vmatpush1.msra.mxu0 %v1579
    %1819 = vmatprep.subr.mxu0 0.0
    %1820 = vmatpush1.msra.mxu0 %v1580
    %1821 = vmatprep.subr.mxu0 0.0
    %1822 = vmatpush1.msra.mxu0 %v1581
    %1823 = vmatprep.subr.mxu0 0.0
    %1824 = vmatpush1.msra.mxu0 %v1582
    %1825 = vmatprep.subr.mxu0 0.0
    %1826 = vmatpush1.msra.mxu0 %v1583
    %1827 = vmatprep.subr.mxu0 0.0
    %1828 = vmatpush1.msra.mxu0 %v1584
    %1829 = vmatprep.subr.mxu0 0.0
    %1830 = vmatpush1.msra.mxu0 %v1585
    %1831 = vmatprep.subr.mxu0 0.0
    %1832 = vmatpush1.msra.mxu0 %v1586
    %1833 = vmatprep.subr.mxu0 0.0
    %1834 = vmatpush1.msra.mxu0 0.0
    %1835 = vmatprep.subr.mxu0 0.0
    %1836 = vmatpush1.msra.mxu0 0.0
    %1837 = vmatprep.subr.mxu0 0.0
    %1838 = vmatpush1.msra.mxu0 0.0
    %1839 = vmatprep.subr.mxu0 0.0
    %1840 = vmatpush1.msra.mxu0 0.0
    %1841 = vmatprep.subr.mxu0 0.0
    %1842 = vmatpush1.msra.mxu0 0.0
    %1843 = vmatprep.subr.mxu0 0.0
    %1844 = vmatpush1.msra.mxu0 0.0
    %1845 = vmatprep.subr.mxu0 0.0
    %1846 = vmatpush1.msra.mxu0 0.0
    %1847 = vmatprep.subr.mxu0 0.0
    %1848 = vmatpush1.msra.mxu0 0.0
    %1849 = vmatprep.subr.mxu0 0.0
    %1850 = vmatpush1.msra.mxu0 0.0
    %1851 = vmatprep.subr.mxu0 0.0
    %1852 = vmatpush1.msra.mxu0 0.0
    %1853 = vmatprep.subr.mxu0 0.0
    %1854 = vmatpush1.msra.mxu0 0.0
    %1855 = vmatprep.subr.mxu0 0.0
    %1856 = vmatpush1.msra.mxu0 0.0
    %1857 = vmatprep.subr.mxu0 0.0
    %1858 = vmatpush1.msra.mxu0 0.0
    %1859 = vmatprep.subr.mxu0 0.0
    %1860 = vmatpush1.msra.mxu0 0.0
    %1861 = vmatprep.subr.mxu0 0.0
    %1862 = vmatpush1.msra.mxu0 0.0
    %1863 = vmatprep.subr.mxu0 0.0
    %1864 = vmatpush1.msra.mxu0 0.0
    %1865 = vmatprep.subr.mxu0 0.0
    %1866 = vmatpush1.msra.mxu0 0.0
    %1867 = vmatprep.subr.mxu0 0.0
    %1868 = vmatpush1.msra.mxu0 0.0
    %1869 = vmatprep.subr.mxu0 0.0
    %1870 = vmatpush1.msra.mxu0 0.0
    %1871 = vmatprep.subr.mxu0 0.0
    %1872 = vmatpush1.msra.mxu0 0.0
    %1873 = vmatprep.subr.mxu0 0.0
    %1874 = vmatpush1.msra.mxu0 0.0
    %1875 = vmatprep.subr.mxu0 0.0
    %1876 = vmatpush1.msra.mxu0 0.0
    %1877 = vmatprep.subr.mxu0 0.0
    %1878 = vmatpush1.msra.mxu0 0.0
    %1879 = vmatprep.subr.mxu0 0.0
    %1880 = vmatpush1.msra.mxu0 0.0
    %1881 = vmatprep.mubr.f32.mxu0 0.0
    %1882 = vmatmul.mubr.f32.gmra.mrb[0].mxu0 %v1815
    %v1883 = vpop.f32.mrb[0].mxu0
    %v1884 = vadd.f32 %v1596, %v1883
    %v1885 = vpop.f32.mrb[0].mxu0
    %1886 = vdwg.mxu0
    %v1887 = vxor.u32 %v1884, 2147483648
    %v1888 = vmul.f32 %v1887, 1.442695
    %v1889 = vpow.pop %v1888
    %v1890 = vadd.f32 %v1889, 1.0
    %v1891 = vrcp.pop %v1890
    %v1892 = vmul.f32 1.0, %v1891
    %v1893 = vtanh.pop %v1884
    %v1894 = vmul.f32 %v1892, %v1804
    %1896 = vrot.lane.b32.xlu0 %v1893, 64
    %v1897 = vpop.permute.xlu0 %1896
    %v1899 = vmul.f32 %v1892, %v1897
    %1901 = vrot.lane.b32.xlu0 %v1899, 32
    %v1902 = vpop.permute.xlu0 %1901
    %v1904 = vadd.f32 %v1894, %v1902
    %v1905 = vtanh.pop %v1904
    %1907 = vrot.lane.b32.xlu0 %v1905, 64
    %v1908 = vpop.permute.xlu0 %1907
    %v1910 = vmul.f32 %v1892, %v1908
    %v1911 = vsel %vm627, %v1910, %v1803
    %v1912 = vsel %vm627, %v1904, %v1804
    %1914 = vrot.lane.b32.xlu0 %v820, 32
    %v1915 = vpop.permute.xlu0 %1914
    %1918 = vrot.lane.b32.xlu0 %v1911, 64
    %v1919 = vpop.permute.xlu0 %1918
    %v1921 = vsel %vm137, %v1915, %v1919
    %v1923 = vsel %vm145, %v1921, 0
    %1925 = vmatprep.subr.mxu0 0.0
    %1926 = vmatpush1.msra.mxu0 %v1579
    %1927 = vmatprep.subr.mxu0 0.0
    %1928 = vmatpush1.msra.mxu0 %v1580
    %1929 = vmatprep.subr.mxu0 0.0
    %1930 = vmatpush1.msra.mxu0 %v1581
    %1931 = vmatprep.subr.mxu0 0.0
    %1932 = vmatpush1.msra.mxu0 %v1582
    %1933 = vmatprep.subr.mxu0 0.0
    %1934 = vmatpush1.msra.mxu0 %v1583
    %1935 = vmatprep.subr.mxu0 0.0
    %1936 = vmatpush1.msra.mxu0 %v1584
    %1937 = vmatprep.subr.mxu0 0.0
    %1938 = vmatpush1.msra.mxu0 %v1585
    %1939 = vmatprep.subr.mxu0 0.0
    %1940 = vmatpush1.msra.mxu0 %v1586
    %1941 = vmatprep.subr.mxu0 0.0
    %1942 = vmatpush1.msra.mxu0 0.0
    %1943 = vmatprep.subr.mxu0 0.0
    %1944 = vmatpush1.msra.mxu0 0.0
    %1945 = vmatprep.subr.mxu0 0.0
    %1946 = vmatpush1.msra.mxu0 0.0
    %1947 = vmatprep.subr.mxu0 0.0
    %1948 = vmatpush1.msra.mxu0 0.0
    %1949 = vmatprep.subr.mxu0 0.0
    %1950 = vmatpush1.msra.mxu0 0.0
    %1951 = vmatprep.subr.mxu0 0.0
    %1952 = vmatpush1.msra.mxu0 0.0
    %1953 = vmatprep.subr.mxu0 0.0
    %1954 = vmatpush1.msra.mxu0 0.0
    %1955 = vmatprep.subr.mxu0 0.0
    %1956 = vmatpush1.msra.mxu0 0.0
    %1957 = vmatprep.subr.mxu0 0.0
    %1958 = vmatpush1.msra.mxu0 0.0
    %1959 = vmatprep.subr.mxu0 0.0
    %1960 = vmatpush1.msra.mxu0 0.0
    %1961 = vmatprep.subr.mxu0 0.0
    %1962 = vmatpush1.msra.mxu0 0.0
    %1963 = vmatprep.subr.mxu0 0.0
    %1964 = vmatpush1.msra.mxu0 0.0
    %1965 = vmatprep.subr.mxu0 0.0
    %1966 = vmatpush1.msra.mxu0 0.0
    %1967 = vmatprep.subr.mxu0 0.0
    %1968 = vmatpush1.msra.mxu0 0.0
    %1969 = vmatprep.subr.mxu0 0.0
    %1970 = vmatpush1.msra.mxu0 0.0
    %1971 = vmatprep.subr.mxu0 0.0
    %1972 = vmatpush1.msra.mxu0 0.0
    %1973 = vmatprep.subr.mxu0 0.0
    %1974 = vmatpush1.msra.mxu0 0.0
    %1975 = vmatprep.subr.mxu0 0.0
    %1976 = vmatpush1.msra.mxu0 0.0
    %1977 = vmatprep.subr.mxu0 0.0
    %1978 = vmatpush1.msra.mxu0 0.0
    %1979 = vmatprep.subr.mxu0 0.0
    %1980 = vmatpush1.msra.mxu0 0.0
    %1981 = vmatprep.subr.mxu0 0.0
    %1982 = vmatpush1.msra.mxu0 0.0
    %1983 = vmatprep.subr.mxu0 0.0
    %1984 = vmatpush1.msra.mxu0 0.0
    %1985 = vmatprep.subr.mxu0 0.0
    %1986 = vmatpush1.msra.mxu0 0.0
    %1987 = vmatprep.subr.mxu0 0.0
    %1988 = vmatpush1.msra.mxu0 0.0
    %1989 = vmatprep.mubr.f32.mxu0 0.0
    %1990 = vmatmul.mubr.f32.gmra.mrb[0].mxu0 %v1923
    %v1991 = vpop.f32.mrb[0].mxu0
    %v1992 = vadd.f32 %v1596, %v1991
    %v1993 = vpop.f32.mrb[0].mxu0
    %1994 = vdwg.mxu0
    %v1995 = vxor.u32 %v1992, 2147483648
    %v1996 = vmul.f32 %v1995, 1.442695
    %v1997 = vpow.pop %v1996
    %v1998 = vadd.f32 %v1997, 1.0
    %v1999 = vrcp.pop %v1998
    %v2000 = vmul.f32 1.0, %v1999
    %v2001 = vtanh.pop %v1992
    %v2002 = vmul.f32 %v2000, %v1912
    %2004 = vrot.lane.b32.xlu0 %v2001, 64
    %v2005 = vpop.permute.xlu0 %2004
    %v2007 = vmul.f32 %v2000, %v2005
    %2009 = vrot.lane.b32.xlu0 %v2007, 32
    %v2010 = vpop.permute.xlu0 %2009
    %v2012 = vadd.f32 %v2002, %v2010
    %v2013 = vtanh.pop %v2012
    %2015 = vrot.lane.b32.xlu0 %v2013, 64
    %v2016 = vpop.permute.xlu0 %2015
    %v2018 = vmul.f32 %v2000, %v2016
    %v2019 = vsel %vm817, %v2018, %v1911
    %v2020 = vsel %vm817, %v2012, %v1912
    %2022 = vrot.lane.b32.xlu0 %v1010, 32
    %v2023 = vpop.permute.xlu0 %2022
    %2026 = vrot.lane.b32.xlu0 %v2019, 64
    %v2027 = vpop.permute.xlu0 %2026
    %v2029 = vsel %vm137, %v2023, %v2027
    %v2031 = vsel %vm145, %v2029, 0
    %2033 = vmatprep.subr.mxu0 0.0
    %2034 = vmatpush1.msra.mxu0 %v1579
    %2035 = vmatprep.subr.mxu0 0.0
    %2036 = vmatpush1.msra.mxu0 %v1580
    %2037 = vmatprep.subr.mxu0 0.0
    %2038 = vmatpush1.msra.mxu0 %v1581
    %2039 = vmatprep.subr.mxu0 0.0
    %2040 = vmatpush1.msra.mxu0 %v1582
    %2041 = vmatprep.subr.mxu0 0.0
    %2042 = vmatpush1.msra.mxu0 %v1583
    %2043 = vmatprep.subr.mxu0 0.0
    %2044 = vmatpush1.msra.mxu0 %v1584
    %2045 = vmatprep.subr.mxu0 0.0
    %2046 = vmatpush1.msra.mxu0 %v1585
    %2047 = vmatprep.subr.mxu0 0.0
    %2048 = vmatpush1.msra.mxu0 %v1586
    %2049 = vmatprep.subr.mxu0 0.0
    %2050 = vmatpush1.msra.mxu0 0.0
    %2051 = vmatprep.subr.mxu0 0.0
    %2052 = vmatpush1.msra.mxu0 0.0
    %2053 = vmatprep.subr.mxu0 0.0
    %2054 = vmatpush1.msra.mxu0 0.0
    %2055 = vmatprep.subr.mxu0 0.0
    %2056 = vmatpush1.msra.mxu0 0.0
    %2057 = vmatprep.subr.mxu0 0.0
    %2058 = vmatpush1.msra.mxu0 0.0
    %2059 = vmatprep.subr.mxu0 0.0
    %2060 = vmatpush1.msra.mxu0 0.0
    %2061 = vmatprep.subr.mxu0 0.0
    %2062 = vmatpush1.msra.mxu0 0.0
    %2063 = vmatprep.subr.mxu0 0.0
    %2064 = vmatpush1.msra.mxu0 0.0
    %2065 = vmatprep.subr.mxu0 0.0
    %2066 = vmatpush1.msra.mxu0 0.0
    %2067 = vmatprep.subr.mxu0 0.0
    %2068 = vmatpush1.msra.mxu0 0.0
    %2069 = vmatprep.subr.mxu0 0.0
    %2070 = vmatpush1.msra.mxu0 0.0
    %2071 = vmatprep.subr.mxu0 0.0
    %2072 = vmatpush1.msra.mxu0 0.0
    %2073 = vmatprep.subr.mxu0 0.0
    %2074 = vmatpush1.msra.mxu0 0.0
    %2075 = vmatprep.subr.mxu0 0.0
    %2076 = vmatpush1.msra.mxu0 0.0
    %2077 = vmatprep.subr.mxu0 0.0
    %2078 = vmatpush1.msra.mxu0 0.0
    %2079 = vmatprep.subr.mxu0 0.0
    %2080 = vmatpush1.msra.mxu0 0.0
    %2081 = vmatprep.subr.mxu0 0.0
    %2082 = vmatpush1.msra.mxu0 0.0
    %2083 = vmatprep.subr.mxu0 0.0
    %2084 = vmatpush1.msra.mxu0 0.0
    %2085 = vmatprep.subr.mxu0 0.0
    %2086 = vmatpush1.msra.mxu0 0.0
    %2087 = vmatprep.subr.mxu0 0.0
    %2088 = vmatpush1.msra.mxu0 0.0
    %2089 = vmatprep.subr.mxu0 0.0
    %2090 = vmatpush1.msra.mxu0 0.0
    %2091 = vmatprep.subr.mxu0 0.0
    %2092 = vmatpush1.msra.mxu0 0.0
    %2093 = vmatprep.subr.mxu0 0.0
    %2094 = vmatpush1.msra.mxu0 0.0
    %2095 = vmatprep.subr.mxu0 0.0
    %2096 = vmatpush1.msra.mxu0 0.0
    %2097 = vmatprep.mubr.f32.mxu0 0.0
    %2098 = vmatmul.mubr.f32.gmra.mrb[0].mxu0 %v2031
    %v2099 = vpop.f32.mrb[0].mxu0
    %v2100 = vadd.f32 %v1596, %v2099
    %v2101 = vpop.f32.mrb[0].mxu0
    %2102 = vdwg.mxu0
    %v2103 = vxor.u32 %v2100, 2147483648
    %v2104 = vmul.f32 %v2103, 1.442695
    %v2105 = vpow.pop %v2104
    %v2106 = vadd.f32 %v2105, 1.0
    %v2107 = vrcp.pop %v2106
    %v2108 = vmul.f32 1.0, %v2107
    %v2109 = vtanh.pop %v2100
    %v2110 = vmul.f32 %v2108, %v2020
    %2112 = vrot.lane.b32.xlu0 %v2109, 64
    %v2113 = vpop.permute.xlu0 %2112
    %v2115 = vmul.f32 %v2108, %v2113
    %2117 = vrot.lane.b32.xlu0 %v2115, 32
    %v2118 = vpop.permute.xlu0 %2117
    %v2120 = vadd.f32 %v2110, %v2118
    %v2121 = vtanh.pop %v2120
    %2123 = vrot.lane.b32.xlu0 %v2121, 64
    %v2124 = vpop.permute.xlu0 %2123
    %v2126 = vmul.f32 %v2108, %v2124
    %v2127 = vsel %vm1007, %v2126, %v2019
    %v2128 = vsel %vm1007, %v2120, %v2020
    %2130 = vrot.lane.b32.xlu0 %v1200, 32
    %v2131 = vpop.permute.xlu0 %2130
    %2134 = vrot.lane.b32.xlu0 %v2127, 64
    %v2135 = vpop.permute.xlu0 %2134
    %v2137 = vsel %vm137, %v2131, %v2135
    %v2139 = vsel %vm145, %v2137, 0
    %2141 = vmatprep.subr.mxu0 0.0
    %2142 = vmatpush1.msra.mxu0 %v1579
    %2143 = vmatprep.subr.mxu0 0.0
    %2144 = vmatpush1.msra.mxu0 %v1580
    %2145 = vmatprep.subr.mxu0 0.0
    %2146 = vmatpush1.msra.mxu0 %v1581
    %2147 = vmatprep.subr.mxu0 0.0
    %2148 = vmatpush1.msra.mxu0 %v1582
    %2149 = vmatprep.subr.mxu0 0.0
    %2150 = vmatpush1.msra.mxu0 %v1583
    %2151 = vmatprep.subr.mxu0 0.0
    %2152 = vmatpush1.msra.mxu0 %v1584
    %2153 = vmatprep.subr.mxu0 0.0
    %2154 = vmatpush1.msra.mxu0 %v1585
    %2155 = vmatprep.subr.mxu0 0.0
    %2156 = vmatpush1.msra.mxu0 %v1586
    %2157 = vmatprep.subr.mxu0 0.0
    %2158 = vmatpush1.msra.mxu0 0.0
    %2159 = vmatprep.subr.mxu0 0.0
    %2160 = vmatpush1.msra.mxu0 0.0
    %2161 = vmatprep.subr.mxu0 0.0
    %2162 = vmatpush1.msra.mxu0 0.0
    %2163 = vmatprep.subr.mxu0 0.0
    %2164 = vmatpush1.msra.mxu0 0.0
    %2165 = vmatprep.subr.mxu0 0.0
    %2166 = vmatpush1.msra.mxu0 0.0
    %2167 = vmatprep.subr.mxu0 0.0
    %2168 = vmatpush1.msra.mxu0 0.0
    %2169 = vmatprep.subr.mxu0 0.0
    %2170 = vmatpush1.msra.mxu0 0.0
    %2171 = vmatprep.subr.mxu0 0.0
    %2172 = vmatpush1.msra.mxu0 0.0
    %2173 = vmatprep.subr.mxu0 0.0
    %2174 = vmatpush1.msra.mxu0 0.0
    %2175 = vmatprep.subr.mxu0 0.0
    %2176 = vmatpush1.msra.mxu0 0.0
    %2177 = vmatprep.subr.mxu0 0.0
    %2178 = vmatpush1.msra.mxu0 0.0
    %2179 = vmatprep.subr.mxu0 0.0
    %2180 = vmatpush1.msra.mxu0 0.0
    %2181 = vmatprep.subr.mxu0 0.0
    %2182 = vmatpush1.msra.mxu0 0.0
    %2183 = vmatprep.subr.mxu0 0.0
    %2184 = vmatpush1.msra.mxu0 0.0
    %2185 = vmatprep.subr.mxu0 0.0
    %2186 = vmatpush1.msra.mxu0 0.0
    %2187 = vmatprep.subr.mxu0 0.0
    %2188 = vmatpush1.msra.mxu0 0.0
    %2189 = vmatprep.subr.mxu0 0.0
    %2190 = vmatpush1.msra.mxu0 0.0
    %2191 = vmatprep.subr.mxu0 0.0
    %2192 = vmatpush1.msra.mxu0 0.0
    %2193 = vmatprep.subr.mxu0 0.0
    %2194 = vmatpush1.msra.mxu0 0.0
    %2195 = vmatprep.subr.mxu0 0.0
    %2196 = vmatpush1.msra.mxu0 0.0
    %2197 = vmatprep.subr.mxu0 0.0
    %2198 = vmatpush1.msra.mxu0 0.0
    %2199 = vmatprep.subr.mxu0 0.0
    %2200 = vmatpush1.msra.mxu0 0.0
    %2201 = vmatprep.subr.mxu0 0.0
    %2202 = vmatpush1.msra.mxu0 0.0
    %2203 = vmatprep.subr.mxu0 0.0
    %2204 = vmatpush1.msra.mxu0 0.0
    %2205 = vmatprep.mubr.f32.mxu0 0.0
    %2206 = vmatmul.mubr.f32.gmra.mrb[0].mxu0 %v2139
    %v2207 = vpop.f32.mrb[0].mxu0
    %v2208 = vadd.f32 %v1596, %v2207
    %v2209 = vpop.f32.mrb[0].mxu0
    %2210 = vdwg.mxu0
    %v2211 = vxor.u32 %v2208, 2147483648
    %v2212 = vmul.f32 %v2211, 1.442695
    %v2213 = vpow.pop %v2212
    %v2214 = vadd.f32 %v2213, 1.0
    %v2215 = vrcp.pop %v2214
    %v2216 = vmul.f32 1.0, %v2215
    %v2217 = vtanh.pop %v2208
    %v2218 = vmul.f32 %v2216, %v2128
    %2220 = vrot.lane.b32.xlu0 %v2217, 64
    %v2221 = vpop.permute.xlu0 %2220
    %v2223 = vmul.f32 %v2216, %v2221
    %2225 = vrot.lane.b32.xlu0 %v2223, 32
    %v2226 = vpop.permute.xlu0 %2225
    %v2228 = vadd.f32 %v2218, %v2226
    %v2229 = vtanh.pop %v2228
    %2231 = vrot.lane.b32.xlu0 %v2229, 64
    %v2232 = vpop.permute.xlu0 %2231
    %v2234 = vmul.f32 %v2216, %v2232
    %v2235 = vsel %vm1197, %v2234, %v2127
    %v2236 = vsel %vm1197, %v2228, %v2128
    %2238 = vrot.lane.b32.xlu0 %v1390, 32
    %v2239 = vpop.permute.xlu0 %2238
    %2242 = vrot.lane.b32.xlu0 %v2235, 64
    %v2243 = vpop.permute.xlu0 %2242
    %v2245 = vsel %vm137, %v2239, %v2243
    %v2247 = vsel %vm145, %v2245, 0
    %2249 = vmatprep.subr.mxu0 0.0
    %2250 = vmatpush1.msra.mxu0 %v1579
    %2251 = vmatprep.subr.mxu0 0.0
    %2252 = vmatpush1.msra.mxu0 %v1580
    %2253 = vmatprep.subr.mxu0 0.0
    %2254 = vmatpush1.msra.mxu0 %v1581
    %2255 = vmatprep.subr.mxu0 0.0
    %2256 = vmatpush1.msra.mxu0 %v1582
    %2257 = vmatprep.subr.mxu0 0.0
    %2258 = vmatpush1.msra.mxu0 %v1583
    %2259 = vmatprep.subr.mxu0 0.0
    %2260 = vmatpush1.msra.mxu0 %v1584
    %2261 = vmatprep.subr.mxu0 0.0
    %2262 = vmatpush1.msra.mxu0 %v1585
    %2263 = vmatprep.subr.mxu0 0.0
    %2264 = vmatpush1.msra.mxu0 %v1586
    %2265 = vmatprep.subr.mxu0 0.0
    %2266 = vmatpush1.msra.mxu0 0.0
    %2267 = vmatprep.subr.mxu0 0.0
    %2268 = vmatpush1.msra.mxu0 0.0
    %2269 = vmatprep.subr.mxu0 0.0
    %2270 = vmatpush1.msra.mxu0 0.0
    %2271 = vmatprep.subr.mxu0 0.0
    %2272 = vmatpush1.msra.mxu0 0.0
    %2273 = vmatprep.subr.mxu0 0.0
    %2274 = vmatpush1.msra.mxu0 0.0
    %2275 = vmatprep.subr.mxu0 0.0
    %2276 = vmatpush1.msra.mxu0 0.0
    %2277 = vmatprep.subr.mxu0 0.0
    %2278 = vmatpush1.msra.mxu0 0.0
    %2279 = vmatprep.subr.mxu0 0.0
    %2280 = vmatpush1.msra.mxu0 0.0
    %2281 = vmatprep.subr.mxu0 0.0
    %2282 = vmatpush1.msra.mxu0 0.0
    %2283 = vmatprep.subr.mxu0 0.0
    %2284 = vmatpush1.msra.mxu0 0.0
    %2285 = vmatprep.subr.mxu0 0.0
    %2286 = vmatpush1.msra.mxu0 0.0
    %2287 = vmatprep.subr.mxu0 0.0
    %2288 = vmatpush1.msra.mxu0 0.0
    %2289 = vmatprep.subr.mxu0 0.0
    %2290 = vmatpush1.msra.mxu0 0.0
    %2291 = vmatprep.subr.mxu0 0.0
    %2292 = vmatpush1.msra.mxu0 0.0
    %2293 = vmatprep.subr.mxu0 0.0
    %2294 = vmatpush1.msra.mxu0 0.0
    %2295 = vmatprep.subr.mxu0 0.0
    %2296 = vmatpush1.msra.mxu0 0.0
    %2297 = vmatprep.subr.mxu0 0.0
    %2298 = vmatpush1.msra.mxu0 0.0
    %2299 = vmatprep.subr.mxu0 0.0
    %2300 = vmatpush1.msra.mxu0 0.0
    %2301 = vmatprep.subr.mxu0 0.0
    %2302 = vmatpush1.msra.mxu0 0.0
    %2303 = vmatprep.subr.mxu0 0.0
    %2304 = vmatpush1.msra.mxu0 0.0
    %2305 = vmatprep.subr.mxu0 0.0
    %2306 = vmatpush1.msra.mxu0 0.0
    %2307 = vmatprep.subr.mxu0 0.0
    %2308 = vmatpush1.msra.mxu0 0.0
    %2309 = vmatprep.subr.mxu0 0.0
    %2310 = vmatpush1.msra.mxu0 0.0
    %2311 = vmatprep.subr.mxu0 0.0
    %2312 = vmatpush1.msra.mxu0 0.0
    %2313 = vmatprep.mubr.f32.mxu0 0.0
    %2314 = vmatmul.mubr.f32.gmra.mrb[0].mxu0 %v2247
    %v2315 = vpop.f32.mrb[0].mxu0
    %v2316 = vadd.f32 %v1596, %v2315
    %v2317 = vpop.f32.mrb[0].mxu0
    %2318 = vdwg.mxu0
    %v2319 = vxor.u32 %v2316, 2147483648
    %v2320 = vmul.f32 %v2319, 1.442695
    %v2321 = vpow.pop %v2320
    %v2322 = vadd.f32 %v2321, 1.0
    %v2323 = vrcp.pop %v2322
    %v2324 = vmul.f32 1.0, %v2323
    %v2325 = vtanh.pop %v2316
    %v2326 = vmul.f32 %v2324, %v2236
    %2328 = vrot.lane.b32.xlu0 %v2325, 64
    %v2329 = vpop.permute.xlu0 %2328
    %v2331 = vmul.f32 %v2324, %v2329
    %2333 = vrot.lane.b32.xlu0 %v2331, 32
    %v2334 = vpop.permute.xlu0 %2333
    %v2336 = vadd.f32 %v2326, %v2334
    %v2337 = vtanh.pop %v2336
    %2339 = vrot.lane.b32.xlu0 %v2337, 64
    %v2340 = vpop.permute.xlu0 %2339
    %v2342 = vmul.f32 %v2324, %v2340
    %v2343 = vsel %vm1387, %v2342, %v2235
    %v2344 = vsel %vm1387, %v2336, %v2236
    %2346 = vrot.lane.b32.xlu0 %v1578, 32
    %v2347 = vpop.permute.xlu0 %2346
    %2350 = vrot.lane.b32.xlu0 %v2343, 64
    %v2351 = vpop.permute.xlu0 %2350
    %v2353 = vsel %vm137, %v2347, %v2351
    %v2355 = vsel %vm145, %v2353, 0
    %2357 = vmatprep.subr.mxu0 0.0
    %2358 = vmatpush1.msra.mxu0 %v1579
    %2359 = vmatprep.subr.mxu0 0.0
    %2360 = vmatpush1.msra.mxu0 %v1580
    %2361 = vmatprep.subr.mxu0 0.0
    %2362 = vmatpush1.msra.mxu0 %v1581
    %2363 = vmatprep.subr.mxu0 0.0
    %2364 = vmatpush1.msra.mxu0 %v1582
    %2365 = vmatprep.subr.mxu0 0.0
    %2366 = vmatpush1.msra.mxu0 %v1583
    %2367 = vmatprep.subr.mxu0 0.0
    %2368 = vmatpush1.msra.mxu0 %v1584
    %2369 = vmatprep.subr.mxu0 0.0
    %2370 = vmatpush1.msra.mxu0 %v1585
    %2371 = vmatprep.subr.mxu0 0.0
    %2372 = vmatpush1.msra.mxu0 %v1586
    %2373 = vmatprep.subr.mxu0 0.0
    %2374 = vmatpush1.msra.mxu0 0.0
    %2375 = vmatprep.subr.mxu0 0.0
    %2376 = vmatpush1.msra.mxu0 0.0
    %2377 = vmatprep.subr.mxu0 0.0
    %2378 = vmatpush1.msra.mxu0 0.0
    %2379 = vmatprep.subr.mxu0 0.0
    %2380 = vmatpush1.msra.mxu0 0.0
    %2381 = vmatprep.subr.mxu0 0.0
    %2382 = vmatpush1.msra.mxu0 0.0
    %2383 = vmatprep.subr.mxu0 0.0
    %2384 = vmatpush1.msra.mxu0 0.0
    %2385 = vmatprep.subr.mxu0 0.0
    %2386 = vmatpush1.msra.mxu0 0.0
    %2387 = vmatprep.subr.mxu0 0.0
    %2388 = vmatpush1.msra.mxu0 0.0
    %2389 = vmatprep.subr.mxu0 0.0
    %2390 = vmatpush1.msra.mxu0 0.0
    %2391 = vmatprep.subr.mxu0 0.0
    %2392 = vmatpush1.msra.mxu0 0.0
    %2393 = vmatprep.subr.mxu0 0.0
    %2394 = vmatpush1.msra.mxu0 0.0
    %2395 = vmatprep.subr.mxu0 0.0
    %2396 = vmatpush1.msra.mxu0 0.0
    %2397 = vmatprep.subr.mxu0 0.0
    %2398 = vmatpush1.msra.mxu0 0.0
    %2399 = vmatprep.subr.mxu0 0.0
    %2400 = vmatpush1.msra.mxu0 0.0
    %2401 = vmatprep.subr.mxu0 0.0
    %2402 = vmatpush1.msra.mxu0 0.0
    %2403 = vmatprep.subr.mxu0 0.0
    %2404 = vmatpush1.msra.mxu0 0.0
    %2405 = vmatprep.subr.mxu0 0.0
    %2406 = vmatpush1.msra.mxu0 0.0
    %2407 = vmatprep.subr.mxu0 0.0
    %2408 = vmatpush1.msra.mxu0 0.0
    %2409 = vmatprep.subr.mxu0 0.0
    %2410 = vmatpush1.msra.mxu0 0.0
    %2411 = vmatprep.subr.mxu0 0.0
    %2412 = vmatpush1.msra.mxu0 0.0
    %2413 = vmatprep.subr.mxu0 0.0
    %2414 = vmatpush1.msra.mxu0 0.0
    %2415 = vmatprep.subr.mxu0 0.0
    %2416 = vmatpush1.msra.mxu0 0.0
    %2417 = vmatprep.subr.mxu0 0.0
    %2418 = vmatpush1.msra.mxu0 0.0
    %2419 = vmatprep.subr.mxu0 0.0
    %2420 = vmatpush1.msra.mxu0 0.0
    %2421 = vmatprep.mubr.f32.mxu0 0.0
    %2422 = vmatmul.mubr.f32.gmra.mrb[0].mxu0 %v2355
    %v2423 = vpop.f32.mrb[0].mxu0
    %v2424 = vadd.f32 %v1596, %v2423
    %v2425 = vpop.f32.mrb[0].mxu0
    %2426 = vdwg.mxu0
    %v2427 = vxor.u32 %v2424, 2147483648
    %v2428 = vmul.f32 %v2427, 1.442695
    %v2429 = vpow.pop %v2428
    %v2430 = vadd.f32 %v2429, 1.0
    %v2431 = vrcp.pop %v2430
    %v2432 = vmul.f32 1.0, %v2431
    %v2433 = vtanh.pop %v2424
    %v2434 = vmul.f32 %v2432, %v2344
    %2436 = vrot.lane.b32.xlu0 %v2433, 64
    %v2437 = vpop.permute.xlu0 %2436
    %v2439 = vmul.f32 %v2432, %v2437
    %2441 = vrot.lane.b32.xlu0 %v2439, 32
    %v2442 = vpop.permute.xlu0 %2441
    %v2444 = vadd.f32 %v2434, %v2442
    %v2445 = vtanh.pop %v2444
    %2447 = vrot.lane.b32.xlu0 %v2445, 64
    %v2448 = vpop.permute.xlu0 %2447
    %v2450 = vmul.f32 %v2432, %v2448
    %v2451 = vsel %vm1577, %v2450, %v2343
    %v2452 = vld [vmem:[%s7] sm:$0xff]
    %v2453 = vld [vmem:[%s7 + $0x8] sm:$0xff]
    %v2454 = vld [vmem:[%s7 + $0x10] sm:$0xff]
    %v2455 = vld [vmem:[%s7 + $0x18] sm:$0xff]
    %v2456 = vld [vmem:[%s8] sm:$0x1]
    %v2458 = vlaneseq
    %v2459 = vshrl.u32 %v2458, 7
    %v2460 = vsub.s32 0, %v2459
    %v2461 = vrot.slane %v2456, %v2460
    %2464 = vrot.lane.b32.xlu0 %v2451, 32
    %v2465 = vpop.permute.xlu0 %2464
    %v2466 = vsel %vm137, %v2465, 0
    %2468 = vmatprep.subr.mxu0 0.0
    %2469 = vmatpush1.msra.mxu0 %v2452
    %2470 = vmatprep.subr.mxu0 0.0
    %2471 = vmatpush1.msra.mxu0 %v2453
    %2472 = vmatprep.subr.mxu0 0.0
    %2473 = vmatpush1.msra.mxu0 %v2454
    %2474 = vmatprep.subr.mxu0 0.0
    %2475 = vmatpush1.msra.mxu0 %v2455
    %2476 = vmatprep.subr.mxu0 0.0
    %2477 = vmatpush1.msra.mxu0 0.0
    %2478 = vmatprep.subr.mxu0 0.0
    %2479 = vmatpush1.msra.mxu0 0.0
    %2480 = vmatprep.subr.mxu0 0.0
    %2481 = vmatpush1.msra.mxu0 0.0
    %2482 = vmatprep.subr.mxu0 0.0
    %2483 = vmatpush1.msra.mxu0 0.0
    %2484 = vmatprep.subr.mxu0 0.0
    %2485 = vmatpush1.msra.mxu0 0.0
    %2486 = vmatprep.subr.mxu0 0.0
    %2487 = vmatpush1.msra.mxu0 0.0
    %2488 = vmatprep.subr.mxu0 0.0
    %2489 = vmatpush1.msra.mxu0 0.0
    %2490 = vmatprep.subr.mxu0 0.0
    %2491 = vmatpush1.msra.mxu0 0.0
    %2492 = vmatprep.subr.mxu0 0.0
    %2493 = vmatpush1.msra.mxu0 0.0
    %2494 = vmatprep.subr.mxu0 0.0
    %2495 = vmatpush1.msra.mxu0 0.0
    %2496 = vmatprep.subr.mxu0 0.0
    %2497 = vmatpush1.msra.mxu0 0.0
    %2498 = vmatprep.subr.mxu0 0.0
    %2499 = vmatpush1.msra.mxu0 0.0
    %2500 = vmatprep.subr.mxu0 0.0
    %2501 = vmatpush1.msra.mxu0 0.0
    %2502 = vmatprep.subr.mxu0 0.0
    %2503 = vmatpush1.msra.mxu0 0.0
    %2504 = vmatprep.subr.mxu0 0.0
    %2505 = vmatpush1.msra.mxu0 0.0
    %2506 = vmatprep.subr.mxu0 0.0
    %2507 = vmatpush1.msra.mxu0 0.0
    %2508 = vmatprep.subr.mxu0 0.0
    %2509 = vmatpush1.msra.mxu0 0.0
    %2510 = vmatprep.subr.mxu0 0.0
    %2511 = vmatpush1.msra.mxu0 0.0
    %2512 = vmatprep.subr.mxu0 0.0
    %2513 = vmatpush1.msra.mxu0 0.0
    %2514 = vmatprep.subr.mxu0 0.0
    %2515 = vmatpush1.msra.mxu0 0.0
    %2516 = vmatprep.subr.mxu0 0.0
    %2517 = vmatpush1.msra.mxu0 0.0
    %2518 = vmatprep.subr.mxu0 0.0
    %2519 = vmatpush1.msra.mxu0 0.0
    %2520 = vmatprep.subr.mxu0 0.0
    %2521 = vmatpush1.msra.mxu0 0.0
    %2522 = vmatprep.subr.mxu0 0.0
    %2523 = vmatpush1.msra.mxu0 0.0
    %2524 = vmatprep.subr.mxu0 0.0
    %2525 = vmatpush1.msra.mxu0 0.0
    %2526 = vmatprep.subr.mxu0 0.0
    %2527 = vmatpush1.msra.mxu0 0.0
    %2528 = vmatprep.subr.mxu0 0.0
    %2529 = vmatpush1.msra.mxu0 0.0
    %2530 = vmatprep.subr.mxu0 0.0
    %2531 = vmatpush1.msra.mxu0 0.0
    %2532 = vmatprep.mubr.f32.mxu0 0.0
    %2533 = vmatmul.mubr.f32.gmra.mrb[0].mxu0 %v2466
    %v2534 = vpop.f32.mrb[0].mxu0
    %v2535 = vadd.f32 %v2461, %v2534
    %v2536 = vpop.f32.mrb[0].mxu0
    %2537 = vdwg.mxu0
    %vm2538 = vcmask 41984
    %2539 = vst.msk [vmem:[#allocation2] sm:$0x3] %vm2538, %v2535
    // Predicated region
    $region38: #{lstm_forward.1} parent=1 // pred_check
      _
    $region39: #{lstm_forward.1} parent=1 // pred_check_branch
      %2541 = sbr.rel (0) target = $region41
    $region40: #{lstm_forward.1} parent=1 // pred_region
      %s2543 = ssub.s32 32, 32
      %2544 = vsyncadd [#allocation3], %s2543
      %s2546 = sshll.u32 [#allocation2], 4
      %s2547 = int_to_ptr.vmem [resolvable:$true] %s2546
      %2549 = dma.vmem_to_hbm [thread:$0]  %s2547, 32, %s9, [#allocation3]
    $region41: #{lstm_forward.1} parent=1 // pred_fallthru
      _
    // Predicated region
    $region42: #{lstm_forward.1} parent=1 // pred_check
      _
    $region43: #{lstm_forward.1} parent=1 // pred_check_branch
      %2551 = sbr.rel (0) target = $region45
    $region44: #{lstm_forward.1} parent=1 // pred_region
      %2552 = dma.done [#allocation3], 32
    $region45: #{lstm_forward.1} parent=1 // pred_fallthru
      _
    %2553 = vsyncpa [#allocation3], 1

</llo_original>
